<compile_context>
chip_gen: v5e
topology: v5e:2x2
jax: 0.10.0
libtpu: 0.0.40
codegen_flags: <defaults>
</compile_context>

<pallas_src>
import functools

import numpy as np
import jax
import jax.numpy as jnp
from jax.experimental import pallas as pl
from jax.experimental.pallas import tpu as pltpu


_VMEM_LIMIT_BYTES = 32 * 1024 * 1024      # safe on v5e/v6e (128 MiB phys) and v7x (64 MiB phys)
_FUSED_VMEM_BUDGET = 24 * 1024 * 1024     # headroom under the 32 MiB scoped limit (v7x-safe)
_TILE_TARGET_BYTES = 2 * 1024 * 1024      # ~2 MiB streamed z block per grid step
_MIN_PARALLEL_STEPS = 4                   # >= 2 grid steps per TensorCore on v7x


# ---------------------------------------------------------------------------
# Fused single-kernel path: z resident in VMEM, read from HBM exactly once.
# ---------------------------------------------------------------------------
def _fused_kernel(z_ref, w1_ref, b1_ref, w2_ref, o_ref):
    # z_ref : (N, M*Din) full z; w1_ref: (Din, H); b1_ref/w2_ref: (1, H); o_ref: (N, Din)
    n = z_ref.shape[0]
    din, _ = w1_ref.shape
    m_paths = z_ref.shape[1] // din
    inv_n = 1.0 / float(n)

    # --- per-metapath logits: mean_n [ tanh(z_m @ W1 + b1) . w2 ] (static unroll, M tiny) ---
    logits = []
    for m in range(m_paths):
        z_m = z_ref[:, m * din:(m + 1) * din]          # static, 128-aligned lane slice
        # TODO(synk): pass precision=HIGHEST to the dot if bit-tighter beta is required.
        t = jnp.tanh(jnp.dot(z_m, w1_ref[...],
                             preferred_element_type=jnp.float32) + b1_ref[...])
        logits.append(jnp.sum(t * w2_ref[...], keepdims=True) * inv_n)   # (1, 1)

    # --- softmax over the M (1,1)-shaped logits (stays vectorized, no scalar exp) ---
    m_max = logits[0]
    for m in range(1, m_paths):
        m_max = jnp.maximum(m_max, logits[m])
    exps = [jnp.exp(l - m_max) for l in logits]
    denom = exps[0]
    for m in range(1, m_paths):
        denom = denom + exps[m]
    betas = [e / denom for e in exps]                   # (1, 1) each

    # --- combine: out[n, :] = sum_m beta_m * z[n, m, :] ---
    acc = betas[0] * z_ref[:, 0:din]
    for m in range(1, m_paths):
        acc = acc + betas[m] * z_ref[:, m * din:(m + 1) * din]
    o_ref[...] = acc.astype(o_ref.dtype)


def _fused_call(zf, w1, b1, w2, *, n, m_paths, din):
    h = w1.shape[1]
    flops = 2 * n * m_paths * din * h + 4 * n * m_paths * h + 2 * n * m_paths * din
    bytes_accessed = 4 * (n * m_paths * din + n * din + din * h + 2 * h)
    return pl.pallas_call(
        _fused_kernel,
        out_shape=jax.ShapeDtypeStruct((n, din), zf.dtype),
        grid_spec=pltpu.PrefetchScalarGridSpec(
            num_scalar_prefetch=0,
            grid=(1,),
            in_specs=[
                pl.BlockSpec((n, m_paths * din), lambda i: (0, 0)),
                pl.BlockSpec((din, h), lambda i: (0, 0)),
                pl.BlockSpec((1, h), lambda i: (0, 0)),
                pl.BlockSpec((1, h), lambda i: (0, 0)),
            ],
            out_specs=pl.BlockSpec((n, din), lambda i: (0, 0)),
        ),
        compiler_params=pltpu.CompilerParams(
            dimension_semantics=("arbitrary",),
            vmem_limit_bytes=_VMEM_LIMIT_BYTES),
        cost_estimate=pl.CostEstimate(flops=flops,
                                      transcendentals=n * m_paths * h + m_paths,
                                      bytes_accessed=bytes_accessed),
    )(zf, w1, b1, w2)


# ---------------------------------------------------------------------------
# Tiled path, kernel 1: lane-dense per-block, per-metapath partial score sums.
#   out[i, m] = sum_{n in block i} tanh(z[n, m, :] @ W1 + b1) . w2   (lanes m >= M are 0)
# ---------------------------------------------------------------------------
def _score_kernel(zf_ref, w1_ref, b1_ref, w2_ref, out_ref):
    din, _ = w1_ref.shape
    m_paths = zf_ref.shape[1] // din
    lane = jax.lax.broadcasted_iota(jnp.int32, (1, 128), 1)
    acc = jnp.zeros((1, 128), jnp.float32)
    for m in range(m_paths):                            # static unroll, M tiny
        z_m = zf_ref[:, m * din:(m + 1) * din]
        t = jnp.tanh(jnp.dot(z_m, w1_ref[...],
                             preferred_element_type=jnp.float32) + b1_ref[...])
        s_m = jnp.sum(t * w2_ref[...], keepdims=True)   # (1, 1) block partial sum
        acc = acc + jnp.where(lane == m, s_m, 0.0)
    out_ref[...] = acc                                  # lane-dense unmasked store


def _score_call(zf, w1, b1, w2, *, tn, m_paths, din):
    n = zf.shape[0]
    h = w1.shape[1]
    nblk = n // tn
    flops = 2 * n * m_paths * din * h + 4 * n * m_paths * h
    bytes_accessed = 4 * (n * m_paths * din + din * h + 2 * h + nblk * 128)
    return pl.pallas_call(
        _score_kernel,
        out_shape=jax.ShapeDtypeStruct((nblk, 128), jnp.float32),
        grid_spec=pltpu.PrefetchScalarGridSpec(
            num_scalar_prefetch=0,
            grid=(nblk,),
            in_specs=[
                pl.BlockSpec((tn, m_paths * din), lambda i: (i, 0)),
                pl.BlockSpec((din, h), lambda i: (0, 0)),
                pl.BlockSpec((1, h), lambda i: (0, 0)),
                pl.BlockSpec((1, h), lambda i: (0, 0)),
            ],
            out_specs=pl.BlockSpec((1, 128), lambda i: (i, 0)),
        ),
        compiler_params=pltpu.CompilerParams(
            dimension_semantics=("parallel",),
            vmem_limit_bytes=_VMEM_LIMIT_BYTES),
        cost_estimate=pl.CostEstimate(flops=flops,
                                      transcendentals=n * m_paths * h,
                                      bytes_accessed=bytes_accessed),
    )(zf, w1, b1, w2)


# ---------------------------------------------------------------------------
# Tiled path, kernel 2: metapath-weighted combination with beta scalars in SMEM.
# ---------------------------------------------------------------------------
def _combine_kernel(beta_ref, zf_ref, o_ref):
    # beta_ref: (1, M) SMEM scalars; zf_ref: (tn, M*Din); o_ref: (tn, Din)
    din = o_ref.shape[1]
    m_paths = zf_ref.shape[1] // din
    acc = beta_ref[0, 0] * zf_ref[:, 0:din]
    for m in range(1, m_paths):                         # static unroll, M tiny
        acc = acc + beta_ref[0, m] * zf_ref[:, m * din:(m + 1) * din]
    o_ref[...] = acc.astype(o_ref.dtype)


def _combine_call(beta2, zf, *, tn, m_paths, din):
    n = zf.shape[0]
    nblk = n // tn
    flops = 2 * n * m_paths * din
    bytes_accessed = 4 * (n * m_paths * din + n * din + m_paths)
    return pl.pallas_call(
        _combine_kernel,
        out_shape=jax.ShapeDtypeStruct((n, din), zf.dtype),
        grid_spec=pltpu.PrefetchScalarGridSpec(
            num_scalar_prefetch=0,
            grid=(nblk,),
            in_specs=[
                pl.BlockSpec(memory_space=pltpu.MemorySpace.SMEM),
                pl.BlockSpec((tn, m_paths * din), lambda i: (i, 0)),
            ],
            out_specs=pl.BlockSpec((tn, din), lambda i: (i, 0)),
        ),
        compiler_params=pltpu.CompilerParams(
            dimension_semantics=("parallel",),
            vmem_limit_bytes=_VMEM_LIMIT_BYTES),
        cost_estimate=pl.CostEstimate(flops=flops,
                                      transcendentals=0,
                                      bytes_accessed=bytes_accessed),
    )(beta2, zf)


# ---------------------------------------------------------------------------
# Tile picker + full forward pass.
# ---------------------------------------------------------------------------
def _pick_tile(n, row_bytes):
    """Largest multiple-of-8 divisor of n whose block is ~<= _TILE_TARGET_BYTES and,
    when n allows it, leaves at least _MIN_PARALLEL_STEPS grid steps (megacore)."""
    cap = max(8, _TILE_TARGET_BYTES // row_bytes)
    if n >= _MIN_PARALLEL_STEPS * 8:
        cap = min(cap, n // _MIN_PARALLEL_STEPS)
    cap = min(cap, n)
    best = 0
    for t in range(8, cap + 1, 8):
        if n % t == 0:
            best = t
    if best == 0:
        raise ValueError(
            f"N={n} has no multiple-of-8 divisor <= {cap}; pad N for the tiled path")
    return best


@functools.partial(jax.jit, static_argnames=("force_tiled",))
def semantic_attention(z, w1, b1, w2, force_tiled=False):
    """z: (N, M, Din); w1: (Din, H); b1: (1, H); w2: (1, H).  Returns (N, Din)."""
    n, m_paths, din = z.shape
    h = w1.shape[1]
    zf = z.reshape(n, m_paths * din)               # contiguous, lane-dense 2-D view
    itemsize = z.dtype.itemsize

    # Fused single-kernel path when (double-buffered) z + output fit comfortably in VMEM.
    fused_vmem = 2 * (n * m_paths * din + n * din) * itemsize + 4 * (din * h + 2 * h)
    if (not force_tiled) and fused_vmem <= _FUSED_VMEM_BUDGET:
        return _fused_call(zf, w1, b1, w2, n=n, m_paths=m_paths, din=din)

    # Streaming two-kernel path for large z.
    tn = _pick_tile(n, m_paths * din * itemsize)
    partials = _score_call(zf, w1, b1, w2, tn=tn, m_paths=m_paths, din=din)   # (nblk, 128)
    logits = partials.sum(axis=0)[:m_paths] / n          # (M,) == project(z).mean(0)
    beta = jax.nn.softmax(logits, axis=0)                # (M,)
    return _combine_call(beta.reshape(1, m_paths).astype(jnp.float32), zf,
                         tn=tn, m_paths=m_paths, din=din)


# ---------------------------------------------------------------------------
# Pure-JAX reference (mirrors the PyTorch module exactly).
# ---------------------------------------------------------------------------
def _reference(z, w1, b1, w2):
    hp = jax.lax.Precision.HIGHEST
    h = jnp.tanh(jnp.einsum("nmd,dh->nmh", z, w1, precision=hp) + b1)   # (N, M, H)
    s = jnp.einsum("nmh,h->nm", h, w2[0], precision=hp)                 # (N, M)
    beta = jax.nn.softmax(s.mean(axis=0), axis=0)                       # (M,)
    return jnp.einsum("m,nmd->nd", beta, z, precision=hp)               # (N, Din)


if __name__ == "__main__":
    # N nodes, M metapath patterns, Din = D*K fused feature dim, H hidden (module default 128).
    N, M, Din, H = 512, 4, 256, 128

    key = jax.random.PRNGKey(0)
    kz, kw1, kb1, kw2 = jax.random.split(key, 4)

    z = jax.random.normal(kz, (N, M, Din), dtype=jnp.float32)

    # nn.Linear-style uniform(-1/sqrt(fan_in), 1/sqrt(fan_in)) init, deterministic.
    bound1 = 1.0 / np.sqrt(Din)
    w1 = jax.random.uniform(kw1, (Din, H), jnp.float32, -bound1, bound1)
    b1 = jax.random.uniform(kb1, (1, H), jnp.float32, -bound1, bound1)
    bound2 = 1.0 / np.sqrt(H)
    w2 = jax.random.uniform(kw2, (1, H), jnp.float32, -bound2, bound2)

    ref = _reference(z, w1, b1, w2)

    # Fused single-kernel path (z = 2 MiB fits VMEM).
    out = semantic_attention(z, w1, b1, w2)
    jax.block_until_ready(out)
    np.testing.assert_allclose(np.asarray(out), np.asarray(ref), rtol=2e-3, atol=2e-3)
    assert out.shape == (N, Din)

    # Streaming two-kernel path (exercised explicitly so it stays correct).
    out_tiled = semantic_attention(z, w1, b1, w2, force_tiled=True)
    jax.block_until_ready(out_tiled)
    np.testing.assert_allclose(np.asarray(out_tiled), np.asarray(ref), rtol=2e-3, atol=2e-3)

    print("KERNEL_OK")
</pallas_src>

<mosaic_0001>
module attributes {stable_mosaic.version = 11 : i64} {
  func.func @_fused_kernel(%arg0: i32, %arg1: memref<512x1024xf32, #tpu.memory_space<vmem>>, %arg2: memref<256x128xf32, #tpu.memory_space<vmem>>, %arg3: memref<1x128xf32, #tpu.memory_space<vmem>>, %arg4: memref<1x128xf32, #tpu.memory_space<vmem>>, %arg5: memref<512x256xf32, #tpu.memory_space<vmem>>) attributes {dimension_semantics = [#tpu.dimension_semantics<arbitrary>], iteration_bounds = array<i64: 1>, scalar_prefetch = 0 : i64, scratch_operands = 0 : i64, tpu.core_type = #tpu.core_type<tc>, window_params = [{pipeline_mode = #tpu.pipeline_mode<synchronous>, transform_indices = @transform_0, window_bounds = array<i64: 512, 1024>}, {pipeline_mode = #tpu.pipeline_mode<synchronous>, transform_indices = @transform_1, window_bounds = array<i64: 256, 128>}, {pipeline_mode = #tpu.pipeline_mode<synchronous>, transform_indices = @transform_2, window_bounds = array<i64: 1, 128>}, {pipeline_mode = #tpu.pipeline_mode<synchronous>, transform_indices = @transform_3, window_bounds = array<i64: 1, 128>}, {pipeline_mode = #tpu.pipeline_mode<synchronous>, transform_indices = @transform_4, window_bounds = array<i64: 512, 256>}]} {
    %c0 = arith.constant 0 : index
    %c0_0 = arith.constant 0 : index
    %0 = vector.load %arg1[%c0, %c0_0] : memref<512x1024xf32, #tpu.memory_space<vmem>>, vector<512x256xf32>
    %c0_1 = arith.constant 0 : index
    %c0_2 = arith.constant 0 : index
    %1 = vector.load %arg2[%c0_1, %c0_2] : memref<256x128xf32, #tpu.memory_space<vmem>>, vector<256x128xf32>
    %cst = arith.constant dense<0.000000e+00> : vector<512x128xf32>
    %2 = tpu.matmul %0, %1, %cst {dimension_numbers = #tpu.dot_dimension_numbers<[1], [0], [0], [1], [0, 0, 1, 1], [], []>} : vector<512x256xf32>, vector<256x128xf32>, vector<512x128xf32> -> vector<512x128xf32>
    %c0_3 = arith.constant 0 : index
    %c0_4 = arith.constant 0 : index
    %3 = vector.load %arg3[%c0_3, %c0_4] : memref<1x128xf32, #tpu.memory_space<vmem>>, vector<1x128xf32>
    %4 = vector.broadcast %3 : vector<1x128xf32> to vector<512x128xf32>
    %5 = arith.addf %2, %4 : vector<512x128xf32>
    %6 = math.tanh %5 : vector<512x128xf32>
    %c0_5 = arith.constant 0 : index
    %c0_6 = arith.constant 0 : index
    %7 = vector.load %arg4[%c0_5, %c0_6] : memref<1x128xf32, #tpu.memory_space<vmem>>, vector<1x128xf32>
    %8 = vector.broadcast %7 : vector<1x128xf32> to vector<512x128xf32>
    %9 = arith.mulf %6, %8 : vector<512x128xf32>
    %10 = vector.shape_cast %9 : vector<512x128xf32> to vector<1x512x128xf32>
    %cst_7 = arith.constant dense<0.000000e+00> : vector<1xf32>
    %11 = vector.multi_reduction <add>, %10, %cst_7 [1, 2] : vector<1x512x128xf32> to vector<1xf32>
    %12 = vector.shape_cast %11 : vector<1xf32> to vector<1x1x1xf32>
    %13 = vector.extract %12[0, 0, 0] : f32 from vector<1x1x1xf32>
    %14 = vector.broadcast %13 : f32 to vector<1x1xf32>
    %cst_8 = arith.constant 0.001953125 : f32
    %15 = vector.broadcast %cst_8 : f32 to vector<1x1xf32>
    %16 = arith.mulf %14, %15 : vector<1x1xf32>
    %c0_9 = arith.constant 0 : index
    %c256 = arith.constant 256 : index
    %17 = vector.load %arg1[%c0_9, %c256] : memref<512x1024xf32, #tpu.memory_space<vmem>>, vector<512x256xf32>
    %c0_10 = arith.constant 0 : index
    %c0_11 = arith.constant 0 : index
    %18 = vector.load %arg2[%c0_10, %c0_11] : memref<256x128xf32, #tpu.memory_space<vmem>>, vector<256x128xf32>
    %cst_12 = arith.constant dense<0.000000e+00> : vector<512x128xf32>
    %19 = tpu.matmul %17, %18, %cst_12 {dimension_numbers = #tpu.dot_dimension_numbers<[1], [0], [0], [1], [0, 0, 1, 1], [], []>} : vector<512x256xf32>, vector<256x128xf32>, vector<512x128xf32> -> vector<512x128xf32>
    %c0_13 = arith.constant 0 : index
    %c0_14 = arith.constant 0 : index
    %20 = vector.load %arg3[%c0_13, %c0_14] : memref<1x128xf32, #tpu.memory_space<vmem>>, vector<1x128xf32>
    %21 = vector.broadcast %20 : vector<1x128xf32> to vector<512x128xf32>
    %22 = arith.addf %19, %21 : vector<512x128xf32>
    %23 = math.tanh %22 : vector<512x128xf32>
    %c0_15 = arith.constant 0 : index
    %c0_16 = arith.constant 0 : index
    %24 = vector.load %arg4[%c0_15, %c0_16] : memref<1x128xf32, #tpu.memory_space<vmem>>, vector<1x128xf32>
    %25 = vector.broadcast %24 : vector<1x128xf32> to vector<512x128xf32>
    %26 = arith.mulf %23, %25 : vector<512x128xf32>
    %27 = vector.shape_cast %26 : vector<512x128xf32> to vector<1x512x128xf32>
    %cst_17 = arith.constant dense<0.000000e+00> : vector<1xf32>
    %28 = vector.multi_reduction <add>, %27, %cst_17 [1, 2] : vector<1x512x128xf32> to vector<1xf32>
    %29 = vector.shape_cast %28 : vector<1xf32> to vector<1x1x1xf32>
    %30 = vector.extract %29[0, 0, 0] : f32 from vector<1x1x1xf32>
    %31 = vector.broadcast %30 : f32 to vector<1x1xf32>
    %cst_18 = arith.constant 0.001953125 : f32
    %32 = vector.broadcast %cst_18 : f32 to vector<1x1xf32>
    %33 = arith.mulf %31, %32 : vector<1x1xf32>
    %c0_19 = arith.constant 0 : index
    %c512 = arith.constant 512 : index
    %34 = vector.load %arg1[%c0_19, %c512] : memref<512x1024xf32, #tpu.memory_space<vmem>>, vector<512x256xf32>
    %c0_20 = arith.constant 0 : index
    %c0_21 = arith.constant 0 : index
    %35 = vector.load %arg2[%c0_20, %c0_21] : memref<256x128xf32, #tpu.memory_space<vmem>>, vector<256x128xf32>
    %cst_22 = arith.constant dense<0.000000e+00> : vector<512x128xf32>
    %36 = tpu.matmul %34, %35, %cst_22 {dimension_numbers = #tpu.dot_dimension_numbers<[1], [0], [0], [1], [0, 0, 1, 1], [], []>} : vector<512x256xf32>, vector<256x128xf32>, vector<512x128xf32> -> vector<512x128xf32>
    %c0_23 = arith.constant 0 : index
    %c0_24 = arith.constant 0 : index
    %37 = vector.load %arg3[%c0_23, %c0_24] : memref<1x128xf32, #tpu.memory_space<vmem>>, vector<1x128xf32>
    %38 = vector.broadcast %37 : vector<1x128xf32> to vector<512x128xf32>
    %39 = arith.addf %36, %38 : vector<512x128xf32>
    %40 = math.tanh %39 : vector<512x128xf32>
    %c0_25 = arith.constant 0 : index
    %c0_26 = arith.constant 0 : index
    %41 = vector.load %arg4[%c0_25, %c0_26] : memref<1x128xf32, #tpu.memory_space<vmem>>, vector<1x128xf32>
    %42 = vector.broadcast %41 : vector<1x128xf32> to vector<512x128xf32>
    %43 = arith.mulf %40, %42 : vector<512x128xf32>
    %44 = vector.shape_cast %43 : vector<512x128xf32> to vector<1x512x128xf32>
    %cst_27 = arith.constant dense<0.000000e+00> : vector<1xf32>
    %45 = vector.multi_reduction <add>, %44, %cst_27 [1, 2] : vector<1x512x128xf32> to vector<1xf32>
    %46 = vector.shape_cast %45 : vector<1xf32> to vector<1x1x1xf32>
    %47 = vector.extract %46[0, 0, 0] : f32 from vector<1x1x1xf32>
    %48 = vector.broadcast %47 : f32 to vector<1x1xf32>
    %cst_28 = arith.constant 0.001953125 : f32
    %49 = vector.broadcast %cst_28 : f32 to vector<1x1xf32>
    %50 = arith.mulf %48, %49 : vector<1x1xf32>
    %c0_29 = arith.constant 0 : index
    %c768 = arith.constant 768 : index
    %51 = vector.load %arg1[%c0_29, %c768] : memref<512x1024xf32, #tpu.memory_space<vmem>>, vector<512x256xf32>
    %c0_30 = arith.constant 0 : index
    %c0_31 = arith.constant 0 : index
    %52 = vector.load %arg2[%c0_30, %c0_31] : memref<256x128xf32, #tpu.memory_space<vmem>>, vector<256x128xf32>
    %cst_32 = arith.constant dense<0.000000e+00> : vector<512x128xf32>
    %53 = tpu.matmul %51, %52, %cst_32 {dimension_numbers = #tpu.dot_dimension_numbers<[1], [0], [0], [1], [0, 0, 1, 1], [], []>} : vector<512x256xf32>, vector<256x128xf32>, vector<512x128xf32> -> vector<512x128xf32>
    %c0_33 = arith.constant 0 : index
    %c0_34 = arith.constant 0 : index
    %54 = vector.load %arg3[%c0_33, %c0_34] : memref<1x128xf32, #tpu.memory_space<vmem>>, vector<1x128xf32>
    %55 = vector.broadcast %54 : vector<1x128xf32> to vector<512x128xf32>
    %56 = arith.addf %53, %55 : vector<512x128xf32>
    %57 = math.tanh %56 : vector<512x128xf32>
    %c0_35 = arith.constant 0 : index
    %c0_36 = arith.constant 0 : index
    %58 = vector.load %arg4[%c0_35, %c0_36] : memref<1x128xf32, #tpu.memory_space<vmem>>, vector<1x128xf32>
    %59 = vector.broadcast %58 : vector<1x128xf32> to vector<512x128xf32>
    %60 = arith.mulf %57, %59 : vector<512x128xf32>
    %61 = vector.shape_cast %60 : vector<512x128xf32> to vector<1x512x128xf32>
    %cst_37 = arith.constant dense<0.000000e+00> : vector<1xf32>
    %62 = vector.multi_reduction <add>, %61, %cst_37 [1, 2] : vector<1x512x128xf32> to vector<1xf32>
    %63 = vector.shape_cast %62 : vector<1xf32> to vector<1x1x1xf32>
    %64 = vector.extract %63[0, 0, 0] : f32 from vector<1x1x1xf32>
    %65 = vector.broadcast %64 : f32 to vector<1x1xf32>
    %cst_38 = arith.constant 0.001953125 : f32
    %66 = vector.broadcast %cst_38 : f32 to vector<1x1xf32>
    %67 = arith.mulf %65, %66 : vector<1x1xf32>
    %68 = arith.maximumf %16, %33 : vector<1x1xf32>
    %69 = arith.maximumf %68, %50 : vector<1x1xf32>
    %70 = arith.maximumf %69, %67 : vector<1x1xf32>
    %71 = arith.subf %16, %70 : vector<1x1xf32>
    %72 = math.exp %71 : vector<1x1xf32>
    %73 = arith.subf %33, %70 : vector<1x1xf32>
    %74 = math.exp %73 : vector<1x1xf32>
    %75 = arith.subf %50, %70 : vector<1x1xf32>
    %76 = math.exp %75 : vector<1x1xf32>
    %77 = arith.subf %67, %70 : vector<1x1xf32>
    %78 = math.exp %77 : vector<1x1xf32>
    %79 = arith.addf %72, %74 : vector<1x1xf32>
    %80 = arith.addf %79, %76 : vector<1x1xf32>
    %81 = arith.addf %80, %78 : vector<1x1xf32>
    %82 = arith.divf %72, %81 : vector<1x1xf32>
    %83 = arith.divf %74, %81 : vector<1x1xf32>
    %84 = arith.divf %76, %81 : vector<1x1xf32>
    %85 = arith.divf %78, %81 : vector<1x1xf32>
    %c0_39 = arith.constant 0 : index
    %c0_40 = arith.constant 0 : index
    %86 = vector.load %arg1[%c0_39, %c0_40] : memref<512x1024xf32, #tpu.memory_space<vmem>>, vector<512x256xf32>
    %87 = vector.broadcast %82 : vector<1x1xf32> to vector<512x256xf32>
    %88 = arith.mulf %87, %86 : vector<512x256xf32>
    %c0_41 = arith.constant 0 : index
    %c256_42 = arith.constant 256 : index
    %89 = vector.load %arg1[%c0_41, %c256_42] : memref<512x1024xf32, #tpu.memory_space<vmem>>, vector<512x256xf32>
    %90 = vector.broadcast %83 : vector<1x1xf32> to vector<512x256xf32>
    %91 = arith.mulf %90, %89 : vector<512x256xf32>
    %92 = arith.addf %88, %91 : vector<512x256xf32>
    %c0_43 = arith.constant 0 : index
    %c512_44 = arith.constant 512 : index
    %93 = vector.load %arg1[%c0_43, %c512_44] : memref<512x1024xf32, #tpu.memory_space<vmem>>, vector<512x256xf32>
    %94 = vector.broadcast %84 : vector<1x1xf32> to vector<512x256xf32>
    %95 = arith.mulf %94, %93 : vector<512x256xf32>
    %96 = arith.addf %92, %95 : vector<512x256xf32>
    %c0_45 = arith.constant 0 : index
    %c768_46 = arith.constant 768 : index
    %97 = vector.load %arg1[%c0_45, %c768_46] : memref<512x1024xf32, #tpu.memory_space<vmem>>, vector<512x256xf32>
    %98 = vector.broadcast %85 : vector<1x1xf32> to vector<512x256xf32>
    %99 = arith.mulf %98, %97 : vector<512x256xf32>
    %100 = arith.addf %96, %99 : vector<512x256xf32>
    %c0_47 = arith.constant 0 : index
    %c0_48 = arith.constant 0 : index
    %101 = vector.load %arg5[%c0_47, %c0_48] : memref<512x256xf32, #tpu.memory_space<vmem>>, vector<512x256xf32>
    tpu.vector_store %arg5[%c0_47, %c0_48], %100 {strides = array<i32>} : memref<512x256xf32, #tpu.memory_space<vmem>>, vector<512x256xf32>,
    return
  }
  func.func @transform_0(%arg0: i32) -> (i32, i32) {
    %c0_i32 = arith.constant 0 : i32
    %c0_i32_0 = arith.constant 0 : i32
    %c0_i32_1 = arith.constant 0 : i32
    return %c0_i32, %c0_i32_0 : i32, i32
  }
  func.func @transform_1(%arg0: i32) -> (i32, i32) {
    %c0_i32 = arith.constant 0 : i32
    %c0_i32_0 = arith.constant 0 : i32
    %c0_i32_1 = arith.constant 0 : i32
    return %c0_i32, %c0_i32_0 : i32, i32
  }
  func.func @transform_2(%arg0: i32) -> (i32, i32) {
    %c0_i32 = arith.constant 0 : i32
    %c0_i32_0 = arith.constant 0 : i32
    %c0_i32_1 = arith.constant 0 : i32
    return %c0_i32, %c0_i32_0 : i32, i32
  }
  func.func @transform_3(%arg0: i32) -> (i32, i32) {
    %c0_i32 = arith.constant 0 : i32
    %c0_i32_0 = arith.constant 0 : i32
    %c0_i32_1 = arith.constant 0 : i32
    return %c0_i32, %c0_i32_0 : i32, i32
  }
  func.func @transform_4(%arg0: i32) -> (i32, i32) {
    %c0_i32 = arith.constant 0 : i32
    %c0_i32_0 = arith.constant 0 : i32
    %c0_i32_1 = arith.constant 0 : i32
    return %c0_i32, %c0_i32_0 : i32, i32
  }
}

</mosaic_0001>

<llo_original>
// kernel: semantic_attention.1
$region0: #{semantic_attention.1}
  #allocation0 [shape = 'u32[]', space=smem, size = 0x4, offset = 0x4, fixed_abs, tag = 'smem constant byte address 0x4 - core index']
  #allocation1 [shape = 'u32[72,128]{1,0:T(1,128)}', space=vmem, size = 0x9000, scoped, tag = 'internal scratch']
  %s0 = inlined_call_operand.vmem [shape: f32[512,1024], index: 0, kind: input, shape index: {}]
  %s1 = inlined_call_operand.vmem [shape: f32[256,128], index: 1, kind: input, shape index: {}]
  %s2 = inlined_call_operand.vmem [shape: f32[1,128], index: 2, kind: input, shape index: {}]
  %s3 = inlined_call_operand.vmem [shape: f32[1,128], index: 3, kind: input, shape index: {}]
  %s4 = inlined_call_operand.hbm [shape: f32[512,256], index: 4, kind: output, shape index: {}]
  %s5 = sld [smem:[#allocation0]]
  $region26: #{semantic_attention.1} parent=0
    _
  %s7 = ssub.s32 1, %s5
  %s8 = scalar_select 0, %s7, %s5
  $region1: #{semantic_attention.1} parent=0
    #allocation2 [shape = 'u8[524288]{0}', space=vmem, size = 0x80000, scoped, tag = 'output window, operand 0, single buffered']
    #allocation3 [shape = 's32[1]{0}', space=sflag, size = 0x4, scoped, tag = 'scoped memory for semantic_attention.1']
    %9 = vsyncpa [#allocation3], 0
    // Predicated region
    $region2: #{semantic_attention.1} parent=1 // pred_check
      _
    $region3: #{semantic_attention.1} parent=1 // pred_check_branch
      %11 = sbr.rel (0) target = $region5
    $region4: #{semantic_attention.1} parent=1 // pred_region
      _
    $region5: #{semantic_attention.1} parent=1 // pred_fallthru
      _
    // Predicated region
    $region6: #{semantic_attention.1} parent=1 // pred_check
      _
    $region7: #{semantic_attention.1} parent=1 // pred_check_branch
      %13 = sbr.rel (0) target = $region9
    $region8: #{semantic_attention.1} parent=1 // pred_region
      _
    $region9: #{semantic_attention.1} parent=1 // pred_fallthru
      _
    // Predicated region
    $region10: #{semantic_attention.1} parent=1 // pred_check
      _
    $region11: #{semantic_attention.1} parent=1 // pred_check_branch
      %15 = sbr.rel (0) target = $region13
    $region12: #{semantic_attention.1} parent=1 // pred_region
      _
    $region13: #{semantic_attention.1} parent=1 // pred_fallthru
      _
    // Predicated region
    $region14: #{semantic_attention.1} parent=1 // pred_check
      _
    $region15: #{semantic_attention.1} parent=1 // pred_check_branch
      %17 = sbr.rel (0) target = $region17
    $region16: #{semantic_attention.1} parent=1 // pred_region
      _
    $region17: #{semantic_attention.1} parent=1 // pred_fallthru
      _
    %v18 = vld [vmem:[%s0] sm:$0xff]
    %v19 = vld [vmem:[%s0 + $0x8] sm:$0xff]
    %v20 = vld [vmem:[%s0 + $0x40] sm:$0xff]
    %v21 = vld [vmem:[%s0 + $0x48] sm:$0xff]
    %v22 = vld [vmem:[%s0 + $0x80] sm:$0xff]
    %v23 = vld [vmem:[%s0 + $0x88] sm:$0xff]
    %v24 = vld [vmem:[%s0 + $0xc0] sm:$0xff]
    %v25 = vld [vmem:[%s0 + $0xc8] sm:$0xff]
    %v26 = vld [vmem:[%s0 + $0x100] sm:$0xff]
    %v27 = vld [vmem:[%s0 + $0x108] sm:$0xff]
    %v28 = vld [vmem:[%s0 + $0x140] sm:$0xff]
    %v29 = vld [vmem:[%s0 + $0x148] sm:$0xff]
    %v30 = vld [vmem:[%s0 + $0x180] sm:$0xff]
    %v31 = vld [vmem:[%s0 + $0x188] sm:$0xff]
    %v32 = vld [vmem:[%s0 + $0x1c0] sm:$0xff]
    %v33 = vld [vmem:[%s0 + $0x1c8] sm:$0xff]
    %v34 = vld [vmem:[%s0 + $0x200] sm:$0xff]
    %v35 = vld [vmem:[%s0 + $0x208] sm:$0xff]
    %v36 = vld [vmem:[%s0 + $0x240] sm:$0xff]
    %v37 = vld [vmem:[%s0 + $0x248] sm:$0xff]
    %v38 = vld [vmem:[%s0 + $0x280] sm:$0xff]
    %v39 = vld [vmem:[%s0 + $0x288] sm:$0xff]
    %v40 = vld [vmem:[%s0 + $0x2c0] sm:$0xff]
    %v41 = vld [vmem:[%s0 + $0x2c8] sm:$0xff]
    %v42 = vld [vmem:[%s0 + $0x300] sm:$0xff]
    %v43 = vld [vmem:[%s0 + $0x308] sm:$0xff]
    %v44 = vld [vmem:[%s0 + $0x340] sm:$0xff]
    %v45 = vld [vmem:[%s0 + $0x348] sm:$0xff]
    %v46 = vld [vmem:[%s0 + $0x380] sm:$0xff]
    %v47 = vld [vmem:[%s0 + $0x388] sm:$0xff]
    %v48 = vld [vmem:[%s0 + $0x3c0] sm:$0xff]
    %v49 = vld [vmem:[%s0 + $0x3c8] sm:$0xff]
    %v50 = vld [vmem:[%s0 + $0x400] sm:$0xff]
    %v51 = vld [vmem:[%s0 + $0x408] sm:$0xff]
    %v52 = vld [vmem:[%s0 + $0x440] sm:$0xff]
    %v53 = vld [vmem:[%s0 + $0x448] sm:$0xff]
    %v54 = vld [vmem:[%s0 + $0x480] sm:$0xff]
    %v55 = vld [vmem:[%s0 + $0x488] sm:$0xff]
    %v56 = vld [vmem:[%s0 + $0x4c0] sm:$0xff]
    %v57 = vld [vmem:[%s0 + $0x4c8] sm:$0xff]
    %v58 = vld [vmem:[%s0 + $0x500] sm:$0xff]
    %v59 = vld [vmem:[%s0 + $0x508] sm:$0xff]
    %v60 = vld [vmem:[%s0 + $0x540] sm:$0xff]
    %v61 = vld [vmem:[%s0 + $0x548] sm:$0xff]
    %v62 = vld [vmem:[%s0 + $0x580] sm:$0xff]
    %v63 = vld [vmem:[%s0 + $0x588] sm:$0xff]
    %v64 = vld [vmem:[%s0 + $0x5c0] sm:$0xff]
    %v65 = vld [vmem:[%s0 + $0x5c8] sm:$0xff]
    %v66 = vld [vmem:[%s0 + $0x600] sm:$0xff]
    %v67 = vld [vmem:[%s0 + $0x608] sm:$0xff]
    %v68 = vld [vmem:[%s0 + $0x640] sm:$0xff]
    %v69 = vld [vmem:[%s0 + $0x648] sm:$0xff]
    %v70 = vld [vmem:[%s0 + $0x680] sm:$0xff]
    %v71 = vld [vmem:[%s0 + $0x688] sm:$0xff]
    %v72 = vld [vmem:[%s0 + $0x6c0] sm:$0xff]
    %v73 = vld [vmem:[%s0 + $0x6c8] sm:$0xff]
    %v74 = vld [vmem:[%s0 + $0x700] sm:$0xff]
    %v75 = vld [vmem:[%s0 + $0x708] sm:$0xff]
    %v76 = vld [vmem:[%s0 + $0x740] sm:$0xff]
    %v77 = vld [vmem:[%s0 + $0x748] sm:$0xff]
    %v78 = vld [vmem:[%s0 + $0x780] sm:$0xff]
    %v79 = vld [vmem:[%s0 + $0x788] sm:$0xff]
    %v80 = vld [vmem:[%s0 + $0x7c0] sm:$0xff]
    %v81 = vld [vmem:[%s0 + $0x7c8] sm:$0xff]
    %v82 = vld [vmem:[%s0 + $0x800] sm:$0xff]
    %v83 = vld [vmem:[%s0 + $0x808] sm:$0xff]
    %v84 = vld [vmem:[%s0 + $0x840] sm:$0xff]
    %v85 = vld [vmem:[%s0 + $0x848] sm:$0xff]
    %v86 = vld [vmem:[%s0 + $0x880] sm:$0xff]
    %v87 = vld [vmem:[%s0 + $0x888] sm:$0xff]
    %v88 = vld [vmem:[%s0 + $0x8c0] sm:$0xff]
    %v89 = vld [vmem:[%s0 + $0x8c8] sm:$0xff]
    %v90 = vld [vmem:[%s0 + $0x900] sm:$0xff]
    %v91 = vld [vmem:[%s0 + $0x908] sm:$0xff]
    %v92 = vld [vmem:[%s0 + $0x940] sm:$0xff]
    %v93 = vld [vmem:[%s0 + $0x948] sm:$0xff]
    %v94 = vld [vmem:[%s0 + $0x980] sm:$0xff]
    %v95 = vld [vmem:[%s0 + $0x988] sm:$0xff]
    %v96 = vld [vmem:[%s0 + $0x9c0] sm:$0xff]
    %v97 = vld [vmem:[%s0 + $0x9c8] sm:$0xff]
    %v98 = vld [vmem:[%s0 + $0xa00] sm:$0xff]
    %v99 = vld [vmem:[%s0 + $0xa08] sm:$0xff]
    %v100 = vld [vmem:[%s0 + $0xa40] sm:$0xff]
    %v101 = vld [vmem:[%s0 + $0xa48] sm:$0xff]
    %v102 = vld [vmem:[%s0 + $0xa80] sm:$0xff]
    %v103 = vld [vmem:[%s0 + $0xa88] sm:$0xff]
    %v104 = vld [vmem:[%s0 + $0xac0] sm:$0xff]
    %v105 = vld [vmem:[%s0 + $0xac8] sm:$0xff]
    %v106 = vld [vmem:[%s0 + $0xb00] sm:$0xff]
    %v107 = vld [vmem:[%s0 + $0xb08] sm:$0xff]
    %v108 = vld [vmem:[%s0 + $0xb40] sm:$0xff]
    %v109 = vld [vmem:[%s0 + $0xb48] sm:$0xff]
    %v110 = vld [vmem:[%s0 + $0xb80] sm:$0xff]
    %v111 = vld [vmem:[%s0 + $0xb88] sm:$0xff]
    %v112 = vld [vmem:[%s0 + $0xbc0] sm:$0xff]
    %v113 = vld [vmem:[%s0 + $0xbc8] sm:$0xff]
    %v114 = vld [vmem:[%s0 + $0xc00] sm:$0xff]
    %v115 = vld [vmem:[%s0 + $0xc08] sm:$0xff]
    %v116 = vld [vmem:[%s0 + $0xc40] sm:$0xff]
    %v117 = vld [vmem:[%s0 + $0xc48] sm:$0xff]
    %v118 = vld [vmem:[%s0 + $0xc80] sm:$0xff]
    %v119 = vld [vmem:[%s0 + $0xc88] sm:$0xff]
    %v120 = vld [vmem:[%s0 + $0xcc0] sm:$0xff]
    %v121 = vld [vmem:[%s0 + $0xcc8] sm:$0xff]
    %v122 = vld [vmem:[%s0 + $0xd00] sm:$0xff]
    %v123 = vld [vmem:[%s0 + $0xd08] sm:$0xff]
    %v124 = vld [vmem:[%s0 + $0xd40] sm:$0xff]
    %v125 = vld [vmem:[%s0 + $0xd48] sm:$0xff]
    %v126 = vld [vmem:[%s0 + $0xd80] sm:$0xff]
    %v127 = vld [vmem:[%s0 + $0xd88] sm:$0xff]
    %v128 = vld [vmem:[%s0 + $0xdc0] sm:$0xff]
    %v129 = vld [vmem:[%s0 + $0xdc8] sm:$0xff]
    %v130 = vld [vmem:[%s0 + $0xe00] sm:$0xff]
    %v131 = vld [vmem:[%s0 + $0xe08] sm:$0xff]
    %v132 = vld [vmem:[%s0 + $0xe40] sm:$0xff]
    %v133 = vld [vmem:[%s0 + $0xe48] sm:$0xff]
    %v134 = vld [vmem:[%s0 + $0xe80] sm:$0xff]
    %v135 = vld [vmem:[%s0 + $0xe88] sm:$0xff]
    %v136 = vld [vmem:[%s0 + $0xec0] sm:$0xff]
    %v137 = vld [vmem:[%s0 + $0xec8] sm:$0xff]
    %v138 = vld [vmem:[%s0 + $0xf00] sm:$0xff]
    %v139 = vld [vmem:[%s0 + $0xf08] sm:$0xff]
    %v140 = vld [vmem:[%s0 + $0xf40] sm:$0xff]
    %v141 = vld [vmem:[%s0 + $0xf48] sm:$0xff]
    %v142 = vld [vmem:[%s0 + $0xf80] sm:$0xff]
    %v143 = vld [vmem:[%s0 + $0xf88] sm:$0xff]
    %v144 = vld [vmem:[%s0 + $0xfc0] sm:$0xff]
    %v145 = vld [vmem:[%s0 + $0xfc8] sm:$0xff]
    %v146 = vld [vmem:[%s1] sm:$0xff]
    %v147 = vld [vmem:[%s1 + $0x8] sm:$0xff]
    %v148 = vld [vmem:[%s1 + $0x10] sm:$0xff]
    %v149 = vld [vmem:[%s1 + $0x18] sm:$0xff]
    %v150 = vld [vmem:[%s1 + $0x20] sm:$0xff]
    %v151 = vld [vmem:[%s1 + $0x28] sm:$0xff]
    %v152 = vld [vmem:[%s1 + $0x30] sm:$0xff]
    %v153 = vld [vmem:[%s1 + $0x38] sm:$0xff]
    %v154 = vld [vmem:[%s1 + $0x40] sm:$0xff]
    %v155 = vld [vmem:[%s1 + $0x48] sm:$0xff]
    %v156 = vld [vmem:[%s1 + $0x50] sm:$0xff]
    %v157 = vld [vmem:[%s1 + $0x58] sm:$0xff]
    %v158 = vld [vmem:[%s1 + $0x60] sm:$0xff]
    %v159 = vld [vmem:[%s1 + $0x68] sm:$0xff]
    %v160 = vld [vmem:[%s1 + $0x70] sm:$0xff]
    %v161 = vld [vmem:[%s1 + $0x78] sm:$0xff]
    %v162 = vld [vmem:[%s1 + $0x80] sm:$0xff]
    %v163 = vld [vmem:[%s1 + $0x88] sm:$0xff]
    %v164 = vld [vmem:[%s1 + $0x90] sm:$0xff]
    %v165 = vld [vmem:[%s1 + $0x98] sm:$0xff]
    %v166 = vld [vmem:[%s1 + $0xa0] sm:$0xff]
    %v167 = vld [vmem:[%s1 + $0xa8] sm:$0xff]
    %v168 = vld [vmem:[%s1 + $0xb0] sm:$0xff]
    %v169 = vld [vmem:[%s1 + $0xb8] sm:$0xff]
    %v170 = vld [vmem:[%s1 + $0xc0] sm:$0xff]
    %v171 = vld [vmem:[%s1 + $0xc8] sm:$0xff]
    %v172 = vld [vmem:[%s1 + $0xd0] sm:$0xff]
    %v173 = vld [vmem:[%s1 + $0xd8] sm:$0xff]
    %v174 = vld [vmem:[%s1 + $0xe0] sm:$0xff]
    %v175 = vld [vmem:[%s1 + $0xe8] sm:$0xff]
    %v176 = vld [vmem:[%s1 + $0xf0] sm:$0xff]
    %v177 = vld [vmem:[%s1 + $0xf8] sm:$0xff]
    %v178 = vld [vmem:[%s2] sm:$0x1]
    %v180 = vperm.slane %v178, 0
    %182 = vmatpush.msra.mxu0 %v161
    %183 = vmatpush.msra.mxu0 %v160
    %184 = vmatpush.msra.mxu0 %v159
    %185 = vmatpush.msra.mxu0 %v158
    %186 = vmatpush.msra.mxu0 %v157
    %187 = vmatpush.msra.mxu0 %v156
    %188 = vmatpush.msra.mxu0 %v155
    %189 = vmatpush.msra.mxu0 %v154
    %190 = vmatpush.msra.mxu0 %v153
    %191 = vmatpush.msra.mxu0 %v152
    %192 = vmatpush.msra.mxu0 %v151
    %193 = vmatpush.msra.mxu0 %v150
    %194 = vmatpush.msra.mxu0 %v149
    %195 = vmatpush.msra.mxu0 %v148
    %196 = vmatpush.msra.mxu0 %v147
    %197 = vmatpush.msra.mxu0 %v146
    %198 = vmatmul.f32.gmra.mxu0 %v18
    %v199 = vpop.f32.mrf.mxu0
    %v200 = vadd.f32 %v180, %v199
    %201 = vmatmul.f32.gmra.mxu0 %v20
    %v202 = vpop.f32.mrf.mxu0
    %v203 = vadd.f32 %v180, %v202
    %204 = vmatmul.f32.gmra.mxu0 %v22
    %v205 = vpop.f32.mrf.mxu0
    %v206 = vadd.f32 %v180, %v205
    %207 = vmatmul.f32.gmra.mxu0 %v24
    %v208 = vpop.f32.mrf.mxu0
    %v209 = vadd.f32 %v180, %v208
    %210 = vmatmul.f32.gmra.mxu0 %v26
    %v211 = vpop.f32.mrf.mxu0
    %v212 = vadd.f32 %v180, %v211
    %213 = vmatmul.f32.gmra.mxu0 %v28
    %v214 = vpop.f32.mrf.mxu0
    %v215 = vadd.f32 %v180, %v214
    %216 = vmatmul.f32.gmra.mxu0 %v30
    %v217 = vpop.f32.mrf.mxu0
    %v218 = vadd.f32 %v180, %v217
    %219 = vmatmul.f32.gmra.mxu0 %v32
    %v220 = vpop.f32.mrf.mxu0
    %v221 = vadd.f32 %v180, %v220
    %222 = vmatmul.f32.gmra.mxu0 %v34
    %v223 = vpop.f32.mrf.mxu0
    %v224 = vadd.f32 %v180, %v223
    %225 = vmatmul.f32.gmra.mxu0 %v36
    %v226 = vpop.f32.mrf.mxu0
    %v227 = vadd.f32 %v180, %v226
    %228 = vmatmul.f32.gmra.mxu0 %v38
    %v229 = vpop.f32.mrf.mxu0
    %v230 = vadd.f32 %v180, %v229
    %231 = vmatmul.f32.gmra.mxu0 %v40
    %v232 = vpop.f32.mrf.mxu0
    %v233 = vadd.f32 %v180, %v232
    %234 = vmatmul.f32.gmra.mxu0 %v42
    %v235 = vpop.f32.mrf.mxu0
    %v236 = vadd.f32 %v180, %v235
    %237 = vmatmul.f32.gmra.mxu0 %v44
    %v238 = vpop.f32.mrf.mxu0
    %v239 = vadd.f32 %v180, %v238
    %240 = vmatmul.f32.gmra.mxu0 %v46
    %v241 = vpop.f32.mrf.mxu0
    %v242 = vadd.f32 %v180, %v241
    %243 = vmatmul.f32.gmra.mxu0 %v48
    %v244 = vpop.f32.mrf.mxu0
    %v245 = vadd.f32 %v180, %v244
    %246 = vmatmul.f32.gmra.mxu0 %v50
    %v247 = vpop.f32.mrf.mxu0
    %v248 = vadd.f32 %v180, %v247
    %249 = vmatmul.f32.gmra.mxu0 %v52
    %v250 = vpop.f32.mrf.mxu0
    %v251 = vadd.f32 %v180, %v250
    %252 = vmatmul.f32.gmra.mxu0 %v54
    %v253 = vpop.f32.mrf.mxu0
    %v254 = vadd.f32 %v180, %v253
    %255 = vmatmul.f32.gmra.mxu0 %v56
    %v256 = vpop.f32.mrf.mxu0
    %v257 = vadd.f32 %v180, %v256
    %258 = vmatmul.f32.gmra.mxu0 %v58
    %v259 = vpop.f32.mrf.mxu0
    %v260 = vadd.f32 %v180, %v259
    %261 = vmatmul.f32.gmra.mxu0 %v60
    %v262 = vpop.f32.mrf.mxu0
    %v263 = vadd.f32 %v180, %v262
    %264 = vmatmul.f32.gmra.mxu0 %v62
    %v265 = vpop.f32.mrf.mxu0
    %v266 = vadd.f32 %v180, %v265
    %267 = vmatmul.f32.gmra.mxu0 %v64
    %v268 = vpop.f32.mrf.mxu0
    %v269 = vadd.f32 %v180, %v268
    %270 = vmatmul.f32.gmra.mxu0 %v66
    %v271 = vpop.f32.mrf.mxu0
    %v272 = vadd.f32 %v180, %v271
    %273 = vmatmul.f32.gmra.mxu0 %v68
    %v274 = vpop.f32.mrf.mxu0
    %v275 = vadd.f32 %v180, %v274
    %276 = vmatmul.f32.gmra.mxu0 %v70
    %v277 = vpop.f32.mrf.mxu0
    %v278 = vadd.f32 %v180, %v277
    %279 = vmatmul.f32.gmra.mxu0 %v72
    %v280 = vpop.f32.mrf.mxu0
    %v281 = vadd.f32 %v180, %v280
    %282 = vmatmul.f32.gmra.mxu0 %v74
    %v283 = vpop.f32.mrf.mxu0
    %v284 = vadd.f32 %v180, %v283
    %285 = vmatmul.f32.gmra.mxu0 %v76
    %v286 = vpop.f32.mrf.mxu0
    %v287 = vadd.f32 %v180, %v286
    %288 = vmatmul.f32.gmra.mxu0 %v78
    %v289 = vpop.f32.mrf.mxu0
    %v290 = vadd.f32 %v180, %v289
    %291 = vmatmul.f32.gmra.mxu0 %v80
    %v292 = vpop.f32.mrf.mxu0
    %v293 = vadd.f32 %v180, %v292
    %294 = vmatmul.f32.gmra.mxu0 %v82
    %v295 = vpop.f32.mrf.mxu0
    %v296 = vadd.f32 %v180, %v295
    %297 = vmatmul.f32.gmra.mxu0 %v84
    %v298 = vpop.f32.mrf.mxu0
    %v299 = vadd.f32 %v180, %v298
    %300 = vmatmul.f32.gmra.mxu0 %v86
    %v301 = vpop.f32.mrf.mxu0
    %v302 = vadd.f32 %v180, %v301
    %303 = vmatmul.f32.gmra.mxu0 %v88
    %v304 = vpop.f32.mrf.mxu0
    %v305 = vadd.f32 %v180, %v304
    %306 = vmatmul.f32.gmra.mxu0 %v90
    %v307 = vpop.f32.mrf.mxu0
    %v308 = vadd.f32 %v180, %v307
    %309 = vmatmul.f32.gmra.mxu0 %v92
    %v310 = vpop.f32.mrf.mxu0
    %v311 = vadd.f32 %v180, %v310
    %312 = vmatmul.f32.gmra.mxu0 %v94
    %v313 = vpop.f32.mrf.mxu0
    %v314 = vadd.f32 %v180, %v313
    %315 = vmatmul.f32.gmra.mxu0 %v96
    %v316 = vpop.f32.mrf.mxu0
    %v317 = vadd.f32 %v180, %v316
    %318 = vmatmul.f32.gmra.mxu0 %v98
    %v319 = vpop.f32.mrf.mxu0
    %v320 = vadd.f32 %v180, %v319
    %321 = vmatmul.f32.gmra.mxu0 %v100
    %v322 = vpop.f32.mrf.mxu0
    %v323 = vadd.f32 %v180, %v322
    %324 = vmatmul.f32.gmra.mxu0 %v102
    %v325 = vpop.f32.mrf.mxu0
    %v326 = vadd.f32 %v180, %v325
    %327 = vmatmul.f32.gmra.mxu0 %v104
    %v328 = vpop.f32.mrf.mxu0
    %v329 = vadd.f32 %v180, %v328
    %330 = vmatmul.f32.gmra.mxu0 %v106
    %v331 = vpop.f32.mrf.mxu0
    %v332 = vadd.f32 %v180, %v331
    %333 = vmatmul.f32.gmra.mxu0 %v108
    %v334 = vpop.f32.mrf.mxu0
    %v335 = vadd.f32 %v180, %v334
    %336 = vmatmul.f32.gmra.mxu0 %v110
    %v337 = vpop.f32.mrf.mxu0
    %v338 = vadd.f32 %v180, %v337
    %339 = vmatmul.f32.gmra.mxu0 %v112
    %v340 = vpop.f32.mrf.mxu0
    %v341 = vadd.f32 %v180, %v340
    %342 = vmatmul.f32.gmra.mxu0 %v114
    %v343 = vpop.f32.mrf.mxu0
    %v344 = vadd.f32 %v180, %v343
    %345 = vmatmul.f32.gmra.mxu0 %v116
    %v346 = vpop.f32.mrf.mxu0
    %v347 = vadd.f32 %v180, %v346
    %348 = vmatmul.f32.gmra.mxu0 %v118
    %v349 = vpop.f32.mrf.mxu0
    %v350 = vadd.f32 %v180, %v349
    %351 = vmatmul.f32.gmra.mxu0 %v120
    %v352 = vpop.f32.mrf.mxu0
    %v353 = vadd.f32 %v180, %v352
    %354 = vmatmul.f32.gmra.mxu0 %v122
    %v355 = vpop.f32.mrf.mxu0
    %v356 = vadd.f32 %v180, %v355
    %357 = vmatmul.f32.gmra.mxu0 %v124
    %v358 = vpop.f32.mrf.mxu0
    %v359 = vadd.f32 %v180, %v358
    %360 = vmatmul.f32.gmra.mxu0 %v126
    %v361 = vpop.f32.mrf.mxu0
    %v362 = vadd.f32 %v180, %v361
    %363 = vmatmul.f32.gmra.mxu0 %v128
    %v364 = vpop.f32.mrf.mxu0
    %v365 = vadd.f32 %v180, %v364
    %366 = vmatmul.f32.gmra.mxu0 %v130
    %v367 = vpop.f32.mrf.mxu0
    %v368 = vadd.f32 %v180, %v367
    %369 = vmatmul.f32.gmra.mxu0 %v132
    %v370 = vpop.f32.mrf.mxu0
    %v371 = vadd.f32 %v180, %v370
    %372 = vmatmul.f32.gmra.mxu0 %v134
    %v373 = vpop.f32.mrf.mxu0
    %v374 = vadd.f32 %v180, %v373
    %375 = vmatmul.f32.gmra.mxu0 %v136
    %v376 = vpop.f32.mrf.mxu0
    %v377 = vadd.f32 %v180, %v376
    %378 = vmatmul.f32.gmra.mxu0 %v138
    %v379 = vpop.f32.mrf.mxu0
    %v380 = vadd.f32 %v180, %v379
    %381 = vmatmul.f32.gmra.mxu0 %v140
    %v382 = vpop.f32.mrf.mxu0
    %v383 = vadd.f32 %v180, %v382
    %384 = vmatmul.f32.gmra.mxu0 %v142
    %v385 = vpop.f32.mrf.mxu0
    %v386 = vadd.f32 %v180, %v385
    %387 = vmatmul.f32.gmra.mxu0 %v144
    %v388 = vpop.f32.mrf.mxu0
    %v389 = vadd.f32 %v180, %v388
    %390 = vdwg.mxu0
    %391 = vmatpush.msra.mxu0 %v177
    %392 = vmatpush.msra.mxu0 %v176
    %393 = vmatpush.msra.mxu0 %v175
    %394 = vmatpush.msra.mxu0 %v174
    %395 = vmatpush.msra.mxu0 %v173
    %396 = vmatpush.msra.mxu0 %v172
    %397 = vmatpush.msra.mxu0 %v171
    %398 = vmatpush.msra.mxu0 %v170
    %399 = vmatpush.msra.mxu0 %v169
    %400 = vmatpush.msra.mxu0 %v168
    %401 = vmatpush.msra.mxu0 %v167
    %402 = vmatpush.msra.mxu0 %v166
    %403 = vmatpush.msra.mxu0 %v165
    %404 = vmatpush.msra.mxu0 %v164
    %405 = vmatpush.msra.mxu0 %v163
    %406 = vmatpush.msra.mxu0 %v162
    %407 = vmatmul.f32.gmra.mxu0 %v19
    %v408 = vpop.f32.mrf.mxu0
    %v409 = vadd.f32 %v200, %v408
    %410 = vmatmul.f32.gmra.mxu0 %v21
    %v411 = vpop.f32.mrf.mxu0
    %v412 = vadd.f32 %v203, %v411
    %413 = vmatmul.f32.gmra.mxu0 %v23
    %v414 = vpop.f32.mrf.mxu0
    %v415 = vadd.f32 %v206, %v414
    %416 = vmatmul.f32.gmra.mxu0 %v25
    %v417 = vpop.f32.mrf.mxu0
    %v418 = vadd.f32 %v209, %v417
    %419 = vmatmul.f32.gmra.mxu0 %v27
    %v420 = vpop.f32.mrf.mxu0
    %v421 = vadd.f32 %v212, %v420
    %422 = vmatmul.f32.gmra.mxu0 %v29
    %v423 = vpop.f32.mrf.mxu0
    %v424 = vadd.f32 %v215, %v423
    %425 = vmatmul.f32.gmra.mxu0 %v31
    %v426 = vpop.f32.mrf.mxu0
    %v427 = vadd.f32 %v218, %v426
    %428 = vmatmul.f32.gmra.mxu0 %v33
    %v429 = vpop.f32.mrf.mxu0
    %v430 = vadd.f32 %v221, %v429
    %431 = vmatmul.f32.gmra.mxu0 %v35
    %v432 = vpop.f32.mrf.mxu0
    %v433 = vadd.f32 %v224, %v432
    %434 = vmatmul.f32.gmra.mxu0 %v37
    %v435 = vpop.f32.mrf.mxu0
    %v436 = vadd.f32 %v227, %v435
    %437 = vmatmul.f32.gmra.mxu0 %v39
    %v438 = vpop.f32.mrf.mxu0
    %v439 = vadd.f32 %v230, %v438
    %440 = vmatmul.f32.gmra.mxu0 %v41
    %v441 = vpop.f32.mrf.mxu0
    %v442 = vadd.f32 %v233, %v441
    %443 = vmatmul.f32.gmra.mxu0 %v43
    %v444 = vpop.f32.mrf.mxu0
    %v445 = vadd.f32 %v236, %v444
    %446 = vmatmul.f32.gmra.mxu0 %v45
    %v447 = vpop.f32.mrf.mxu0
    %v448 = vadd.f32 %v239, %v447
    %449 = vmatmul.f32.gmra.mxu0 %v47
    %v450 = vpop.f32.mrf.mxu0
    %v451 = vadd.f32 %v242, %v450
    %452 = vmatmul.f32.gmra.mxu0 %v49
    %v453 = vpop.f32.mrf.mxu0
    %v454 = vadd.f32 %v245, %v453
    %455 = vmatmul.f32.gmra.mxu0 %v51
    %v456 = vpop.f32.mrf.mxu0
    %v457 = vadd.f32 %v248, %v456
    %458 = vmatmul.f32.gmra.mxu0 %v53
    %v459 = vpop.f32.mrf.mxu0
    %v460 = vadd.f32 %v251, %v459
    %461 = vmatmul.f32.gmra.mxu0 %v55
    %v462 = vpop.f32.mrf.mxu0
    %v463 = vadd.f32 %v254, %v462
    %464 = vmatmul.f32.gmra.mxu0 %v57
    %v465 = vpop.f32.mrf.mxu0
    %v466 = vadd.f32 %v257, %v465
    %467 = vmatmul.f32.gmra.mxu0 %v59
    %v468 = vpop.f32.mrf.mxu0
    %v469 = vadd.f32 %v260, %v468
    %470 = vmatmul.f32.gmra.mxu0 %v61
    %v471 = vpop.f32.mrf.mxu0
    %v472 = vadd.f32 %v263, %v471
    %473 = vmatmul.f32.gmra.mxu0 %v63
    %v474 = vpop.f32.mrf.mxu0
    %v475 = vadd.f32 %v266, %v474
    %476 = vmatmul.f32.gmra.mxu0 %v65
    %v477 = vpop.f32.mrf.mxu0
    %v478 = vadd.f32 %v269, %v477
    %479 = vmatmul.f32.gmra.mxu0 %v67
    %v480 = vpop.f32.mrf.mxu0
    %v481 = vadd.f32 %v272, %v480
    %482 = vmatmul.f32.gmra.mxu0 %v69
    %v483 = vpop.f32.mrf.mxu0
    %v484 = vadd.f32 %v275, %v483
    %485 = vmatmul.f32.gmra.mxu0 %v71
    %v486 = vpop.f32.mrf.mxu0
    %v487 = vadd.f32 %v278, %v486
    %488 = vmatmul.f32.gmra.mxu0 %v73
    %v489 = vpop.f32.mrf.mxu0
    %v490 = vadd.f32 %v281, %v489
    %491 = vmatmul.f32.gmra.mxu0 %v75
    %v492 = vpop.f32.mrf.mxu0
    %v493 = vadd.f32 %v284, %v492
    %494 = vmatmul.f32.gmra.mxu0 %v77
    %v495 = vpop.f32.mrf.mxu0
    %v496 = vadd.f32 %v287, %v495
    %497 = vmatmul.f32.gmra.mxu0 %v79
    %v498 = vpop.f32.mrf.mxu0
    %v499 = vadd.f32 %v290, %v498
    %500 = vmatmul.f32.gmra.mxu0 %v81
    %v501 = vpop.f32.mrf.mxu0
    %v502 = vadd.f32 %v293, %v501
    %503 = vmatmul.f32.gmra.mxu0 %v83
    %v504 = vpop.f32.mrf.mxu0
    %v505 = vadd.f32 %v296, %v504
    %506 = vmatmul.f32.gmra.mxu0 %v85
    %v507 = vpop.f32.mrf.mxu0
    %v508 = vadd.f32 %v299, %v507
    %509 = vmatmul.f32.gmra.mxu0 %v87
    %v510 = vpop.f32.mrf.mxu0
    %v511 = vadd.f32 %v302, %v510
    %512 = vmatmul.f32.gmra.mxu0 %v89
    %v513 = vpop.f32.mrf.mxu0
    %v514 = vadd.f32 %v305, %v513
    %515 = vmatmul.f32.gmra.mxu0 %v91
    %v516 = vpop.f32.mrf.mxu0
    %v517 = vadd.f32 %v308, %v516
    %518 = vmatmul.f32.gmra.mxu0 %v93
    %v519 = vpop.f32.mrf.mxu0
    %v520 = vadd.f32 %v311, %v519
    %521 = vmatmul.f32.gmra.mxu0 %v95
    %v522 = vpop.f32.mrf.mxu0
    %v523 = vadd.f32 %v314, %v522
    %524 = vmatmul.f32.gmra.mxu0 %v97
    %v525 = vpop.f32.mrf.mxu0
    %v526 = vadd.f32 %v317, %v525
    %527 = vmatmul.f32.gmra.mxu0 %v99
    %v528 = vpop.f32.mrf.mxu0
    %v529 = vadd.f32 %v320, %v528
    %530 = vmatmul.f32.gmra.mxu0 %v101
    %v531 = vpop.f32.mrf.mxu0
    %v532 = vadd.f32 %v323, %v531
    %533 = vmatmul.f32.gmra.mxu0 %v103
    %v534 = vpop.f32.mrf.mxu0
    %v535 = vadd.f32 %v326, %v534
    %536 = vmatmul.f32.gmra.mxu0 %v105
    %v537 = vpop.f32.mrf.mxu0
    %v538 = vadd.f32 %v329, %v537
    %539 = vmatmul.f32.gmra.mxu0 %v107
    %v540 = vpop.f32.mrf.mxu0
    %v541 = vadd.f32 %v332, %v540
    %542 = vmatmul.f32.gmra.mxu0 %v109
    %v543 = vpop.f32.mrf.mxu0
    %v544 = vadd.f32 %v335, %v543
    %545 = vmatmul.f32.gmra.mxu0 %v111
    %v546 = vpop.f32.mrf.mxu0
    %v547 = vadd.f32 %v338, %v546
    %548 = vmatmul.f32.gmra.mxu0 %v113
    %v549 = vpop.f32.mrf.mxu0
    %v550 = vadd.f32 %v341, %v549
    %551 = vmatmul.f32.gmra.mxu0 %v115
    %v552 = vpop.f32.mrf.mxu0
    %v553 = vadd.f32 %v344, %v552
    %554 = vmatmul.f32.gmra.mxu0 %v117
    %v555 = vpop.f32.mrf.mxu0
    %v556 = vadd.f32 %v347, %v555
    %557 = vmatmul.f32.gmra.mxu0 %v119
    %v558 = vpop.f32.mrf.mxu0
    %v559 = vadd.f32 %v350, %v558
    %560 = vmatmul.f32.gmra.mxu0 %v121
    %v561 = vpop.f32.mrf.mxu0
    %v562 = vadd.f32 %v353, %v561
    %563 = vmatmul.f32.gmra.mxu0 %v123
    %v564 = vpop.f32.mrf.mxu0
    %v565 = vadd.f32 %v356, %v564
    %566 = vmatmul.f32.gmra.mxu0 %v125
    %v567 = vpop.f32.mrf.mxu0
    %v568 = vadd.f32 %v359, %v567
    %569 = vmatmul.f32.gmra.mxu0 %v127
    %v570 = vpop.f32.mrf.mxu0
    %v571 = vadd.f32 %v362, %v570
    %572 = vmatmul.f32.gmra.mxu0 %v129
    %v573 = vpop.f32.mrf.mxu0
    %v574 = vadd.f32 %v365, %v573
    %575 = vmatmul.f32.gmra.mxu0 %v131
    %v576 = vpop.f32.mrf.mxu0
    %v577 = vadd.f32 %v368, %v576
    %578 = vmatmul.f32.gmra.mxu0 %v133
    %v579 = vpop.f32.mrf.mxu0
    %v580 = vadd.f32 %v371, %v579
    %581 = vmatmul.f32.gmra.mxu0 %v135
    %v582 = vpop.f32.mrf.mxu0
    %v583 = vadd.f32 %v374, %v582
    %584 = vmatmul.f32.gmra.mxu0 %v137
    %v585 = vpop.f32.mrf.mxu0
    %v586 = vadd.f32 %v377, %v585
    %587 = vmatmul.f32.gmra.mxu0 %v139
    %v588 = vpop.f32.mrf.mxu0
    %v589 = vadd.f32 %v380, %v588
    %590 = vmatmul.f32.gmra.mxu0 %v141
    %v591 = vpop.f32.mrf.mxu0
    %v592 = vadd.f32 %v383, %v591
    %593 = vmatmul.f32.gmra.mxu0 %v143
    %v594 = vpop.f32.mrf.mxu0
    %v595 = vadd.f32 %v386, %v594
    %596 = vmatmul.f32.gmra.mxu0 %v145
    %v597 = vpop.f32.mrf.mxu0
    %v598 = vadd.f32 %v389, %v597
    %599 = vdwg.mxu0
    %v600 = vtanh.pop %v409
    %v601 = vtanh.pop %v412
    %v602 = vtanh.pop %v415
    %v603 = vtanh.pop %v418
    %v604 = vtanh.pop %v421
    %v605 = vtanh.pop %v424
    %v606 = vtanh.pop %v427
    %v607 = vtanh.pop %v430
    %v608 = vtanh.pop %v433
    %v609 = vtanh.pop %v436
    %v610 = vtanh.pop %v439
    %v611 = vtanh.pop %v442
    %v612 = vtanh.pop %v445
    %v613 = vtanh.pop %v448
    %v614 = vtanh.pop %v451
    %v615 = vtanh.pop %v454
    %v616 = vtanh.pop %v457
    %v617 = vtanh.pop %v460
    %v618 = vtanh.pop %v463
    %v619 = vtanh.pop %v466
    %v620 = vtanh.pop %v469
    %v621 = vtanh.pop %v472
    %v622 = vtanh.pop %v475
    %v623 = vtanh.pop %v478
    %v624 = vtanh.pop %v481
    %v625 = vtanh.pop %v484
    %v626 = vtanh.pop %v487
    %v627 = vtanh.pop %v490
    %v628 = vtanh.pop %v493
    %v629 = vtanh.pop %v496
    %v630 = vtanh.pop %v499
    %v631 = vtanh.pop %v502
    %v632 = vtanh.pop %v505
    %v633 = vtanh.pop %v508
    %v634 = vtanh.pop %v511
    %v635 = vtanh.pop %v514
    %v636 = vtanh.pop %v517
    %v637 = vtanh.pop %v520
    %v638 = vtanh.pop %v523
    %v639 = vtanh.pop %v526
    %v640 = vtanh.pop %v529
    %v641 = vtanh.pop %v532
    %v642 = vtanh.pop %v535
    %v643 = vtanh.pop %v538
    %v644 = vtanh.pop %v541
    %v645 = vtanh.pop %v544
    %v646 = vtanh.pop %v547
    %v647 = vtanh.pop %v550
    %v648 = vtanh.pop %v553
    %v649 = vtanh.pop %v556
    %v650 = vtanh.pop %v559
    %v651 = vtanh.pop %v562
    %v652 = vtanh.pop %v565
    %v653 = vtanh.pop %v568
    %v654 = vtanh.pop %v571
    %v655 = vtanh.pop %v574
    %v656 = vtanh.pop %v577
    %v657 = vtanh.pop %v580
    %v658 = vtanh.pop %v583
    %v659 = vtanh.pop %v586
    %v660 = vtanh.pop %v589
    %v661 = vtanh.pop %v592
    %v662 = vtanh.pop %v595
    %v663 = vtanh.pop %v598
    %v664 = vld [vmem:[%s3] sm:$0x1]
    %v666 = vperm.slane %v664, 0
    %v668 = vmul.f32 %v600, %v666
    %v669 = vmul.f32 %v601, %v666
    %v670 = vmul.f32 %v602, %v666
    %v671 = vmul.f32 %v603, %v666
    %v672 = vmul.f32 %v604, %v666
    %v673 = vmul.f32 %v605, %v666
    %v674 = vmul.f32 %v606, %v666
    %v675 = vmul.f32 %v607, %v666
    %v676 = vmul.f32 %v608, %v666
    %v677 = vmul.f32 %v609, %v666
    %v678 = vmul.f32 %v610, %v666
    %v679 = vmul.f32 %v611, %v666
    %v680 = vmul.f32 %v612, %v666
    %v681 = vmul.f32 %v613, %v666
    %v682 = vmul.f32 %v614, %v666
    %v683 = vmul.f32 %v615, %v666
    %v684 = vmul.f32 %v616, %v666
    %v685 = vmul.f32 %v617, %v666
    %v686 = vmul.f32 %v618, %v666
    %v687 = vmul.f32 %v619, %v666
    %v688 = vmul.f32 %v620, %v666
    %v689 = vmul.f32 %v621, %v666
    %v690 = vmul.f32 %v622, %v666
    %v691 = vmul.f32 %v623, %v666
    %v692 = vmul.f32 %v624, %v666
    %v693 = vmul.f32 %v625, %v666
    %v694 = vmul.f32 %v626, %v666
    %v695 = vmul.f32 %v627, %v666
    %v696 = vmul.f32 %v628, %v666
    %v697 = vmul.f32 %v629, %v666
    %v698 = vmul.f32 %v630, %v666
    %v699 = vmul.f32 %v631, %v666
    %v700 = vmul.f32 %v632, %v666
    %v701 = vmul.f32 %v633, %v666
    %v702 = vmul.f32 %v634, %v666
    %v703 = vmul.f32 %v635, %v666
    %v704 = vmul.f32 %v636, %v666
    %v705 = vmul.f32 %v637, %v666
    %v706 = vmul.f32 %v638, %v666
    %v707 = vmul.f32 %v639, %v666
    %v708 = vmul.f32 %v640, %v666
    %v709 = vmul.f32 %v641, %v666
    %v710 = vmul.f32 %v642, %v666
    %v711 = vmul.f32 %v643, %v666
    %v712 = vmul.f32 %v644, %v666
    %v713 = vmul.f32 %v645, %v666
    %v714 = vmul.f32 %v646, %v666
    %v715 = vmul.f32 %v647, %v666
    %v716 = vmul.f32 %v648, %v666
    %v717 = vmul.f32 %v649, %v666
    %v718 = vmul.f32 %v650, %v666
    %v719 = vmul.f32 %v651, %v666
    %v720 = vmul.f32 %v652, %v666
    %v721 = vmul.f32 %v653, %v666
    %v722 = vmul.f32 %v654, %v666
    %v723 = vmul.f32 %v655, %v666
    %v724 = vmul.f32 %v656, %v666
    %v725 = vmul.f32 %v657, %v666
    %v726 = vmul.f32 %v658, %v666
    %v727 = vmul.f32 %v659, %v666
    %v728 = vmul.f32 %v660, %v666
    %v729 = vmul.f32 %v661, %v666
    %v730 = vmul.f32 %v662, %v666
    %v731 = vmul.f32 %v663, %v666
    %v732 = vadd.f32 %v668, %v669
    %v733 = vadd.f32 %v732, %v670
    %v734 = vadd.f32 %v733, %v671
    %v735 = vadd.f32 %v734, %v672
    %v736 = vadd.f32 %v735, %v673
    %v737 = vadd.f32 %v736, %v674
    %v738 = vadd.f32 %v737, %v675
    %v739 = vadd.f32 %v738, %v676
    %v740 = vadd.f32 %v739, %v677
    %v741 = vadd.f32 %v740, %v678
    %v742 = vadd.f32 %v741, %v679
    %v743 = vadd.f32 %v742, %v680
    %v744 = vadd.f32 %v743, %v681
    %v745 = vadd.f32 %v744, %v682
    %v746 = vadd.f32 %v745, %v683
    %v747 = vadd.f32 %v746, %v684
    %v748 = vadd.f32 %v747, %v685
    %v749 = vadd.f32 %v748, %v686
    %v750 = vadd.f32 %v749, %v687
    %v751 = vadd.f32 %v750, %v688
    %v752 = vadd.f32 %v751, %v689
    %v753 = vadd.f32 %v752, %v690
    %v754 = vadd.f32 %v753, %v691
    %v755 = vadd.f32 %v754, %v692
    %v756 = vadd.f32 %v755, %v693
    %v757 = vadd.f32 %v756, %v694
    %v758 = vadd.f32 %v757, %v695
    %v759 = vadd.f32 %v758, %v696
    %v760 = vadd.f32 %v759, %v697
    %v761 = vadd.f32 %v760, %v698
    %v762 = vadd.f32 %v761, %v699
    %v763 = vadd.f32 %v762, %v700
    %v764 = vadd.f32 %v763, %v701
    %v765 = vadd.f32 %v764, %v702
    %v766 = vadd.f32 %v765, %v703
    %v767 = vadd.f32 %v766, %v704
    %v768 = vadd.f32 %v767, %v705
    %v769 = vadd.f32 %v768, %v706
    %v770 = vadd.f32 %v769, %v707
    %v771 = vadd.f32 %v770, %v708
    %v772 = vadd.f32 %v771, %v709
    %v773 = vadd.f32 %v772, %v710
    %v774 = vadd.f32 %v773, %v711
    %v775 = vadd.f32 %v774, %v712
    %v776 = vadd.f32 %v775, %v713
    %v777 = vadd.f32 %v776, %v714
    %v778 = vadd.f32 %v777, %v715
    %v779 = vadd.f32 %v778, %v716
    %v780 = vadd.f32 %v779, %v717
    %v781 = vadd.f32 %v780, %v718
    %v782 = vadd.f32 %v781, %v719
    %v783 = vadd.f32 %v782, %v720
    %v784 = vadd.f32 %v783, %v721
    %v785 = vadd.f32 %v784, %v722
    %v786 = vadd.f32 %v785, %v723
    %v787 = vadd.f32 %v786, %v724
    %v788 = vadd.f32 %v787, %v725
    %v789 = vadd.f32 %v788, %v726
    %v790 = vadd.f32 %v789, %v727
    %v791 = vadd.f32 %v790, %v728
    %v792 = vadd.f32 %v791, %v729
    %v793 = vadd.f32 %v792, %v730
    %v794 = vadd.f32 %v793, %v731
    %795 = vadd.xlane.f32.xlu0 %v794
    %v796 = vpop.xlane.xlu0 %795
    %v797 = vrot.slane %v796, 4
    %v798 = vadd.f32 %v796, %v797
    %v799 = vrot.slane %v798, 2
    %v800 = vadd.f32 %v798, %v799
    %v801 = vrot.slane %v800, 1
    %v802 = vadd.f32 %v800, %v801
    %s803 = vtos %v802
    %v804 = vstv %s803
    %v805 = vmul.f32 %v804, 0.001953125
    %v806 = vld [vmem:[%s0 + $0x10] sm:$0xff]
    %v807 = vld [vmem:[%s0 + $0x18] sm:$0xff]
    %v808 = vld [vmem:[%s0 + $0x50] sm:$0xff]
    %v809 = vld [vmem:[%s0 + $0x58] sm:$0xff]
    %v810 = vld [vmem:[%s0 + $0x90] sm:$0xff]
    %v811 = vld [vmem:[%s0 + $0x98] sm:$0xff]
    %v812 = vld [vmem:[%s0 + $0xd0] sm:$0xff]
    %v813 = vld [vmem:[%s0 + $0xd8] sm:$0xff]
    %v814 = vld [vmem:[%s0 + $0x110] sm:$0xff]
    %v815 = vld [vmem:[%s0 + $0x118] sm:$0xff]
    %v816 = vld [vmem:[%s0 + $0x150] sm:$0xff]
    %v817 = vld [vmem:[%s0 + $0x158] sm:$0xff]
    %v818 = vld [vmem:[%s0 + $0x190] sm:$0xff]
    %v819 = vld [vmem:[%s0 + $0x198] sm:$0xff]
    %v820 = vld [vmem:[%s0 + $0x1d0] sm:$0xff]
    %v821 = vld [vmem:[%s0 + $0x1d8] sm:$0xff]
    %v822 = vld [vmem:[%s0 + $0x210] sm:$0xff]
    %v823 = vld [vmem:[%s0 + $0x218] sm:$0xff]
    %v824 = vld [vmem:[%s0 + $0x250] sm:$0xff]
    %v825 = vld [vmem:[%s0 + $0x258] sm:$0xff]
    %v826 = vld [vmem:[%s0 + $0x290] sm:$0xff]
    %v827 = vld [vmem:[%s0 + $0x298] sm:$0xff]
    %v828 = vld [vmem:[%s0 + $0x2d0] sm:$0xff]
    %v829 = vld [vmem:[%s0 + $0x2d8] sm:$0xff]
    %v830 = vld [vmem:[%s0 + $0x310] sm:$0xff]
    %v831 = vld [vmem:[%s0 + $0x318] sm:$0xff]
    %v832 = vld [vmem:[%s0 + $0x350] sm:$0xff]
    %v833 = vld [vmem:[%s0 + $0x358] sm:$0xff]
    %v834 = vld [vmem:[%s0 + $0x390] sm:$0xff]
    %v835 = vld [vmem:[%s0 + $0x398] sm:$0xff]
    %v836 = vld [vmem:[%s0 + $0x3d0] sm:$0xff]
    %v837 = vld [vmem:[%s0 + $0x3d8] sm:$0xff]
    %v838 = vld [vmem:[%s0 + $0x410] sm:$0xff]
    %v839 = vld [vmem:[%s0 + $0x418] sm:$0xff]
    %v840 = vld [vmem:[%s0 + $0x450] sm:$0xff]
    %v841 = vld [vmem:[%s0 + $0x458] sm:$0xff]
    %v842 = vld [vmem:[%s0 + $0x490] sm:$0xff]
    %v843 = vld [vmem:[%s0 + $0x498] sm:$0xff]
    %v844 = vld [vmem:[%s0 + $0x4d0] sm:$0xff]
    %v845 = vld [vmem:[%s0 + $0x4d8] sm:$0xff]
    %v846 = vld [vmem:[%s0 + $0x510] sm:$0xff]
    %v847 = vld [vmem:[%s0 + $0x518] sm:$0xff]
    %v848 = vld [vmem:[%s0 + $0x550] sm:$0xff]
    %v849 = vld [vmem:[%s0 + $0x558] sm:$0xff]
    %v850 = vld [vmem:[%s0 + $0x590] sm:$0xff]
    %v851 = vld [vmem:[%s0 + $0x598] sm:$0xff]
    %v852 = vld [vmem:[%s0 + $0x5d0] sm:$0xff]
    %v853 = vld [vmem:[%s0 + $0x5d8] sm:$0xff]
    %v854 = vld [vmem:[%s0 + $0x610] sm:$0xff]
    %v855 = vld [vmem:[%s0 + $0x618] sm:$0xff]
    %v856 = vld [vmem:[%s0 + $0x650] sm:$0xff]
    %v857 = vld [vmem:[%s0 + $0x658] sm:$0xff]
    %v858 = vld [vmem:[%s0 + $0x690] sm:$0xff]
    %v859 = vld [vmem:[%s0 + $0x698] sm:$0xff]
    %v860 = vld [vmem:[%s0 + $0x6d0] sm:$0xff]
    %v861 = vld [vmem:[%s0 + $0x6d8] sm:$0xff]
    %v862 = vld [vmem:[%s0 + $0x710] sm:$0xff]
    %v863 = vld [vmem:[%s0 + $0x718] sm:$0xff]
    %v864 = vld [vmem:[%s0 + $0x750] sm:$0xff]
    %v865 = vld [vmem:[%s0 + $0x758] sm:$0xff]
    %v866 = vld [vmem:[%s0 + $0x790] sm:$0xff]
    %v867 = vld [vmem:[%s0 + $0x798] sm:$0xff]
    %v868 = vld [vmem:[%s0 + $0x7d0] sm:$0xff]
    %v869 = vld [vmem:[%s0 + $0x7d8] sm:$0xff]
    %v870 = vld [vmem:[%s0 + $0x810] sm:$0xff]
    %v871 = vld [vmem:[%s0 + $0x818] sm:$0xff]
    %v872 = vld [vmem:[%s0 + $0x850] sm:$0xff]
    %v873 = vld [vmem:[%s0 + $0x858] sm:$0xff]
    %v874 = vld [vmem:[%s0 + $0x890] sm:$0xff]
    %v875 = vld [vmem:[%s0 + $0x898] sm:$0xff]
    %v876 = vld [vmem:[%s0 + $0x8d0] sm:$0xff]
    %v877 = vld [vmem:[%s0 + $0x8d8] sm:$0xff]
    %v878 = vld [vmem:[%s0 + $0x910] sm:$0xff]
    %v879 = vld [vmem:[%s0 + $0x918] sm:$0xff]
    %v880 = vld [vmem:[%s0 + $0x950] sm:$0xff]
    %v881 = vld [vmem:[%s0 + $0x958] sm:$0xff]
    %v882 = vld [vmem:[%s0 + $0x990] sm:$0xff]
    %v883 = vld [vmem:[%s0 + $0x998] sm:$0xff]
    %v884 = vld [vmem:[%s0 + $0x9d0] sm:$0xff]
    %v885 = vld [vmem:[%s0 + $0x9d8] sm:$0xff]
    %v886 = vld [vmem:[%s0 + $0xa10] sm:$0xff]
    %v887 = vld [vmem:[%s0 + $0xa18] sm:$0xff]
    %v888 = vld [vmem:[%s0 + $0xa50] sm:$0xff]
    %v889 = vld [vmem:[%s0 + $0xa58] sm:$0xff]
    %v890 = vld [vmem:[%s0 + $0xa90] sm:$0xff]
    %v891 = vld [vmem:[%s0 + $0xa98] sm:$0xff]
    %v892 = vld [vmem:[%s0 + $0xad0] sm:$0xff]
    %v893 = vld [vmem:[%s0 + $0xad8] sm:$0xff]
    %v894 = vld [vmem:[%s0 + $0xb10] sm:$0xff]
    %v895 = vld [vmem:[%s0 + $0xb18] sm:$0xff]
    %v896 = vld [vmem:[%s0 + $0xb50] sm:$0xff]
    %v897 = vld [vmem:[%s0 + $0xb58] sm:$0xff]
    %v898 = vld [vmem:[%s0 + $0xb90] sm:$0xff]
    %v899 = vld [vmem:[%s0 + $0xb98] sm:$0xff]
    %v900 = vld [vmem:[%s0 + $0xbd0] sm:$0xff]
    %v901 = vld [vmem:[%s0 + $0xbd8] sm:$0xff]
    %v902 = vld [vmem:[%s0 + $0xc10] sm:$0xff]
    %v903 = vld [vmem:[%s0 + $0xc18] sm:$0xff]
    %v904 = vld [vmem:[%s0 + $0xc50] sm:$0xff]
    %v905 = vld [vmem:[%s0 + $0xc58] sm:$0xff]
    %v906 = vld [vmem:[%s0 + $0xc90] sm:$0xff]
    %v907 = vld [vmem:[%s0 + $0xc98] sm:$0xff]
    %v908 = vld [vmem:[%s0 + $0xcd0] sm:$0xff]
    %v909 = vld [vmem:[%s0 + $0xcd8] sm:$0xff]
    %v910 = vld [vmem:[%s0 + $0xd10] sm:$0xff]
    %v911 = vld [vmem:[%s0 + $0xd18] sm:$0xff]
    %v912 = vld [vmem:[%s0 + $0xd50] sm:$0xff]
    %v913 = vld [vmem:[%s0 + $0xd58] sm:$0xff]
    %v914 = vld [vmem:[%s0 + $0xd90] sm:$0xff]
    %v915 = vld [vmem:[%s0 + $0xd98] sm:$0xff]
    %v916 = vld [vmem:[%s0 + $0xdd0] sm:$0xff]
    %v917 = vld [vmem:[%s0 + $0xdd8] sm:$0xff]
    %v918 = vld [vmem:[%s0 + $0xe10] sm:$0xff]
    %v919 = vld [vmem:[%s0 + $0xe18] sm:$0xff]
    %v920 = vld [vmem:[%s0 + $0xe50] sm:$0xff]
    %v921 = vld [vmem:[%s0 + $0xe58] sm:$0xff]
    %v922 = vld [vmem:[%s0 + $0xe90] sm:$0xff]
    %v923 = vld [vmem:[%s0 + $0xe98] sm:$0xff]
    %v924 = vld [vmem:[%s0 + $0xed0] sm:$0xff]
    %v925 = vld [vmem:[%s0 + $0xed8] sm:$0xff]
    %v926 = vld [vmem:[%s0 + $0xf10] sm:$0xff]
    %v927 = vld [vmem:[%s0 + $0xf18] sm:$0xff]
    %v928 = vld [vmem:[%s0 + $0xf50] sm:$0xff]
    %v929 = vld [vmem:[%s0 + $0xf58] sm:$0xff]
    %v930 = vld [vmem:[%s0 + $0xf90] sm:$0xff]
    %v931 = vld [vmem:[%s0 + $0xf98] sm:$0xff]
    %v932 = vld [vmem:[%s0 + $0xfd0] sm:$0xff]
    %v933 = vld [vmem:[%s0 + $0xfd8] sm:$0xff]
    %934 = vmatpush.msra.mxu0 %v161
    %935 = vmatpush.msra.mxu0 %v160
    %936 = vmatpush.msra.mxu0 %v159
    %937 = vmatpush.msra.mxu0 %v158
    %938 = vmatpush.msra.mxu0 %v157
    %939 = vmatpush.msra.mxu0 %v156
    %940 = vmatpush.msra.mxu0 %v155
    %941 = vmatpush.msra.mxu0 %v154
    %942 = vmatpush.msra.mxu0 %v153
    %943 = vmatpush.msra.mxu0 %v152
    %944 = vmatpush.msra.mxu0 %v151
    %945 = vmatpush.msra.mxu0 %v150
    %946 = vmatpush.msra.mxu0 %v149
    %947 = vmatpush.msra.mxu0 %v148
    %948 = vmatpush.msra.mxu0 %v147
    %949 = vmatpush.msra.mxu0 %v146
    %950 = vmatmul.f32.gmra.mxu0 %v806
    %v951 = vpop.f32.mrf.mxu0
    %v952 = vadd.f32 %v180, %v951
    %953 = vmatmul.f32.gmra.mxu0 %v808
    %v954 = vpop.f32.mrf.mxu0
    %v955 = vadd.f32 %v180, %v954
    %956 = vmatmul.f32.gmra.mxu0 %v810
    %v957 = vpop.f32.mrf.mxu0
    %v958 = vadd.f32 %v180, %v957
    %959 = vmatmul.f32.gmra.mxu0 %v812
    %v960 = vpop.f32.mrf.mxu0
    %v961 = vadd.f32 %v180, %v960
    %962 = vmatmul.f32.gmra.mxu0 %v814
    %v963 = vpop.f32.mrf.mxu0
    %v964 = vadd.f32 %v180, %v963
    %965 = vmatmul.f32.gmra.mxu0 %v816
    %v966 = vpop.f32.mrf.mxu0
    %v967 = vadd.f32 %v180, %v966
    %968 = vmatmul.f32.gmra.mxu0 %v818
    %v969 = vpop.f32.mrf.mxu0
    %v970 = vadd.f32 %v180, %v969
    %971 = vmatmul.f32.gmra.mxu0 %v820
    %v972 = vpop.f32.mrf.mxu0
    %v973 = vadd.f32 %v180, %v972
    %974 = vmatmul.f32.gmra.mxu0 %v822
    %v975 = vpop.f32.mrf.mxu0
    %v976 = vadd.f32 %v180, %v975
    %977 = vmatmul.f32.gmra.mxu0 %v824
    %v978 = vpop.f32.mrf.mxu0
    %v979 = vadd.f32 %v180, %v978
    %980 = vmatmul.f32.gmra.mxu0 %v826
    %v981 = vpop.f32.mrf.mxu0
    %v982 = vadd.f32 %v180, %v981
    %983 = vmatmul.f32.gmra.mxu0 %v828
    %v984 = vpop.f32.mrf.mxu0
    %v985 = vadd.f32 %v180, %v984
    %986 = vmatmul.f32.gmra.mxu0 %v830
    %v987 = vpop.f32.mrf.mxu0
    %v988 = vadd.f32 %v180, %v987
    %989 = vmatmul.f32.gmra.mxu0 %v832
    %v990 = vpop.f32.mrf.mxu0
    %v991 = vadd.f32 %v180, %v990
    %992 = vmatmul.f32.gmra.mxu0 %v834
    %v993 = vpop.f32.mrf.mxu0
    %v994 = vadd.f32 %v180, %v993
    %995 = vmatmul.f32.gmra.mxu0 %v836
    %v996 = vpop.f32.mrf.mxu0
    %v997 = vadd.f32 %v180, %v996
    %998 = vmatmul.f32.gmra.mxu0 %v838
    %v999 = vpop.f32.mrf.mxu0
    %v1000 = vadd.f32 %v180, %v999
    %1001 = vmatmul.f32.gmra.mxu0 %v840
    %v1002 = vpop.f32.mrf.mxu0
    %v1003 = vadd.f32 %v180, %v1002
    %1004 = vmatmul.f32.gmra.mxu0 %v842
    %v1005 = vpop.f32.mrf.mxu0
    %v1006 = vadd.f32 %v180, %v1005
    %1007 = vmatmul.f32.gmra.mxu0 %v844
    %v1008 = vpop.f32.mrf.mxu0
    %v1009 = vadd.f32 %v180, %v1008
    %1010 = vmatmul.f32.gmra.mxu0 %v846
    %v1011 = vpop.f32.mrf.mxu0
    %v1012 = vadd.f32 %v180, %v1011
    %1013 = vmatmul.f32.gmra.mxu0 %v848
    %v1014 = vpop.f32.mrf.mxu0
    %v1015 = vadd.f32 %v180, %v1014
    %1016 = vmatmul.f32.gmra.mxu0 %v850
    %v1017 = vpop.f32.mrf.mxu0
    %v1018 = vadd.f32 %v180, %v1017
    %1019 = vmatmul.f32.gmra.mxu0 %v852
    %v1020 = vpop.f32.mrf.mxu0
    %v1021 = vadd.f32 %v180, %v1020
    %1022 = vmatmul.f32.gmra.mxu0 %v854
    %v1023 = vpop.f32.mrf.mxu0
    %v1024 = vadd.f32 %v180, %v1023
    %1025 = vmatmul.f32.gmra.mxu0 %v856
    %v1026 = vpop.f32.mrf.mxu0
    %v1027 = vadd.f32 %v180, %v1026
    %1028 = vmatmul.f32.gmra.mxu0 %v858
    %v1029 = vpop.f32.mrf.mxu0
    %v1030 = vadd.f32 %v180, %v1029
    %1031 = vmatmul.f32.gmra.mxu0 %v860
    %v1032 = vpop.f32.mrf.mxu0
    %v1033 = vadd.f32 %v180, %v1032
    %1034 = vmatmul.f32.gmra.mxu0 %v862
    %v1035 = vpop.f32.mrf.mxu0
    %v1036 = vadd.f32 %v180, %v1035
    %1037 = vmatmul.f32.gmra.mxu0 %v864
    %v1038 = vpop.f32.mrf.mxu0
    %v1039 = vadd.f32 %v180, %v1038
    %1040 = vmatmul.f32.gmra.mxu0 %v866
    %v1041 = vpop.f32.mrf.mxu0
    %v1042 = vadd.f32 %v180, %v1041
    %1043 = vmatmul.f32.gmra.mxu0 %v868
    %v1044 = vpop.f32.mrf.mxu0
    %v1045 = vadd.f32 %v180, %v1044
    %1046 = vmatmul.f32.gmra.mxu0 %v870
    %v1047 = vpop.f32.mrf.mxu0
    %v1048 = vadd.f32 %v180, %v1047
    %1049 = vmatmul.f32.gmra.mxu0 %v872
    %v1050 = vpop.f32.mrf.mxu0
    %v1051 = vadd.f32 %v180, %v1050
    %1052 = vmatmul.f32.gmra.mxu0 %v874
    %v1053 = vpop.f32.mrf.mxu0
    %v1054 = vadd.f32 %v180, %v1053
    %1055 = vmatmul.f32.gmra.mxu0 %v876
    %v1056 = vpop.f32.mrf.mxu0
    %v1057 = vadd.f32 %v180, %v1056
    %1058 = vmatmul.f32.gmra.mxu0 %v878
    %v1059 = vpop.f32.mrf.mxu0
    %v1060 = vadd.f32 %v180, %v1059
    %1061 = vmatmul.f32.gmra.mxu0 %v880
    %v1062 = vpop.f32.mrf.mxu0
    %v1063 = vadd.f32 %v180, %v1062
    %1064 = vmatmul.f32.gmra.mxu0 %v882
    %v1065 = vpop.f32.mrf.mxu0
    %v1066 = vadd.f32 %v180, %v1065
    %1067 = vmatmul.f32.gmra.mxu0 %v884
    %v1068 = vpop.f32.mrf.mxu0
    %v1069 = vadd.f32 %v180, %v1068
    %1070 = vmatmul.f32.gmra.mxu0 %v886
    %v1071 = vpop.f32.mrf.mxu0
    %v1072 = vadd.f32 %v180, %v1071
    %1073 = vmatmul.f32.gmra.mxu0 %v888
    %v1074 = vpop.f32.mrf.mxu0
    %v1075 = vadd.f32 %v180, %v1074
    %1076 = vmatmul.f32.gmra.mxu0 %v890
    %v1077 = vpop.f32.mrf.mxu0
    %v1078 = vadd.f32 %v180, %v1077
    %1079 = vmatmul.f32.gmra.mxu0 %v892
    %v1080 = vpop.f32.mrf.mxu0
    %v1081 = vadd.f32 %v180, %v1080
    %1082 = vmatmul.f32.gmra.mxu0 %v894
    %v1083 = vpop.f32.mrf.mxu0
    %v1084 = vadd.f32 %v180, %v1083
    %1085 = vmatmul.f32.gmra.mxu0 %v896
    %v1086 = vpop.f32.mrf.mxu0
    %v1087 = vadd.f32 %v180, %v1086
    %1088 = vmatmul.f32.gmra.mxu0 %v898
    %v1089 = vpop.f32.mrf.mxu0
    %v1090 = vadd.f32 %v180, %v1089
    %1091 = vmatmul.f32.gmra.mxu0 %v900
    %v1092 = vpop.f32.mrf.mxu0
    %v1093 = vadd.f32 %v180, %v1092
    %1094 = vmatmul.f32.gmra.mxu0 %v902
    %v1095 = vpop.f32.mrf.mxu0
    %v1096 = vadd.f32 %v180, %v1095
    %1097 = vmatmul.f32.gmra.mxu0 %v904
    %v1098 = vpop.f32.mrf.mxu0
    %v1099 = vadd.f32 %v180, %v1098
    %1100 = vmatmul.f32.gmra.mxu0 %v906
    %v1101 = vpop.f32.mrf.mxu0
    %v1102 = vadd.f32 %v180, %v1101
    %1103 = vmatmul.f32.gmra.mxu0 %v908
    %v1104 = vpop.f32.mrf.mxu0
    %v1105 = vadd.f32 %v180, %v1104
    %1106 = vmatmul.f32.gmra.mxu0 %v910
    %v1107 = vpop.f32.mrf.mxu0
    %v1108 = vadd.f32 %v180, %v1107
    %1109 = vmatmul.f32.gmra.mxu0 %v912
    %v1110 = vpop.f32.mrf.mxu0
    %v1111 = vadd.f32 %v180, %v1110
    %1112 = vmatmul.f32.gmra.mxu0 %v914
    %v1113 = vpop.f32.mrf.mxu0
    %v1114 = vadd.f32 %v180, %v1113
    %1115 = vmatmul.f32.gmra.mxu0 %v916
    %v1116 = vpop.f32.mrf.mxu0
    %v1117 = vadd.f32 %v180, %v1116
    %1118 = vmatmul.f32.gmra.mxu0 %v918
    %v1119 = vpop.f32.mrf.mxu0
    %v1120 = vadd.f32 %v180, %v1119
    %1121 = vmatmul.f32.gmra.mxu0 %v920
    %v1122 = vpop.f32.mrf.mxu0
    %v1123 = vadd.f32 %v180, %v1122
    %1124 = vmatmul.f32.gmra.mxu0 %v922
    %v1125 = vpop.f32.mrf.mxu0
    %v1126 = vadd.f32 %v180, %v1125
    %1127 = vmatmul.f32.gmra.mxu0 %v924
    %v1128 = vpop.f32.mrf.mxu0
    %v1129 = vadd.f32 %v180, %v1128
    %1130 = vmatmul.f32.gmra.mxu0 %v926
    %v1131 = vpop.f32.mrf.mxu0
    %v1132 = vadd.f32 %v180, %v1131
    %1133 = vmatmul.f32.gmra.mxu0 %v928
    %v1134 = vpop.f32.mrf.mxu0
    %v1135 = vadd.f32 %v180, %v1134
    %1136 = vmatmul.f32.gmra.mxu0 %v930
    %v1137 = vpop.f32.mrf.mxu0
    %v1138 = vadd.f32 %v180, %v1137
    %1139 = vmatmul.f32.gmra.mxu0 %v932
    %v1140 = vpop.f32.mrf.mxu0
    %v1141 = vadd.f32 %v180, %v1140
    %1142 = vdwg.mxu0
    %1143 = vmatpush.msra.mxu0 %v177
    %1144 = vmatpush.msra.mxu0 %v176
    %1145 = vmatpush.msra.mxu0 %v175
    %1146 = vmatpush.msra.mxu0 %v174
    %1147 = vmatpush.msra.mxu0 %v173
    %1148 = vmatpush.msra.mxu0 %v172
    %1149 = vmatpush.msra.mxu0 %v171
    %1150 = vmatpush.msra.mxu0 %v170
    %1151 = vmatpush.msra.mxu0 %v169
    %1152 = vmatpush.msra.mxu0 %v168
    %1153 = vmatpush.msra.mxu0 %v167
    %1154 = vmatpush.msra.mxu0 %v166
    %1155 = vmatpush.msra.mxu0 %v165
    %1156 = vmatpush.msra.mxu0 %v164
    %1157 = vmatpush.msra.mxu0 %v163
    %1158 = vmatpush.msra.mxu0 %v162
    %1159 = vmatmul.f32.gmra.mxu0 %v807
    %v1160 = vpop.f32.mrf.mxu0
    %v1161 = vadd.f32 %v952, %v1160
    %1162 = vmatmul.f32.gmra.mxu0 %v809
    %v1163 = vpop.f32.mrf.mxu0
    %v1164 = vadd.f32 %v955, %v1163
    %1165 = vmatmul.f32.gmra.mxu0 %v811
    %v1166 = vpop.f32.mrf.mxu0
    %v1167 = vadd.f32 %v958, %v1166
    %1168 = vmatmul.f32.gmra.mxu0 %v813
    %v1169 = vpop.f32.mrf.mxu0
    %v1170 = vadd.f32 %v961, %v1169
    %1171 = vmatmul.f32.gmra.mxu0 %v815
    %v1172 = vpop.f32.mrf.mxu0
    %v1173 = vadd.f32 %v964, %v1172
    %1174 = vmatmul.f32.gmra.mxu0 %v817
    %v1175 = vpop.f32.mrf.mxu0
    %v1176 = vadd.f32 %v967, %v1175
    %1177 = vmatmul.f32.gmra.mxu0 %v819
    %v1178 = vpop.f32.mrf.mxu0
    %v1179 = vadd.f32 %v970, %v1178
    %1180 = vmatmul.f32.gmra.mxu0 %v821
    %v1181 = vpop.f32.mrf.mxu0
    %v1182 = vadd.f32 %v973, %v1181
    %1183 = vmatmul.f32.gmra.mxu0 %v823
    %v1184 = vpop.f32.mrf.mxu0
    %v1185 = vadd.f32 %v976, %v1184
    %1186 = vmatmul.f32.gmra.mxu0 %v825
    %v1187 = vpop.f32.mrf.mxu0
    %v1188 = vadd.f32 %v979, %v1187
    %1189 = vmatmul.f32.gmra.mxu0 %v827
    %v1190 = vpop.f32.mrf.mxu0
    %v1191 = vadd.f32 %v982, %v1190
    %1192 = vmatmul.f32.gmra.mxu0 %v829
    %v1193 = vpop.f32.mrf.mxu0
    %v1194 = vadd.f32 %v985, %v1193
    %1195 = vmatmul.f32.gmra.mxu0 %v831
    %v1196 = vpop.f32.mrf.mxu0
    %v1197 = vadd.f32 %v988, %v1196
    %1198 = vmatmul.f32.gmra.mxu0 %v833
    %v1199 = vpop.f32.mrf.mxu0
    %v1200 = vadd.f32 %v991, %v1199
    %1201 = vmatmul.f32.gmra.mxu0 %v835
    %v1202 = vpop.f32.mrf.mxu0
    %v1203 = vadd.f32 %v994, %v1202
    %1204 = vmatmul.f32.gmra.mxu0 %v837
    %v1205 = vpop.f32.mrf.mxu0
    %v1206 = vadd.f32 %v997, %v1205
    %1207 = vmatmul.f32.gmra.mxu0 %v839
    %v1208 = vpop.f32.mrf.mxu0
    %v1209 = vadd.f32 %v1000, %v1208
    %1210 = vmatmul.f32.gmra.mxu0 %v841
    %v1211 = vpop.f32.mrf.mxu0
    %v1212 = vadd.f32 %v1003, %v1211
    %1213 = vmatmul.f32.gmra.mxu0 %v843
    %v1214 = vpop.f32.mrf.mxu0
    %v1215 = vadd.f32 %v1006, %v1214
    %1216 = vmatmul.f32.gmra.mxu0 %v845
    %v1217 = vpop.f32.mrf.mxu0
    %v1218 = vadd.f32 %v1009, %v1217
    %1219 = vmatmul.f32.gmra.mxu0 %v847
    %v1220 = vpop.f32.mrf.mxu0
    %v1221 = vadd.f32 %v1012, %v1220
    %1222 = vmatmul.f32.gmra.mxu0 %v849
    %v1223 = vpop.f32.mrf.mxu0
    %v1224 = vadd.f32 %v1015, %v1223
    %1225 = vmatmul.f32.gmra.mxu0 %v851
    %v1226 = vpop.f32.mrf.mxu0
    %v1227 = vadd.f32 %v1018, %v1226
    %1228 = vmatmul.f32.gmra.mxu0 %v853
    %v1229 = vpop.f32.mrf.mxu0
    %v1230 = vadd.f32 %v1021, %v1229
    %1231 = vmatmul.f32.gmra.mxu0 %v855
    %v1232 = vpop.f32.mrf.mxu0
    %v1233 = vadd.f32 %v1024, %v1232
    %1234 = vmatmul.f32.gmra.mxu0 %v857
    %v1235 = vpop.f32.mrf.mxu0
    %v1236 = vadd.f32 %v1027, %v1235
    %1237 = vmatmul.f32.gmra.mxu0 %v859
    %v1238 = vpop.f32.mrf.mxu0
    %v1239 = vadd.f32 %v1030, %v1238
    %1240 = vmatmul.f32.gmra.mxu0 %v861
    %v1241 = vpop.f32.mrf.mxu0
    %v1242 = vadd.f32 %v1033, %v1241
    %1243 = vmatmul.f32.gmra.mxu0 %v863
    %v1244 = vpop.f32.mrf.mxu0
    %v1245 = vadd.f32 %v1036, %v1244
    %1246 = vmatmul.f32.gmra.mxu0 %v865
    %v1247 = vpop.f32.mrf.mxu0
    %v1248 = vadd.f32 %v1039, %v1247
    %1249 = vmatmul.f32.gmra.mxu0 %v867
    %v1250 = vpop.f32.mrf.mxu0
    %v1251 = vadd.f32 %v1042, %v1250
    %1252 = vmatmul.f32.gmra.mxu0 %v869
    %v1253 = vpop.f32.mrf.mxu0
    %v1254 = vadd.f32 %v1045, %v1253
    %1255 = vmatmul.f32.gmra.mxu0 %v871
    %v1256 = vpop.f32.mrf.mxu0
    %v1257 = vadd.f32 %v1048, %v1256
    %1258 = vmatmul.f32.gmra.mxu0 %v873
    %v1259 = vpop.f32.mrf.mxu0
    %v1260 = vadd.f32 %v1051, %v1259
    %1261 = vmatmul.f32.gmra.mxu0 %v875
    %v1262 = vpop.f32.mrf.mxu0
    %v1263 = vadd.f32 %v1054, %v1262
    %1264 = vmatmul.f32.gmra.mxu0 %v877
    %v1265 = vpop.f32.mrf.mxu0
    %v1266 = vadd.f32 %v1057, %v1265
    %1267 = vmatmul.f32.gmra.mxu0 %v879
    %v1268 = vpop.f32.mrf.mxu0
    %v1269 = vadd.f32 %v1060, %v1268
    %1270 = vmatmul.f32.gmra.mxu0 %v881
    %v1271 = vpop.f32.mrf.mxu0
    %v1272 = vadd.f32 %v1063, %v1271
    %1273 = vmatmul.f32.gmra.mxu0 %v883
    %v1274 = vpop.f32.mrf.mxu0
    %v1275 = vadd.f32 %v1066, %v1274
    %1276 = vmatmul.f32.gmra.mxu0 %v885
    %v1277 = vpop.f32.mrf.mxu0
    %v1278 = vadd.f32 %v1069, %v1277
    %1279 = vmatmul.f32.gmra.mxu0 %v887
    %v1280 = vpop.f32.mrf.mxu0
    %v1281 = vadd.f32 %v1072, %v1280
    %1282 = vmatmul.f32.gmra.mxu0 %v889
    %v1283 = vpop.f32.mrf.mxu0
    %v1284 = vadd.f32 %v1075, %v1283
    %1285 = vmatmul.f32.gmra.mxu0 %v891
    %v1286 = vpop.f32.mrf.mxu0
    %v1287 = vadd.f32 %v1078, %v1286
    %1288 = vmatmul.f32.gmra.mxu0 %v893
    %v1289 = vpop.f32.mrf.mxu0
    %v1290 = vadd.f32 %v1081, %v1289
    %1291 = vmatmul.f32.gmra.mxu0 %v895
    %v1292 = vpop.f32.mrf.mxu0
    %v1293 = vadd.f32 %v1084, %v1292
    %1294 = vmatmul.f32.gmra.mxu0 %v897
    %v1295 = vpop.f32.mrf.mxu0
    %v1296 = vadd.f32 %v1087, %v1295
    %1297 = vmatmul.f32.gmra.mxu0 %v899
    %v1298 = vpop.f32.mrf.mxu0
    %v1299 = vadd.f32 %v1090, %v1298
    %1300 = vmatmul.f32.gmra.mxu0 %v901
    %v1301 = vpop.f32.mrf.mxu0
    %v1302 = vadd.f32 %v1093, %v1301
    %1303 = vmatmul.f32.gmra.mxu0 %v903
    %v1304 = vpop.f32.mrf.mxu0
    %v1305 = vadd.f32 %v1096, %v1304
    %1306 = vmatmul.f32.gmra.mxu0 %v905
    %v1307 = vpop.f32.mrf.mxu0
    %v1308 = vadd.f32 %v1099, %v1307
    %1309 = vmatmul.f32.gmra.mxu0 %v907
    %v1310 = vpop.f32.mrf.mxu0
    %v1311 = vadd.f32 %v1102, %v1310
    %1312 = vmatmul.f32.gmra.mxu0 %v909
    %v1313 = vpop.f32.mrf.mxu0
    %v1314 = vadd.f32 %v1105, %v1313
    %1315 = vmatmul.f32.gmra.mxu0 %v911
    %v1316 = vpop.f32.mrf.mxu0
    %v1317 = vadd.f32 %v1108, %v1316
    %1318 = vmatmul.f32.gmra.mxu0 %v913
    %v1319 = vpop.f32.mrf.mxu0
    %v1320 = vadd.f32 %v1111, %v1319
    %1321 = vmatmul.f32.gmra.mxu0 %v915
    %v1322 = vpop.f32.mrf.mxu0
    %v1323 = vadd.f32 %v1114, %v1322
    %1324 = vmatmul.f32.gmra.mxu0 %v917
    %v1325 = vpop.f32.mrf.mxu0
    %v1326 = vadd.f32 %v1117, %v1325
    %1327 = vmatmul.f32.gmra.mxu0 %v919
    %v1328 = vpop.f32.mrf.mxu0
    %v1329 = vadd.f32 %v1120, %v1328
    %1330 = vmatmul.f32.gmra.mxu0 %v921
    %v1331 = vpop.f32.mrf.mxu0
    %v1332 = vadd.f32 %v1123, %v1331
    %1333 = vmatmul.f32.gmra.mxu0 %v923
    %v1334 = vpop.f32.mrf.mxu0
    %v1335 = vadd.f32 %v1126, %v1334
    %1336 = vmatmul.f32.gmra.mxu0 %v925
    %v1337 = vpop.f32.mrf.mxu0
    %v1338 = vadd.f32 %v1129, %v1337
    %1339 = vmatmul.f32.gmra.mxu0 %v927
    %v1340 = vpop.f32.mrf.mxu0
    %v1341 = vadd.f32 %v1132, %v1340
    %1342 = vmatmul.f32.gmra.mxu0 %v929
    %v1343 = vpop.f32.mrf.mxu0
    %v1344 = vadd.f32 %v1135, %v1343
    %1345 = vmatmul.f32.gmra.mxu0 %v931
    %v1346 = vpop.f32.mrf.mxu0
    %v1347 = vadd.f32 %v1138, %v1346
    %1348 = vmatmul.f32.gmra.mxu0 %v933
    %v1349 = vpop.f32.mrf.mxu0
    %v1350 = vadd.f32 %v1141, %v1349
    %1351 = vdwg.mxu0
    %v1352 = vtanh.pop %v1161
    %v1353 = vtanh.pop %v1164
    %v1354 = vtanh.pop %v1167
    %v1355 = vtanh.pop %v1170
    %v1356 = vtanh.pop %v1173
    %v1357 = vtanh.pop %v1176
    %v1358 = vtanh.pop %v1179
    %v1359 = vtanh.pop %v1182
    %v1360 = vtanh.pop %v1185
    %v1361 = vtanh.pop %v1188
    %v1362 = vtanh.pop %v1191
    %v1363 = vtanh.pop %v1194
    %v1364 = vtanh.pop %v1197
    %v1365 = vtanh.pop %v1200
    %v1366 = vtanh.pop %v1203
    %v1367 = vtanh.pop %v1206
    %v1368 = vtanh.pop %v1209
    %v1369 = vtanh.pop %v1212
    %v1370 = vtanh.pop %v1215
    %v1371 = vtanh.pop %v1218
    %v1372 = vtanh.pop %v1221
    %v1373 = vtanh.pop %v1224
    %v1374 = vtanh.pop %v1227
    %v1375 = vtanh.pop %v1230
    %v1376 = vtanh.pop %v1233
    %v1377 = vtanh.pop %v1236
    %v1378 = vtanh.pop %v1239
    %v1379 = vtanh.pop %v1242
    %v1380 = vtanh.pop %v1245
    %v1381 = vtanh.pop %v1248
    %v1382 = vtanh.pop %v1251
    %v1383 = vtanh.pop %v1254
    %v1384 = vtanh.pop %v1257
    %v1385 = vtanh.pop %v1260
    %v1386 = vtanh.pop %v1263
    %v1387 = vtanh.pop %v1266
    %v1388 = vtanh.pop %v1269
    %v1389 = vtanh.pop %v1272
    %v1390 = vtanh.pop %v1275
    %v1391 = vtanh.pop %v1278
    %v1392 = vtanh.pop %v1281
    %v1393 = vtanh.pop %v1284
    %v1394 = vtanh.pop %v1287
    %v1395 = vtanh.pop %v1290
    %v1396 = vtanh.pop %v1293
    %v1397 = vtanh.pop %v1296
    %v1398 = vtanh.pop %v1299
    %v1399 = vtanh.pop %v1302
    %v1400 = vtanh.pop %v1305
    %v1401 = vtanh.pop %v1308
    %v1402 = vtanh.pop %v1311
    %v1403 = vtanh.pop %v1314
    %v1404 = vtanh.pop %v1317
    %v1405 = vtanh.pop %v1320
    %v1406 = vtanh.pop %v1323
    %v1407 = vtanh.pop %v1326
    %v1408 = vtanh.pop %v1329
    %v1409 = vtanh.pop %v1332
    %v1410 = vtanh.pop %v1335
    %v1411 = vtanh.pop %v1338
    %v1412 = vtanh.pop %v1341
    %v1413 = vtanh.pop %v1344
    %v1414 = vtanh.pop %v1347
    %v1415 = vtanh.pop %v1350
    %v1416 = vmul.f32 %v1352, %v666
    %v1417 = vmul.f32 %v1353, %v666
    %v1418 = vmul.f32 %v1354, %v666
    %v1419 = vmul.f32 %v1355, %v666
    %v1420 = vmul.f32 %v1356, %v666
    %v1421 = vmul.f32 %v1357, %v666
    %v1422 = vmul.f32 %v1358, %v666
    %v1423 = vmul.f32 %v1359, %v666
    %v1424 = vmul.f32 %v1360, %v666
    %v1425 = vmul.f32 %v1361, %v666
    %v1426 = vmul.f32 %v1362, %v666
    %v1427 = vmul.f32 %v1363, %v666
    %v1428 = vmul.f32 %v1364, %v666
    %v1429 = vmul.f32 %v1365, %v666
    %v1430 = vmul.f32 %v1366, %v666
    %v1431 = vmul.f32 %v1367, %v666
    %v1432 = vmul.f32 %v1368, %v666
    %v1433 = vmul.f32 %v1369, %v666
    %v1434 = vmul.f32 %v1370, %v666
    %v1435 = vmul.f32 %v1371, %v666
    %v1436 = vmul.f32 %v1372, %v666
    %v1437 = vmul.f32 %v1373, %v666
    %v1438 = vmul.f32 %v1374, %v666
    %v1439 = vmul.f32 %v1375, %v666
    %v1440 = vmul.f32 %v1376, %v666
    %v1441 = vmul.f32 %v1377, %v666
    %v1442 = vmul.f32 %v1378, %v666
    %v1443 = vmul.f32 %v1379, %v666
    %v1444 = vmul.f32 %v1380, %v666
    %v1445 = vmul.f32 %v1381, %v666
    %v1446 = vmul.f32 %v1382, %v666
    %v1447 = vmul.f32 %v1383, %v666
    %v1448 = vmul.f32 %v1384, %v666
    %v1449 = vmul.f32 %v1385, %v666
    %v1450 = vmul.f32 %v1386, %v666
    %v1451 = vmul.f32 %v1387, %v666
    %v1452 = vmul.f32 %v1388, %v666
    %v1453 = vmul.f32 %v1389, %v666
    %v1454 = vmul.f32 %v1390, %v666
    %v1455 = vmul.f32 %v1391, %v666
    %v1456 = vmul.f32 %v1392, %v666
    %v1457 = vmul.f32 %v1393, %v666
    %v1458 = vmul.f32 %v1394, %v666
    %v1459 = vmul.f32 %v1395, %v666
    %v1460 = vmul.f32 %v1396, %v666
    %v1461 = vmul.f32 %v1397, %v666
    %v1462 = vmul.f32 %v1398, %v666
    %v1463 = vmul.f32 %v1399, %v666
    %v1464 = vmul.f32 %v1400, %v666
    %v1465 = vmul.f32 %v1401, %v666
    %v1466 = vmul.f32 %v1402, %v666
    %v1467 = vmul.f32 %v1403, %v666
    %v1468 = vmul.f32 %v1404, %v666
    %v1469 = vmul.f32 %v1405, %v666
    %v1470 = vmul.f32 %v1406, %v666
    %v1471 = vmul.f32 %v1407, %v666
    %v1472 = vmul.f32 %v1408, %v666
    %v1473 = vmul.f32 %v1409, %v666
    %v1474 = vmul.f32 %v1410, %v666
    %v1475 = vmul.f32 %v1411, %v666
    %v1476 = vmul.f32 %v1412, %v666
    %v1477 = vmul.f32 %v1413, %v666
    %v1478 = vmul.f32 %v1414, %v666
    %v1479 = vmul.f32 %v1415, %v666
    %v1480 = vadd.f32 %v1416, %v1417
    %v1481 = vadd.f32 %v1480, %v1418
    %v1482 = vadd.f32 %v1481, %v1419
    %v1483 = vadd.f32 %v1482, %v1420
    %v1484 = vadd.f32 %v1483, %v1421
    %v1485 = vadd.f32 %v1484, %v1422
    %v1486 = vadd.f32 %v1485, %v1423
    %v1487 = vadd.f32 %v1486, %v1424
    %v1488 = vadd.f32 %v1487, %v1425
    %v1489 = vadd.f32 %v1488, %v1426
    %v1490 = vadd.f32 %v1489, %v1427
    %v1491 = vadd.f32 %v1490, %v1428
    %v1492 = vadd.f32 %v1491, %v1429
    %v1493 = vadd.f32 %v1492, %v1430
    %v1494 = vadd.f32 %v1493, %v1431
    %v1495 = vadd.f32 %v1494, %v1432
    %v1496 = vadd.f32 %v1495, %v1433
    %v1497 = vadd.f32 %v1496, %v1434
    %v1498 = vadd.f32 %v1497, %v1435
    %v1499 = vadd.f32 %v1498, %v1436
    %v1500 = vadd.f32 %v1499, %v1437
    %v1501 = vadd.f32 %v1500, %v1438
    %v1502 = vadd.f32 %v1501, %v1439
    %v1503 = vadd.f32 %v1502, %v1440
    %v1504 = vadd.f32 %v1503, %v1441
    %v1505 = vadd.f32 %v1504, %v1442
    %v1506 = vadd.f32 %v1505, %v1443
    %v1507 = vadd.f32 %v1506, %v1444
    %v1508 = vadd.f32 %v1507, %v1445
    %v1509 = vadd.f32 %v1508, %v1446
    %v1510 = vadd.f32 %v1509, %v1447
    %v1511 = vadd.f32 %v1510, %v1448
    %v1512 = vadd.f32 %v1511, %v1449
    %v1513 = vadd.f32 %v1512, %v1450
    %v1514 = vadd.f32 %v1513, %v1451
    %v1515 = vadd.f32 %v1514, %v1452
    %v1516 = vadd.f32 %v1515, %v1453
    %v1517 = vadd.f32 %v1516, %v1454
    %v1518 = vadd.f32 %v1517, %v1455
    %v1519 = vadd.f32 %v1518, %v1456
    %v1520 = vadd.f32 %v1519, %v1457
    %v1521 = vadd.f32 %v1520, %v1458
    %v1522 = vadd.f32 %v1521, %v1459
    %v1523 = vadd.f32 %v1522, %v1460
    %v1524 = vadd.f32 %v1523, %v1461
    %v1525 = vadd.f32 %v1524, %v1462
    %v1526 = vadd.f32 %v1525, %v1463
    %v1527 = vadd.f32 %v1526, %v1464
    %v1528 = vadd.f32 %v1527, %v1465
    %v1529 = vadd.f32 %v1528, %v1466
    %v1530 = vadd.f32 %v1529, %v1467
    %v1531 = vadd.f32 %v1530, %v1468
    %v1532 = vadd.f32 %v1531, %v1469
    %v1533 = vadd.f32 %v1532, %v1470
    %v1534 = vadd.f32 %v1533, %v1471
    %v1535 = vadd.f32 %v1534, %v1472
    %v1536 = vadd.f32 %v1535, %v1473
    %v1537 = vadd.f32 %v1536, %v1474
    %v1538 = vadd.f32 %v1537, %v1475
    %v1539 = vadd.f32 %v1538, %v1476
    %v1540 = vadd.f32 %v1539, %v1477
    %v1541 = vadd.f32 %v1540, %v1478
    %v1542 = vadd.f32 %v1541, %v1479
    %1543 = vadd.xlane.f32.xlu0 %v1542
    %v1544 = vpop.xlane.xlu0 %1543
    %v1545 = vrot.slane %v1544, 4
    %v1546 = vadd.f32 %v1544, %v1545
    %v1547 = vrot.slane %v1546, 2
    %v1548 = vadd.f32 %v1546, %v1547
    %v1549 = vrot.slane %v1548, 1
    %v1550 = vadd.f32 %v1548, %v1549
    %s1551 = vtos %v1550
    %v1552 = vstv %s1551
    %v1553 = vmul.f32 %v1552, 0.001953125
    %v1554 = vld [vmem:[%s0 + $0x20] sm:$0xff]
    %v1555 = vld [vmem:[%s0 + $0x28] sm:$0xff]
    %v1556 = vld [vmem:[%s0 + $0x60] sm:$0xff]
    %v1557 = vld [vmem:[%s0 + $0x68] sm:$0xff]
    %v1558 = vld [vmem:[%s0 + $0xa0] sm:$0xff]
    %v1559 = vld [vmem:[%s0 + $0xa8] sm:$0xff]
    %v1560 = vld [vmem:[%s0 + $0xe0] sm:$0xff]
    %v1561 = vld [vmem:[%s0 + $0xe8] sm:$0xff]
    %v1562 = vld [vmem:[%s0 + $0x120] sm:$0xff]
    %v1563 = vld [vmem:[%s0 + $0x128] sm:$0xff]
    %v1564 = vld [vmem:[%s0 + $0x160] sm:$0xff]
    %v1565 = vld [vmem:[%s0 + $0x168] sm:$0xff]
    %v1566 = vld [vmem:[%s0 + $0x1a0] sm:$0xff]
    %v1567 = vld [vmem:[%s0 + $0x1a8] sm:$0xff]
    %v1568 = vld [vmem:[%s0 + $0x1e0] sm:$0xff]
    %v1569 = vld [vmem:[%s0 + $0x1e8] sm:$0xff]
    %v1570 = vld [vmem:[%s0 + $0x220] sm:$0xff]
    %v1571 = vld [vmem:[%s0 + $0x228] sm:$0xff]
    %v1572 = vld [vmem:[%s0 + $0x260] sm:$0xff]
    %v1573 = vld [vmem:[%s0 + $0x268] sm:$0xff]
    %v1574 = vld [vmem:[%s0 + $0x2a0] sm:$0xff]
    %v1575 = vld [vmem:[%s0 + $0x2a8] sm:$0xff]
    %v1576 = vld [vmem:[%s0 + $0x2e0] sm:$0xff]
    %v1577 = vld [vmem:[%s0 + $0x2e8] sm:$0xff]
    %v1578 = vld [vmem:[%s0 + $0x320] sm:$0xff]
    %v1579 = vld [vmem:[%s0 + $0x328] sm:$0xff]
    %v1580 = vld [vmem:[%s0 + $0x360] sm:$0xff]
    %v1581 = vld [vmem:[%s0 + $0x368] sm:$0xff]
    %v1582 = vld [vmem:[%s0 + $0x3a0] sm:$0xff]
    %v1583 = vld [vmem:[%s0 + $0x3a8] sm:$0xff]
    %v1584 = vld [vmem:[%s0 + $0x3e0] sm:$0xff]
    %v1585 = vld [vmem:[%s0 + $0x3e8] sm:$0xff]
    %v1586 = vld [vmem:[%s0 + $0x420] sm:$0xff]
    %v1587 = vld [vmem:[%s0 + $0x428] sm:$0xff]
    %v1588 = vld [vmem:[%s0 + $0x460] sm:$0xff]
    %v1589 = vld [vmem:[%s0 + $0x468] sm:$0xff]
    %v1590 = vld [vmem:[%s0 + $0x4a0] sm:$0xff]
    %v1591 = vld [vmem:[%s0 + $0x4a8] sm:$0xff]
    %v1592 = vld [vmem:[%s0 + $0x4e0] sm:$0xff]
    %v1593 = vld [vmem:[%s0 + $0x4e8] sm:$0xff]
    %v1594 = vld [vmem:[%s0 + $0x520] sm:$0xff]
    %v1595 = vld [vmem:[%s0 + $0x528] sm:$0xff]
    %v1596 = vld [vmem:[%s0 + $0x560] sm:$0xff]
    %v1597 = vld [vmem:[%s0 + $0x568] sm:$0xff]
    %v1598 = vld [vmem:[%s0 + $0x5a0] sm:$0xff]
    %v1599 = vld [vmem:[%s0 + $0x5a8] sm:$0xff]
    %v1600 = vld [vmem:[%s0 + $0x5e0] sm:$0xff]
    %v1601 = vld [vmem:[%s0 + $0x5e8] sm:$0xff]
    %v1602 = vld [vmem:[%s0 + $0x620] sm:$0xff]
    %v1603 = vld [vmem:[%s0 + $0x628] sm:$0xff]
    %v1604 = vld [vmem:[%s0 + $0x660] sm:$0xff]
    %v1605 = vld [vmem:[%s0 + $0x668] sm:$0xff]
    %v1606 = vld [vmem:[%s0 + $0x6a0] sm:$0xff]
    %v1607 = vld [vmem:[%s0 + $0x6a8] sm:$0xff]
    %v1608 = vld [vmem:[%s0 + $0x6e0] sm:$0xff]
    %v1609 = vld [vmem:[%s0 + $0x6e8] sm:$0xff]
    %v1610 = vld [vmem:[%s0 + $0x720] sm:$0xff]
    %v1611 = vld [vmem:[%s0 + $0x728] sm:$0xff]
    %v1612 = vld [vmem:[%s0 + $0x760] sm:$0xff]
    %v1613 = vld [vmem:[%s0 + $0x768] sm:$0xff]
    %v1614 = vld [vmem:[%s0 + $0x7a0] sm:$0xff]
    %v1615 = vld [vmem:[%s0 + $0x7a8] sm:$0xff]
    %v1616 = vld [vmem:[%s0 + $0x7e0] sm:$0xff]
    %v1617 = vld [vmem:[%s0 + $0x7e8] sm:$0xff]
    %v1618 = vld [vmem:[%s0 + $0x820] sm:$0xff]
    %v1619 = vld [vmem:[%s0 + $0x828] sm:$0xff]
    %v1620 = vld [vmem:[%s0 + $0x860] sm:$0xff]
    %v1621 = vld [vmem:[%s0 + $0x868] sm:$0xff]
    %v1622 = vld [vmem:[%s0 + $0x8a0] sm:$0xff]
    %v1623 = vld [vmem:[%s0 + $0x8a8] sm:$0xff]
    %v1624 = vld [vmem:[%s0 + $0x8e0] sm:$0xff]
    %v1625 = vld [vmem:[%s0 + $0x8e8] sm:$0xff]
    %v1626 = vld [vmem:[%s0 + $0x920] sm:$0xff]
    %v1627 = vld [vmem:[%s0 + $0x928] sm:$0xff]
    %v1628 = vld [vmem:[%s0 + $0x960] sm:$0xff]
    %v1629 = vld [vmem:[%s0 + $0x968] sm:$0xff]
    %v1630 = vld [vmem:[%s0 + $0x9a0] sm:$0xff]
    %v1631 = vld [vmem:[%s0 + $0x9a8] sm:$0xff]
    %v1632 = vld [vmem:[%s0 + $0x9e0] sm:$0xff]
    %v1633 = vld [vmem:[%s0 + $0x9e8] sm:$0xff]
    %v1634 = vld [vmem:[%s0 + $0xa20] sm:$0xff]
    %v1635 = vld [vmem:[%s0 + $0xa28] sm:$0xff]
    %v1636 = vld [vmem:[%s0 + $0xa60] sm:$0xff]
    %v1637 = vld [vmem:[%s0 + $0xa68] sm:$0xff]
    %v1638 = vld [vmem:[%s0 + $0xaa0] sm:$0xff]
    %v1639 = vld [vmem:[%s0 + $0xaa8] sm:$0xff]
    %v1640 = vld [vmem:[%s0 + $0xae0] sm:$0xff]
    %v1641 = vld [vmem:[%s0 + $0xae8] sm:$0xff]
    %v1642 = vld [vmem:[%s0 + $0xb20] sm:$0xff]
    %v1643 = vld [vmem:[%s0 + $0xb28] sm:$0xff]
    %v1644 = vld [vmem:[%s0 + $0xb60] sm:$0xff]
    %v1645 = vld [vmem:[%s0 + $0xb68] sm:$0xff]
    %v1646 = vld [vmem:[%s0 + $0xba0] sm:$0xff]
    %v1647 = vld [vmem:[%s0 + $0xba8] sm:$0xff]
    %v1648 = vld [vmem:[%s0 + $0xbe0] sm:$0xff]
    %v1649 = vld [vmem:[%s0 + $0xbe8] sm:$0xff]
    %v1650 = vld [vmem:[%s0 + $0xc20] sm:$0xff]
    %v1651 = vld [vmem:[%s0 + $0xc28] sm:$0xff]
    %v1652 = vld [vmem:[%s0 + $0xc60] sm:$0xff]
    %v1653 = vld [vmem:[%s0 + $0xc68] sm:$0xff]
    %v1654 = vld [vmem:[%s0 + $0xca0] sm:$0xff]
    %v1655 = vld [vmem:[%s0 + $0xca8] sm:$0xff]
    %v1656 = vld [vmem:[%s0 + $0xce0] sm:$0xff]
    %v1657 = vld [vmem:[%s0 + $0xce8] sm:$0xff]
    %v1658 = vld [vmem:[%s0 + $0xd20] sm:$0xff]
    %v1659 = vld [vmem:[%s0 + $0xd28] sm:$0xff]
    %v1660 = vld [vmem:[%s0 + $0xd60] sm:$0xff]
    %v1661 = vld [vmem:[%s0 + $0xd68] sm:$0xff]
    %v1662 = vld [vmem:[%s0 + $0xda0] sm:$0xff]
    %v1663 = vld [vmem:[%s0 + $0xda8] sm:$0xff]
    %v1664 = vld [vmem:[%s0 + $0xde0] sm:$0xff]
    %v1665 = vld [vmem:[%s0 + $0xde8] sm:$0xff]
    %v1666 = vld [vmem:[%s0 + $0xe20] sm:$0xff]
    %v1667 = vld [vmem:[%s0 + $0xe28] sm:$0xff]
    %v1668 = vld [vmem:[%s0 + $0xe60] sm:$0xff]
    %v1669 = vld [vmem:[%s0 + $0xe68] sm:$0xff]
    %v1670 = vld [vmem:[%s0 + $0xea0] sm:$0xff]
    %v1671 = vld [vmem:[%s0 + $0xea8] sm:$0xff]
    %v1672 = vld [vmem:[%s0 + $0xee0] sm:$0xff]
    %v1673 = vld [vmem:[%s0 + $0xee8] sm:$0xff]
    %v1674 = vld [vmem:[%s0 + $0xf20] sm:$0xff]
    %v1675 = vld [vmem:[%s0 + $0xf28] sm:$0xff]
    %v1676 = vld [vmem:[%s0 + $0xf60] sm:$0xff]
    %v1677 = vld [vmem:[%s0 + $0xf68] sm:$0xff]
    %v1678 = vld [vmem:[%s0 + $0xfa0] sm:$0xff]
    %v1679 = vld [vmem:[%s0 + $0xfa8] sm:$0xff]
    %v1680 = vld [vmem:[%s0 + $0xfe0] sm:$0xff]
    %v1681 = vld [vmem:[%s0 + $0xfe8] sm:$0xff]
    %1682 = vmatpush.msra.mxu0 %v161
    %1683 = vmatpush.msra.mxu0 %v160
    %1684 = vmatpush.msra.mxu0 %v159
    %1685 = vmatpush.msra.mxu0 %v158
    %1686 = vmatpush.msra.mxu0 %v157
    %1687 = vmatpush.msra.mxu0 %v156
    %1688 = vmatpush.msra.mxu0 %v155
    %1689 = vmatpush.msra.mxu0 %v154
    %1690 = vmatpush.msra.mxu0 %v153
    %1691 = vmatpush.msra.mxu0 %v152
    %1692 = vmatpush.msra.mxu0 %v151
    %1693 = vmatpush.msra.mxu0 %v150
    %1694 = vmatpush.msra.mxu0 %v149
    %1695 = vmatpush.msra.mxu0 %v148
    %1696 = vmatpush.msra.mxu0 %v147
    %1697 = vmatpush.msra.mxu0 %v146
    %1698 = vmatmul.f32.gmra.mxu0 %v1554
    %v1699 = vpop.f32.mrf.mxu0
    %v1700 = vadd.f32 %v180, %v1699
    %1701 = vmatmul.f32.gmra.mxu0 %v1556
    %v1702 = vpop.f32.mrf.mxu0
    %v1703 = vadd.f32 %v180, %v1702
    %1704 = vmatmul.f32.gmra.mxu0 %v1558
    %v1705 = vpop.f32.mrf.mxu0
    %v1706 = vadd.f32 %v180, %v1705
    %1707 = vmatmul.f32.gmra.mxu0 %v1560
    %v1708 = vpop.f32.mrf.mxu0
    %v1709 = vadd.f32 %v180, %v1708
    %1710 = vmatmul.f32.gmra.mxu0 %v1562
    %v1711 = vpop.f32.mrf.mxu0
    %v1712 = vadd.f32 %v180, %v1711
    %1713 = vmatmul.f32.gmra.mxu0 %v1564
    %v1714 = vpop.f32.mrf.mxu0
    %v1715 = vadd.f32 %v180, %v1714
    %1716 = vmatmul.f32.gmra.mxu0 %v1566
    %v1717 = vpop.f32.mrf.mxu0
    %v1718 = vadd.f32 %v180, %v1717
    %1719 = vmatmul.f32.gmra.mxu0 %v1568
    %v1720 = vpop.f32.mrf.mxu0
    %v1721 = vadd.f32 %v180, %v1720
    %1722 = vmatmul.f32.gmra.mxu0 %v1570
    %v1723 = vpop.f32.mrf.mxu0
    %v1724 = vadd.f32 %v180, %v1723
    %1725 = vmatmul.f32.gmra.mxu0 %v1572
    %v1726 = vpop.f32.mrf.mxu0
    %v1727 = vadd.f32 %v180, %v1726
    %1728 = vmatmul.f32.gmra.mxu0 %v1574
    %v1729 = vpop.f32.mrf.mxu0
    %v1730 = vadd.f32 %v180, %v1729
    %1731 = vmatmul.f32.gmra.mxu0 %v1576
    %v1732 = vpop.f32.mrf.mxu0
    %v1733 = vadd.f32 %v180, %v1732
    %1734 = vmatmul.f32.gmra.mxu0 %v1578
    %v1735 = vpop.f32.mrf.mxu0
    %v1736 = vadd.f32 %v180, %v1735
    %1737 = vmatmul.f32.gmra.mxu0 %v1580
    %v1738 = vpop.f32.mrf.mxu0
    %v1739 = vadd.f32 %v180, %v1738
    %1740 = vmatmul.f32.gmra.mxu0 %v1582
    %v1741 = vpop.f32.mrf.mxu0
    %v1742 = vadd.f32 %v180, %v1741
    %1743 = vmatmul.f32.gmra.mxu0 %v1584
    %v1744 = vpop.f32.mrf.mxu0
    %v1745 = vadd.f32 %v180, %v1744
    %1746 = vmatmul.f32.gmra.mxu0 %v1586
    %v1747 = vpop.f32.mrf.mxu0
    %v1748 = vadd.f32 %v180, %v1747
    %1749 = vmatmul.f32.gmra.mxu0 %v1588
    %v1750 = vpop.f32.mrf.mxu0
    %v1751 = vadd.f32 %v180, %v1750
    %1752 = vmatmul.f32.gmra.mxu0 %v1590
    %v1753 = vpop.f32.mrf.mxu0
    %v1754 = vadd.f32 %v180, %v1753
    %1755 = vmatmul.f32.gmra.mxu0 %v1592
    %v1756 = vpop.f32.mrf.mxu0
    %v1757 = vadd.f32 %v180, %v1756
    %1758 = vmatmul.f32.gmra.mxu0 %v1594
    %v1759 = vpop.f32.mrf.mxu0
    %v1760 = vadd.f32 %v180, %v1759
    %1761 = vmatmul.f32.gmra.mxu0 %v1596
    %v1762 = vpop.f32.mrf.mxu0
    %v1763 = vadd.f32 %v180, %v1762
    %1764 = vmatmul.f32.gmra.mxu0 %v1598
    %v1765 = vpop.f32.mrf.mxu0
    %v1766 = vadd.f32 %v180, %v1765
    %1767 = vmatmul.f32.gmra.mxu0 %v1600
    %v1768 = vpop.f32.mrf.mxu0
    %v1769 = vadd.f32 %v180, %v1768
    %1770 = vmatmul.f32.gmra.mxu0 %v1602
    %v1771 = vpop.f32.mrf.mxu0
    %v1772 = vadd.f32 %v180, %v1771
    %1773 = vmatmul.f32.gmra.mxu0 %v1604
    %v1774 = vpop.f32.mrf.mxu0
    %v1775 = vadd.f32 %v180, %v1774
    %1776 = vmatmul.f32.gmra.mxu0 %v1606
    %v1777 = vpop.f32.mrf.mxu0
    %v1778 = vadd.f32 %v180, %v1777
    %1779 = vmatmul.f32.gmra.mxu0 %v1608
    %v1780 = vpop.f32.mrf.mxu0
    %v1781 = vadd.f32 %v180, %v1780
    %1782 = vmatmul.f32.gmra.mxu0 %v1610
    %v1783 = vpop.f32.mrf.mxu0
    %v1784 = vadd.f32 %v180, %v1783
    %1785 = vmatmul.f32.gmra.mxu0 %v1612
    %v1786 = vpop.f32.mrf.mxu0
    %v1787 = vadd.f32 %v180, %v1786
    %1788 = vmatmul.f32.gmra.mxu0 %v1614
    %v1789 = vpop.f32.mrf.mxu0
    %v1790 = vadd.f32 %v180, %v1789
    %1791 = vmatmul.f32.gmra.mxu0 %v1616
    %v1792 = vpop.f32.mrf.mxu0
    %v1793 = vadd.f32 %v180, %v1792
    %1794 = vmatmul.f32.gmra.mxu0 %v1618
    %v1795 = vpop.f32.mrf.mxu0
    %v1796 = vadd.f32 %v180, %v1795
    %1797 = vmatmul.f32.gmra.mxu0 %v1620
    %v1798 = vpop.f32.mrf.mxu0
    %v1799 = vadd.f32 %v180, %v1798
    %1800 = vmatmul.f32.gmra.mxu0 %v1622
    %v1801 = vpop.f32.mrf.mxu0
    %v1802 = vadd.f32 %v180, %v1801
    %1803 = vmatmul.f32.gmra.mxu0 %v1624
    %v1804 = vpop.f32.mrf.mxu0
    %v1805 = vadd.f32 %v180, %v1804
    %1806 = vmatmul.f32.gmra.mxu0 %v1626
    %v1807 = vpop.f32.mrf.mxu0
    %v1808 = vadd.f32 %v180, %v1807
    %1809 = vmatmul.f32.gmra.mxu0 %v1628
    %v1810 = vpop.f32.mrf.mxu0
    %v1811 = vadd.f32 %v180, %v1810
    %1812 = vmatmul.f32.gmra.mxu0 %v1630
    %v1813 = vpop.f32.mrf.mxu0
    %v1814 = vadd.f32 %v180, %v1813
    %1815 = vmatmul.f32.gmra.mxu0 %v1632
    %v1816 = vpop.f32.mrf.mxu0
    %v1817 = vadd.f32 %v180, %v1816
    %1818 = vmatmul.f32.gmra.mxu0 %v1634
    %v1819 = vpop.f32.mrf.mxu0
    %v1820 = vadd.f32 %v180, %v1819
    %1821 = vmatmul.f32.gmra.mxu0 %v1636
    %v1822 = vpop.f32.mrf.mxu0
    %v1823 = vadd.f32 %v180, %v1822
    %1824 = vmatmul.f32.gmra.mxu0 %v1638
    %v1825 = vpop.f32.mrf.mxu0
    %v1826 = vadd.f32 %v180, %v1825
    %1827 = vmatmul.f32.gmra.mxu0 %v1640
    %v1828 = vpop.f32.mrf.mxu0
    %v1829 = vadd.f32 %v180, %v1828
    %1830 = vmatmul.f32.gmra.mxu0 %v1642
    %v1831 = vpop.f32.mrf.mxu0
    %v1832 = vadd.f32 %v180, %v1831
    %1833 = vmatmul.f32.gmra.mxu0 %v1644
    %v1834 = vpop.f32.mrf.mxu0
    %v1835 = vadd.f32 %v180, %v1834
    %1836 = vmatmul.f32.gmra.mxu0 %v1646
    %v1837 = vpop.f32.mrf.mxu0
    %v1838 = vadd.f32 %v180, %v1837
    %1839 = vmatmul.f32.gmra.mxu0 %v1648
    %v1840 = vpop.f32.mrf.mxu0
    %v1841 = vadd.f32 %v180, %v1840
    %1842 = vmatmul.f32.gmra.mxu0 %v1650
    %v1843 = vpop.f32.mrf.mxu0
    %v1844 = vadd.f32 %v180, %v1843
    %1845 = vmatmul.f32.gmra.mxu0 %v1652
    %v1846 = vpop.f32.mrf.mxu0
    %v1847 = vadd.f32 %v180, %v1846
    %1848 = vmatmul.f32.gmra.mxu0 %v1654
    %v1849 = vpop.f32.mrf.mxu0
    %v1850 = vadd.f32 %v180, %v1849
    %1851 = vmatmul.f32.gmra.mxu0 %v1656
    %v1852 = vpop.f32.mrf.mxu0
    %v1853 = vadd.f32 %v180, %v1852
    %1854 = vmatmul.f32.gmra.mxu0 %v1658
    %v1855 = vpop.f32.mrf.mxu0
    %v1856 = vadd.f32 %v180, %v1855
    %1857 = vmatmul.f32.gmra.mxu0 %v1660
    %v1858 = vpop.f32.mrf.mxu0
    %v1859 = vadd.f32 %v180, %v1858
    %1860 = vmatmul.f32.gmra.mxu0 %v1662
    %v1861 = vpop.f32.mrf.mxu0
    %v1862 = vadd.f32 %v180, %v1861
    %1863 = vmatmul.f32.gmra.mxu0 %v1664
    %v1864 = vpop.f32.mrf.mxu0
    %v1865 = vadd.f32 %v180, %v1864
    %1866 = vmatmul.f32.gmra.mxu0 %v1666
    %v1867 = vpop.f32.mrf.mxu0
    %v1868 = vadd.f32 %v180, %v1867
    %1869 = vmatmul.f32.gmra.mxu0 %v1668
    %v1870 = vpop.f32.mrf.mxu0
    %v1871 = vadd.f32 %v180, %v1870
    %1872 = vmatmul.f32.gmra.mxu0 %v1670
    %v1873 = vpop.f32.mrf.mxu0
    %v1874 = vadd.f32 %v180, %v1873
    %1875 = vmatmul.f32.gmra.mxu0 %v1672
    %v1876 = vpop.f32.mrf.mxu0
    %v1877 = vadd.f32 %v180, %v1876
    %1878 = vmatmul.f32.gmra.mxu0 %v1674
    %v1879 = vpop.f32.mrf.mxu0
    %v1880 = vadd.f32 %v180, %v1879
    %1881 = vmatmul.f32.gmra.mxu0 %v1676
    %v1882 = vpop.f32.mrf.mxu0
    %v1883 = vadd.f32 %v180, %v1882
    %1884 = vmatmul.f32.gmra.mxu0 %v1678
    %v1885 = vpop.f32.mrf.mxu0
    %v1886 = vadd.f32 %v180, %v1885
    %1887 = vmatmul.f32.gmra.mxu0 %v1680
    %v1888 = vpop.f32.mrf.mxu0
    %v1889 = vadd.f32 %v180, %v1888
    %1890 = vdwg.mxu0
    %1891 = vmatpush.msra.mxu0 %v177
    %1892 = vmatpush.msra.mxu0 %v176
    %1893 = vmatpush.msra.mxu0 %v175
    %1894 = vmatpush.msra.mxu0 %v174
    %1895 = vmatpush.msra.mxu0 %v173
    %1896 = vmatpush.msra.mxu0 %v172
    %1897 = vmatpush.msra.mxu0 %v171
    %1898 = vmatpush.msra.mxu0 %v170
    %1899 = vmatpush.msra.mxu0 %v169
    %1900 = vmatpush.msra.mxu0 %v168
    %1901 = vmatpush.msra.mxu0 %v167
    %1902 = vmatpush.msra.mxu0 %v166
    %1903 = vmatpush.msra.mxu0 %v165
    %1904 = vmatpush.msra.mxu0 %v164
    %1905 = vmatpush.msra.mxu0 %v163
    %1906 = vmatpush.msra.mxu0 %v162
    %1907 = vmatmul.f32.gmra.mxu0 %v1555
    %v1908 = vpop.f32.mrf.mxu0
    %v1909 = vadd.f32 %v1700, %v1908
    %1910 = vmatmul.f32.gmra.mxu0 %v1557
    %v1911 = vpop.f32.mrf.mxu0
    %v1912 = vadd.f32 %v1703, %v1911
    %1913 = vmatmul.f32.gmra.mxu0 %v1559
    %v1914 = vpop.f32.mrf.mxu0
    %v1915 = vadd.f32 %v1706, %v1914
    %1916 = vmatmul.f32.gmra.mxu0 %v1561
    %v1917 = vpop.f32.mrf.mxu0
    %v1918 = vadd.f32 %v1709, %v1917
    %1919 = vmatmul.f32.gmra.mxu0 %v1563
    %v1920 = vpop.f32.mrf.mxu0
    %v1921 = vadd.f32 %v1712, %v1920
    %1922 = vmatmul.f32.gmra.mxu0 %v1565
    %v1923 = vpop.f32.mrf.mxu0
    %v1924 = vadd.f32 %v1715, %v1923
    %1925 = vmatmul.f32.gmra.mxu0 %v1567
    %v1926 = vpop.f32.mrf.mxu0
    %v1927 = vadd.f32 %v1718, %v1926
    %1928 = vmatmul.f32.gmra.mxu0 %v1569
    %v1929 = vpop.f32.mrf.mxu0
    %v1930 = vadd.f32 %v1721, %v1929
    %1931 = vmatmul.f32.gmra.mxu0 %v1571
    %v1932 = vpop.f32.mrf.mxu0
    %v1933 = vadd.f32 %v1724, %v1932
    %1934 = vmatmul.f32.gmra.mxu0 %v1573
    %v1935 = vpop.f32.mrf.mxu0
    %v1936 = vadd.f32 %v1727, %v1935
    %1937 = vmatmul.f32.gmra.mxu0 %v1575
    %v1938 = vpop.f32.mrf.mxu0
    %v1939 = vadd.f32 %v1730, %v1938
    %1940 = vmatmul.f32.gmra.mxu0 %v1577
    %v1941 = vpop.f32.mrf.mxu0
    %v1942 = vadd.f32 %v1733, %v1941
    %1943 = vmatmul.f32.gmra.mxu0 %v1579
    %v1944 = vpop.f32.mrf.mxu0
    %v1945 = vadd.f32 %v1736, %v1944
    %1946 = vmatmul.f32.gmra.mxu0 %v1581
    %v1947 = vpop.f32.mrf.mxu0
    %v1948 = vadd.f32 %v1739, %v1947
    %1949 = vmatmul.f32.gmra.mxu0 %v1583
    %v1950 = vpop.f32.mrf.mxu0
    %v1951 = vadd.f32 %v1742, %v1950
    %1952 = vmatmul.f32.gmra.mxu0 %v1585
    %v1953 = vpop.f32.mrf.mxu0
    %v1954 = vadd.f32 %v1745, %v1953
    %1955 = vmatmul.f32.gmra.mxu0 %v1587
    %v1956 = vpop.f32.mrf.mxu0
    %v1957 = vadd.f32 %v1748, %v1956
    %1958 = vmatmul.f32.gmra.mxu0 %v1589
    %v1959 = vpop.f32.mrf.mxu0
    %v1960 = vadd.f32 %v1751, %v1959
    %1961 = vmatmul.f32.gmra.mxu0 %v1591
    %v1962 = vpop.f32.mrf.mxu0
    %v1963 = vadd.f32 %v1754, %v1962
    %1964 = vmatmul.f32.gmra.mxu0 %v1593
    %v1965 = vpop.f32.mrf.mxu0
    %v1966 = vadd.f32 %v1757, %v1965
    %1967 = vmatmul.f32.gmra.mxu0 %v1595
    %v1968 = vpop.f32.mrf.mxu0
    %v1969 = vadd.f32 %v1760, %v1968
    %1970 = vmatmul.f32.gmra.mxu0 %v1597
    %v1971 = vpop.f32.mrf.mxu0
    %v1972 = vadd.f32 %v1763, %v1971
    %1973 = vmatmul.f32.gmra.mxu0 %v1599
    %v1974 = vpop.f32.mrf.mxu0
    %v1975 = vadd.f32 %v1766, %v1974
    %1976 = vmatmul.f32.gmra.mxu0 %v1601
    %v1977 = vpop.f32.mrf.mxu0
    %v1978 = vadd.f32 %v1769, %v1977
    %1979 = vmatmul.f32.gmra.mxu0 %v1603
    %v1980 = vpop.f32.mrf.mxu0
    %v1981 = vadd.f32 %v1772, %v1980
    %1982 = vmatmul.f32.gmra.mxu0 %v1605
    %v1983 = vpop.f32.mrf.mxu0
    %v1984 = vadd.f32 %v1775, %v1983
    %1985 = vmatmul.f32.gmra.mxu0 %v1607
    %v1986 = vpop.f32.mrf.mxu0
    %v1987 = vadd.f32 %v1778, %v1986
    %1988 = vmatmul.f32.gmra.mxu0 %v1609
    %v1989 = vpop.f32.mrf.mxu0
    %v1990 = vadd.f32 %v1781, %v1989
    %1991 = vmatmul.f32.gmra.mxu0 %v1611
    %v1992 = vpop.f32.mrf.mxu0
    %v1993 = vadd.f32 %v1784, %v1992
    %1994 = vmatmul.f32.gmra.mxu0 %v1613
    %v1995 = vpop.f32.mrf.mxu0
    %v1996 = vadd.f32 %v1787, %v1995
    %1997 = vmatmul.f32.gmra.mxu0 %v1615
    %v1998 = vpop.f32.mrf.mxu0
    %v1999 = vadd.f32 %v1790, %v1998
    %2000 = vmatmul.f32.gmra.mxu0 %v1617
    %v2001 = vpop.f32.mrf.mxu0
    %v2002 = vadd.f32 %v1793, %v2001
    %2003 = vmatmul.f32.gmra.mxu0 %v1619
    %v2004 = vpop.f32.mrf.mxu0
    %v2005 = vadd.f32 %v1796, %v2004
    %2006 = vmatmul.f32.gmra.mxu0 %v1621
    %v2007 = vpop.f32.mrf.mxu0
    %v2008 = vadd.f32 %v1799, %v2007
    %2009 = vmatmul.f32.gmra.mxu0 %v1623
    %v2010 = vpop.f32.mrf.mxu0
    %v2011 = vadd.f32 %v1802, %v2010
    %2012 = vmatmul.f32.gmra.mxu0 %v1625
    %v2013 = vpop.f32.mrf.mxu0
    %v2014 = vadd.f32 %v1805, %v2013
    %2015 = vmatmul.f32.gmra.mxu0 %v1627
    %v2016 = vpop.f32.mrf.mxu0
    %v2017 = vadd.f32 %v1808, %v2016
    %2018 = vmatmul.f32.gmra.mxu0 %v1629
    %v2019 = vpop.f32.mrf.mxu0
    %v2020 = vadd.f32 %v1811, %v2019
    %2021 = vmatmul.f32.gmra.mxu0 %v1631
    %v2022 = vpop.f32.mrf.mxu0
    %v2023 = vadd.f32 %v1814, %v2022
    %2024 = vmatmul.f32.gmra.mxu0 %v1633
    %v2025 = vpop.f32.mrf.mxu0
    %v2026 = vadd.f32 %v1817, %v2025
    %2027 = vmatmul.f32.gmra.mxu0 %v1635
    %v2028 = vpop.f32.mrf.mxu0
    %v2029 = vadd.f32 %v1820, %v2028
    %2030 = vmatmul.f32.gmra.mxu0 %v1637
    %v2031 = vpop.f32.mrf.mxu0
    %v2032 = vadd.f32 %v1823, %v2031
    %2033 = vmatmul.f32.gmra.mxu0 %v1639
    %v2034 = vpop.f32.mrf.mxu0
    %v2035 = vadd.f32 %v1826, %v2034
    %2036 = vmatmul.f32.gmra.mxu0 %v1641
    %v2037 = vpop.f32.mrf.mxu0
    %v2038 = vadd.f32 %v1829, %v2037
    %2039 = vmatmul.f32.gmra.mxu0 %v1643
    %v2040 = vpop.f32.mrf.mxu0
    %v2041 = vadd.f32 %v1832, %v2040
    %2042 = vmatmul.f32.gmra.mxu0 %v1645
    %v2043 = vpop.f32.mrf.mxu0
    %v2044 = vadd.f32 %v1835, %v2043
    %2045 = vmatmul.f32.gmra.mxu0 %v1647
    %v2046 = vpop.f32.mrf.mxu0
    %v2047 = vadd.f32 %v1838, %v2046
    %2048 = vmatmul.f32.gmra.mxu0 %v1649
    %v2049 = vpop.f32.mrf.mxu0
    %v2050 = vadd.f32 %v1841, %v2049
    %2051 = vmatmul.f32.gmra.mxu0 %v1651
    %v2052 = vpop.f32.mrf.mxu0
    %v2053 = vadd.f32 %v1844, %v2052
    %2054 = vmatmul.f32.gmra.mxu0 %v1653
    %v2055 = vpop.f32.mrf.mxu0
    %v2056 = vadd.f32 %v1847, %v2055
    %2057 = vmatmul.f32.gmra.mxu0 %v1655
    %v2058 = vpop.f32.mrf.mxu0
    %v2059 = vadd.f32 %v1850, %v2058
    %2060 = vmatmul.f32.gmra.mxu0 %v1657
    %v2061 = vpop.f32.mrf.mxu0
    %v2062 = vadd.f32 %v1853, %v2061
    %2063 = vmatmul.f32.gmra.mxu0 %v1659
    %v2064 = vpop.f32.mrf.mxu0
    %v2065 = vadd.f32 %v1856, %v2064
    %2066 = vmatmul.f32.gmra.mxu0 %v1661
    %v2067 = vpop.f32.mrf.mxu0
    %v2068 = vadd.f32 %v1859, %v2067
    %2069 = vmatmul.f32.gmra.mxu0 %v1663
    %v2070 = vpop.f32.mrf.mxu0
    %v2071 = vadd.f32 %v1862, %v2070
    %2072 = vmatmul.f32.gmra.mxu0 %v1665
    %v2073 = vpop.f32.mrf.mxu0
    %v2074 = vadd.f32 %v1865, %v2073
    %2075 = vmatmul.f32.gmra.mxu0 %v1667
    %v2076 = vpop.f32.mrf.mxu0
    %v2077 = vadd.f32 %v1868, %v2076
    %2078 = vmatmul.f32.gmra.mxu0 %v1669
    %v2079 = vpop.f32.mrf.mxu0
    %v2080 = vadd.f32 %v1871, %v2079
    %2081 = vmatmul.f32.gmra.mxu0 %v1671
    %v2082 = vpop.f32.mrf.mxu0
    %v2083 = vadd.f32 %v1874, %v2082
    %2084 = vmatmul.f32.gmra.mxu0 %v1673
    %v2085 = vpop.f32.mrf.mxu0
    %v2086 = vadd.f32 %v1877, %v2085
    %2087 = vmatmul.f32.gmra.mxu0 %v1675
    %v2088 = vpop.f32.mrf.mxu0
    %v2089 = vadd.f32 %v1880, %v2088
    %2090 = vmatmul.f32.gmra.mxu0 %v1677
    %v2091 = vpop.f32.mrf.mxu0
    %v2092 = vadd.f32 %v1883, %v2091
    %2093 = vmatmul.f32.gmra.mxu0 %v1679
    %v2094 = vpop.f32.mrf.mxu0
    %v2095 = vadd.f32 %v1886, %v2094
    %2096 = vmatmul.f32.gmra.mxu0 %v1681
    %v2097 = vpop.f32.mrf.mxu0
    %v2098 = vadd.f32 %v1889, %v2097
    %2099 = vdwg.mxu0
    %v2100 = vtanh.pop %v1909
    %v2101 = vtanh.pop %v1912
    %v2102 = vtanh.pop %v1915
    %v2103 = vtanh.pop %v1918
    %v2104 = vtanh.pop %v1921
    %v2105 = vtanh.pop %v1924
    %v2106 = vtanh.pop %v1927
    %v2107 = vtanh.pop %v1930
    %v2108 = vtanh.pop %v1933
    %v2109 = vtanh.pop %v1936
    %v2110 = vtanh.pop %v1939
    %v2111 = vtanh.pop %v1942
    %v2112 = vtanh.pop %v1945
    %v2113 = vtanh.pop %v1948
    %v2114 = vtanh.pop %v1951
    %v2115 = vtanh.pop %v1954
    %v2116 = vtanh.pop %v1957
    %v2117 = vtanh.pop %v1960
    %v2118 = vtanh.pop %v1963
    %v2119 = vtanh.pop %v1966
    %v2120 = vtanh.pop %v1969
    %v2121 = vtanh.pop %v1972
    %v2122 = vtanh.pop %v1975
    %v2123 = vtanh.pop %v1978
    %v2124 = vtanh.pop %v1981
    %v2125 = vtanh.pop %v1984
    %v2126 = vtanh.pop %v1987
    %v2127 = vtanh.pop %v1990
    %v2128 = vtanh.pop %v1993
    %v2129 = vtanh.pop %v1996
    %v2130 = vtanh.pop %v1999
    %v2131 = vtanh.pop %v2002
    %v2132 = vtanh.pop %v2005
    %v2133 = vtanh.pop %v2008
    %v2134 = vtanh.pop %v2011
    %v2135 = vtanh.pop %v2014
    %v2136 = vtanh.pop %v2017
    %v2137 = vtanh.pop %v2020
    %v2138 = vtanh.pop %v2023
    %v2139 = vtanh.pop %v2026
    %v2140 = vtanh.pop %v2029
    %v2141 = vtanh.pop %v2032
    %v2142 = vtanh.pop %v2035
    %v2143 = vtanh.pop %v2038
    %v2144 = vtanh.pop %v2041
    %v2145 = vtanh.pop %v2044
    %v2146 = vtanh.pop %v2047
    %v2147 = vtanh.pop %v2050
    %v2148 = vtanh.pop %v2053
    %v2149 = vtanh.pop %v2056
    %v2150 = vtanh.pop %v2059
    %v2151 = vtanh.pop %v2062
    %v2152 = vtanh.pop %v2065
    %v2153 = vtanh.pop %v2068
    %v2154 = vtanh.pop %v2071
    %v2155 = vtanh.pop %v2074
    %v2156 = vtanh.pop %v2077
    %v2157 = vtanh.pop %v2080
    %v2158 = vtanh.pop %v2083
    %v2159 = vtanh.pop %v2086
    %v2160 = vtanh.pop %v2089
    %v2161 = vtanh.pop %v2092
    %v2162 = vtanh.pop %v2095
    %v2163 = vtanh.pop %v2098
    %v2164 = vmul.f32 %v2100, %v666
    %v2165 = vmul.f32 %v2101, %v666
    %v2166 = vmul.f32 %v2102, %v666
    %v2167 = vmul.f32 %v2103, %v666
    %v2168 = vmul.f32 %v2104, %v666
    %v2169 = vmul.f32 %v2105, %v666
    %v2170 = vmul.f32 %v2106, %v666
    %v2171 = vmul.f32 %v2107, %v666
    %v2172 = vmul.f32 %v2108, %v666
    %v2173 = vmul.f32 %v2109, %v666
    %v2174 = vmul.f32 %v2110, %v666
    %v2175 = vmul.f32 %v2111, %v666
    %v2176 = vmul.f32 %v2112, %v666
    %v2177 = vmul.f32 %v2113, %v666
    %v2178 = vmul.f32 %v2114, %v666
    %v2179 = vmul.f32 %v2115, %v666
    %v2180 = vmul.f32 %v2116, %v666
    %v2181 = vmul.f32 %v2117, %v666
    %v2182 = vmul.f32 %v2118, %v666
    %v2183 = vmul.f32 %v2119, %v666
    %v2184 = vmul.f32 %v2120, %v666
    %v2185 = vmul.f32 %v2121, %v666
    %v2186 = vmul.f32 %v2122, %v666
    %v2187 = vmul.f32 %v2123, %v666
    %v2188 = vmul.f32 %v2124, %v666
    %v2189 = vmul.f32 %v2125, %v666
    %v2190 = vmul.f32 %v2126, %v666
    %v2191 = vmul.f32 %v2127, %v666
    %v2192 = vmul.f32 %v2128, %v666
    %v2193 = vmul.f32 %v2129, %v666
    %v2194 = vmul.f32 %v2130, %v666
    %v2195 = vmul.f32 %v2131, %v666
    %v2196 = vmul.f32 %v2132, %v666
    %v2197 = vmul.f32 %v2133, %v666
    %v2198 = vmul.f32 %v2134, %v666
    %v2199 = vmul.f32 %v2135, %v666
    %v2200 = vmul.f32 %v2136, %v666
    %v2201 = vmul.f32 %v2137, %v666
    %v2202 = vmul.f32 %v2138, %v666
    %v2203 = vmul.f32 %v2139, %v666
    %v2204 = vmul.f32 %v2140, %v666
    %v2205 = vmul.f32 %v2141, %v666
    %v2206 = vmul.f32 %v2142, %v666
    %v2207 = vmul.f32 %v2143, %v666
    %v2208 = vmul.f32 %v2144, %v666
    %v2209 = vmul.f32 %v2145, %v666
    %v2210 = vmul.f32 %v2146, %v666
    %v2211 = vmul.f32 %v2147, %v666
    %v2212 = vmul.f32 %v2148, %v666
    %v2213 = vmul.f32 %v2149, %v666
    %v2214 = vmul.f32 %v2150, %v666
    %v2215 = vmul.f32 %v2151, %v666
    %v2216 = vmul.f32 %v2152, %v666
    %v2217 = vmul.f32 %v2153, %v666
    %v2218 = vmul.f32 %v2154, %v666
    %v2219 = vmul.f32 %v2155, %v666
    %v2220 = vmul.f32 %v2156, %v666
    %v2221 = vmul.f32 %v2157, %v666
    %v2222 = vmul.f32 %v2158, %v666
    %v2223 = vmul.f32 %v2159, %v666
    %v2224 = vmul.f32 %v2160, %v666
    %v2225 = vmul.f32 %v2161, %v666
    %v2226 = vmul.f32 %v2162, %v666
    %v2227 = vmul.f32 %v2163, %v666
    %v2228 = vadd.f32 %v2164, %v2165
    %v2229 = vadd.f32 %v2228, %v2166
    %v2230 = vadd.f32 %v2229, %v2167
    %v2231 = vadd.f32 %v2230, %v2168
    %v2232 = vadd.f32 %v2231, %v2169
    %v2233 = vadd.f32 %v2232, %v2170
    %v2234 = vadd.f32 %v2233, %v2171
    %v2235 = vadd.f32 %v2234, %v2172
    %v2236 = vadd.f32 %v2235, %v2173
    %v2237 = vadd.f32 %v2236, %v2174
    %v2238 = vadd.f32 %v2237, %v2175
    %v2239 = vadd.f32 %v2238, %v2176
    %v2240 = vadd.f32 %v2239, %v2177
    %v2241 = vadd.f32 %v2240, %v2178
    %v2242 = vadd.f32 %v2241, %v2179
    %v2243 = vadd.f32 %v2242, %v2180
    %v2244 = vadd.f32 %v2243, %v2181
    %v2245 = vadd.f32 %v2244, %v2182
    %v2246 = vadd.f32 %v2245, %v2183
    %v2247 = vadd.f32 %v2246, %v2184
    %v2248 = vadd.f32 %v2247, %v2185
    %v2249 = vadd.f32 %v2248, %v2186
    %v2250 = vadd.f32 %v2249, %v2187
    %v2251 = vadd.f32 %v2250, %v2188
    %v2252 = vadd.f32 %v2251, %v2189
    %v2253 = vadd.f32 %v2252, %v2190
    %v2254 = vadd.f32 %v2253, %v2191
    %v2255 = vadd.f32 %v2254, %v2192
    %v2256 = vadd.f32 %v2255, %v2193
    %v2257 = vadd.f32 %v2256, %v2194
    %v2258 = vadd.f32 %v2257, %v2195
    %v2259 = vadd.f32 %v2258, %v2196
    %v2260 = vadd.f32 %v2259, %v2197
    %v2261 = vadd.f32 %v2260, %v2198
    %v2262 = vadd.f32 %v2261, %v2199
    %v2263 = vadd.f32 %v2262, %v2200
    %v2264 = vadd.f32 %v2263, %v2201
    %v2265 = vadd.f32 %v2264, %v2202
    %v2266 = vadd.f32 %v2265, %v2203
    %v2267 = vadd.f32 %v2266, %v2204
    %v2268 = vadd.f32 %v2267, %v2205
    %v2269 = vadd.f32 %v2268, %v2206
    %v2270 = vadd.f32 %v2269, %v2207
    %v2271 = vadd.f32 %v2270, %v2208
    %v2272 = vadd.f32 %v2271, %v2209
    %v2273 = vadd.f32 %v2272, %v2210
    %v2274 = vadd.f32 %v2273, %v2211
    %v2275 = vadd.f32 %v2274, %v2212
    %v2276 = vadd.f32 %v2275, %v2213
    %v2277 = vadd.f32 %v2276, %v2214
    %v2278 = vadd.f32 %v2277, %v2215
    %v2279 = vadd.f32 %v2278, %v2216
    %v2280 = vadd.f32 %v2279, %v2217
    %v2281 = vadd.f32 %v2280, %v2218
    %v2282 = vadd.f32 %v2281, %v2219
    %v2283 = vadd.f32 %v2282, %v2220
    %v2284 = vadd.f32 %v2283, %v2221
    %v2285 = vadd.f32 %v2284, %v2222
    %v2286 = vadd.f32 %v2285, %v2223
    %v2287 = vadd.f32 %v2286, %v2224
    %v2288 = vadd.f32 %v2287, %v2225
    %v2289 = vadd.f32 %v2288, %v2226
    %v2290 = vadd.f32 %v2289, %v2227
    %2291 = vadd.xlane.f32.xlu0 %v2290
    %v2292 = vpop.xlane.xlu0 %2291
    %v2293 = vrot.slane %v2292, 4
    %v2294 = vadd.f32 %v2292, %v2293
    %v2295 = vrot.slane %v2294, 2
    %v2296 = vadd.f32 %v2294, %v2295
    %v2297 = vrot.slane %v2296, 1
    %v2298 = vadd.f32 %v2296, %v2297
    %s2299 = vtos %v2298
    %v2300 = vstv %s2299
    %v2301 = vmul.f32 %v2300, 0.001953125
    %v2302 = vld [vmem:[%s0 + $0x30] sm:$0xff]
    %v2303 = vld [vmem:[%s0 + $0x38] sm:$0xff]
    %v2304 = vld [vmem:[%s0 + $0x70] sm:$0xff]
    %v2305 = vld [vmem:[%s0 + $0x78] sm:$0xff]
    %v2306 = vld [vmem:[%s0 + $0xb0] sm:$0xff]
    %v2307 = vld [vmem:[%s0 + $0xb8] sm:$0xff]
    %v2308 = vld [vmem:[%s0 + $0xf0] sm:$0xff]
    %v2309 = vld [vmem:[%s0 + $0xf8] sm:$0xff]
    %v2310 = vld [vmem:[%s0 + $0x130] sm:$0xff]
    %v2311 = vld [vmem:[%s0 + $0x138] sm:$0xff]
    %v2312 = vld [vmem:[%s0 + $0x170] sm:$0xff]
    %v2313 = vld [vmem:[%s0 + $0x178] sm:$0xff]
    %v2314 = vld [vmem:[%s0 + $0x1b0] sm:$0xff]
    %v2315 = vld [vmem:[%s0 + $0x1b8] sm:$0xff]
    %v2316 = vld [vmem:[%s0 + $0x1f0] sm:$0xff]
    %v2317 = vld [vmem:[%s0 + $0x1f8] sm:$0xff]
    %v2318 = vld [vmem:[%s0 + $0x230] sm:$0xff]
    %v2319 = vld [vmem:[%s0 + $0x238] sm:$0xff]
    %v2320 = vld [vmem:[%s0 + $0x270] sm:$0xff]
    %v2321 = vld [vmem:[%s0 + $0x278] sm:$0xff]
    %v2322 = vld [vmem:[%s0 + $0x2b0] sm:$0xff]
    %v2323 = vld [vmem:[%s0 + $0x2b8] sm:$0xff]
    %v2324 = vld [vmem:[%s0 + $0x2f0] sm:$0xff]
    %v2325 = vld [vmem:[%s0 + $0x2f8] sm:$0xff]
    %v2326 = vld [vmem:[%s0 + $0x330] sm:$0xff]
    %v2327 = vld [vmem:[%s0 + $0x338] sm:$0xff]
    %v2328 = vld [vmem:[%s0 + $0x370] sm:$0xff]
    %v2329 = vld [vmem:[%s0 + $0x378] sm:$0xff]
    %v2330 = vld [vmem:[%s0 + $0x3b0] sm:$0xff]
    %v2331 = vld [vmem:[%s0 + $0x3b8] sm:$0xff]
    %v2332 = vld [vmem:[%s0 + $0x3f0] sm:$0xff]
    %v2333 = vld [vmem:[%s0 + $0x3f8] sm:$0xff]
    %v2334 = vld [vmem:[%s0 + $0x430] sm:$0xff]
    %v2335 = vld [vmem:[%s0 + $0x438] sm:$0xff]
    %v2336 = vld [vmem:[%s0 + $0x470] sm:$0xff]
    %v2337 = vld [vmem:[%s0 + $0x478] sm:$0xff]
    %v2338 = vld [vmem:[%s0 + $0x4b0] sm:$0xff]
    %v2339 = vld [vmem:[%s0 + $0x4b8] sm:$0xff]
    %v2340 = vld [vmem:[%s0 + $0x4f0] sm:$0xff]
    %v2341 = vld [vmem:[%s0 + $0x4f8] sm:$0xff]
    %v2342 = vld [vmem:[%s0 + $0x530] sm:$0xff]
    %v2343 = vld [vmem:[%s0 + $0x538] sm:$0xff]
    %v2344 = vld [vmem:[%s0 + $0x570] sm:$0xff]
    %v2345 = vld [vmem:[%s0 + $0x578] sm:$0xff]
    %v2346 = vld [vmem:[%s0 + $0x5b0] sm:$0xff]
    %v2347 = vld [vmem:[%s0 + $0x5b8] sm:$0xff]
    %v2348 = vld [vmem:[%s0 + $0x5f0] sm:$0xff]
    %v2349 = vld [vmem:[%s0 + $0x5f8] sm:$0xff]
    %v2350 = vld [vmem:[%s0 + $0x630] sm:$0xff]
    %v2351 = vld [vmem:[%s0 + $0x638] sm:$0xff]
    %v2352 = vld [vmem:[%s0 + $0x670] sm:$0xff]
    %v2353 = vld [vmem:[%s0 + $0x678] sm:$0xff]
    %v2354 = vld [vmem:[%s0 + $0x6b0] sm:$0xff]
    %v2355 = vld [vmem:[%s0 + $0x6b8] sm:$0xff]
    %v2356 = vld [vmem:[%s0 + $0x6f0] sm:$0xff]
    %v2357 = vld [vmem:[%s0 + $0x6f8] sm:$0xff]
    %v2358 = vld [vmem:[%s0 + $0x730] sm:$0xff]
    %v2359 = vld [vmem:[%s0 + $0x738] sm:$0xff]
    %v2360 = vld [vmem:[%s0 + $0x770] sm:$0xff]
    %v2361 = vld [vmem:[%s0 + $0x778] sm:$0xff]
    %v2362 = vld [vmem:[%s0 + $0x7b0] sm:$0xff]
    %v2363 = vld [vmem:[%s0 + $0x7b8] sm:$0xff]
    %v2364 = vld [vmem:[%s0 + $0x7f0] sm:$0xff]
    %v2365 = vld [vmem:[%s0 + $0x7f8] sm:$0xff]
    %v2366 = vld [vmem:[%s0 + $0x830] sm:$0xff]
    %v2367 = vld [vmem:[%s0 + $0x838] sm:$0xff]
    %v2368 = vld [vmem:[%s0 + $0x870] sm:$0xff]
    %v2369 = vld [vmem:[%s0 + $0x878] sm:$0xff]
    %v2370 = vld [vmem:[%s0 + $0x8b0] sm:$0xff]
    %v2371 = vld [vmem:[%s0 + $0x8b8] sm:$0xff]
    %v2372 = vld [vmem:[%s0 + $0x8f0] sm:$0xff]
    %v2373 = vld [vmem:[%s0 + $0x8f8] sm:$0xff]
    %v2374 = vld [vmem:[%s0 + $0x930] sm:$0xff]
    %v2375 = vld [vmem:[%s0 + $0x938] sm:$0xff]
    %v2376 = vld [vmem:[%s0 + $0x970] sm:$0xff]
    %v2377 = vld [vmem:[%s0 + $0x978] sm:$0xff]
    %v2378 = vld [vmem:[%s0 + $0x9b0] sm:$0xff]
    %v2379 = vld [vmem:[%s0 + $0x9b8] sm:$0xff]
    %v2380 = vld [vmem:[%s0 + $0x9f0] sm:$0xff]
    %v2381 = vld [vmem:[%s0 + $0x9f8] sm:$0xff]
    %v2382 = vld [vmem:[%s0 + $0xa30] sm:$0xff]
    %v2383 = vld [vmem:[%s0 + $0xa38] sm:$0xff]
    %v2384 = vld [vmem:[%s0 + $0xa70] sm:$0xff]
    %v2385 = vld [vmem:[%s0 + $0xa78] sm:$0xff]
    %v2386 = vld [vmem:[%s0 + $0xab0] sm:$0xff]
    %v2387 = vld [vmem:[%s0 + $0xab8] sm:$0xff]
    %v2388 = vld [vmem:[%s0 + $0xaf0] sm:$0xff]
    %v2389 = vld [vmem:[%s0 + $0xaf8] sm:$0xff]
    %v2390 = vld [vmem:[%s0 + $0xb30] sm:$0xff]
    %v2391 = vld [vmem:[%s0 + $0xb38] sm:$0xff]
    %v2392 = vld [vmem:[%s0 + $0xb70] sm:$0xff]
    %v2393 = vld [vmem:[%s0 + $0xb78] sm:$0xff]
    %v2394 = vld [vmem:[%s0 + $0xbb0] sm:$0xff]
    %v2395 = vld [vmem:[%s0 + $0xbb8] sm:$0xff]
    %v2396 = vld [vmem:[%s0 + $0xbf0] sm:$0xff]
    %v2397 = vld [vmem:[%s0 + $0xbf8] sm:$0xff]
    %v2398 = vld [vmem:[%s0 + $0xc30] sm:$0xff]
    %v2399 = vld [vmem:[%s0 + $0xc38] sm:$0xff]
    %v2400 = vld [vmem:[%s0 + $0xc70] sm:$0xff]
    %v2401 = vld [vmem:[%s0 + $0xc78] sm:$0xff]
    %v2402 = vld [vmem:[%s0 + $0xcb0] sm:$0xff]
    %v2403 = vld [vmem:[%s0 + $0xcb8] sm:$0xff]
    %v2404 = vld [vmem:[%s0 + $0xcf0] sm:$0xff]
    %v2405 = vld [vmem:[%s0 + $0xcf8] sm:$0xff]
    %v2406 = vld [vmem:[%s0 + $0xd30] sm:$0xff]
    %v2407 = vld [vmem:[%s0 + $0xd38] sm:$0xff]
    %v2408 = vld [vmem:[%s0 + $0xd70] sm:$0xff]
    %v2409 = vld [vmem:[%s0 + $0xd78] sm:$0xff]
    %v2410 = vld [vmem:[%s0 + $0xdb0] sm:$0xff]
    %v2411 = vld [vmem:[%s0 + $0xdb8] sm:$0xff]
    %v2412 = vld [vmem:[%s0 + $0xdf0] sm:$0xff]
    %v2413 = vld [vmem:[%s0 + $0xdf8] sm:$0xff]
    %v2414 = vld [vmem:[%s0 + $0xe30] sm:$0xff]
    %v2415 = vld [vmem:[%s0 + $0xe38] sm:$0xff]
    %v2416 = vld [vmem:[%s0 + $0xe70] sm:$0xff]
    %v2417 = vld [vmem:[%s0 + $0xe78] sm:$0xff]
    %v2418 = vld [vmem:[%s0 + $0xeb0] sm:$0xff]
    %v2419 = vld [vmem:[%s0 + $0xeb8] sm:$0xff]
    %v2420 = vld [vmem:[%s0 + $0xef0] sm:$0xff]
    %v2421 = vld [vmem:[%s0 + $0xef8] sm:$0xff]
    %v2422 = vld [vmem:[%s0 + $0xf30] sm:$0xff]
    %v2423 = vld [vmem:[%s0 + $0xf38] sm:$0xff]
    %v2424 = vld [vmem:[%s0 + $0xf70] sm:$0xff]
    %v2425 = vld [vmem:[%s0 + $0xf78] sm:$0xff]
    %v2426 = vld [vmem:[%s0 + $0xfb0] sm:$0xff]
    %v2427 = vld [vmem:[%s0 + $0xfb8] sm:$0xff]
    %v2428 = vld [vmem:[%s0 + $0xff0] sm:$0xff]
    %v2429 = vld [vmem:[%s0 + $0xff8] sm:$0xff]
    %2430 = vmatpush.msra.mxu0 %v161
    %2431 = vmatpush.msra.mxu0 %v160
    %2432 = vmatpush.msra.mxu0 %v159
    %2433 = vmatpush.msra.mxu0 %v158
    %2434 = vmatpush.msra.mxu0 %v157
    %2435 = vmatpush.msra.mxu0 %v156
    %2436 = vmatpush.msra.mxu0 %v155
    %2437 = vmatpush.msra.mxu0 %v154
    %2438 = vmatpush.msra.mxu0 %v153
    %2439 = vmatpush.msra.mxu0 %v152
    %2440 = vmatpush.msra.mxu0 %v151
    %2441 = vmatpush.msra.mxu0 %v150
    %2442 = vmatpush.msra.mxu0 %v149
    %2443 = vmatpush.msra.mxu0 %v148
    %2444 = vmatpush.msra.mxu0 %v147
    %2445 = vmatpush.msra.mxu0 %v146
    %2446 = vmatmul.f32.gmra.mxu0 %v2302
    %v2447 = vpop.f32.mrf.mxu0
    %v2448 = vadd.f32 %v180, %v2447
    %2449 = vmatmul.f32.gmra.mxu0 %v2304
    %v2450 = vpop.f32.mrf.mxu0
    %v2451 = vadd.f32 %v180, %v2450
    %2452 = vmatmul.f32.gmra.mxu0 %v2306
    %v2453 = vpop.f32.mrf.mxu0
    %v2454 = vadd.f32 %v180, %v2453
    %2455 = vmatmul.f32.gmra.mxu0 %v2308
    %v2456 = vpop.f32.mrf.mxu0
    %v2457 = vadd.f32 %v180, %v2456
    %2458 = vmatmul.f32.gmra.mxu0 %v2310
    %v2459 = vpop.f32.mrf.mxu0
    %v2460 = vadd.f32 %v180, %v2459
    %2461 = vmatmul.f32.gmra.mxu0 %v2312
    %v2462 = vpop.f32.mrf.mxu0
    %v2463 = vadd.f32 %v180, %v2462
    %2464 = vmatmul.f32.gmra.mxu0 %v2314
    %v2465 = vpop.f32.mrf.mxu0
    %v2466 = vadd.f32 %v180, %v2465
    %2467 = vmatmul.f32.gmra.mxu0 %v2316
    %v2468 = vpop.f32.mrf.mxu0
    %v2469 = vadd.f32 %v180, %v2468
    %2470 = vmatmul.f32.gmra.mxu0 %v2318
    %v2471 = vpop.f32.mrf.mxu0
    %v2472 = vadd.f32 %v180, %v2471
    %2473 = vmatmul.f32.gmra.mxu0 %v2320
    %v2474 = vpop.f32.mrf.mxu0
    %v2475 = vadd.f32 %v180, %v2474
    %2476 = vmatmul.f32.gmra.mxu0 %v2322
    %v2477 = vpop.f32.mrf.mxu0
    %v2478 = vadd.f32 %v180, %v2477
    %2479 = vmatmul.f32.gmra.mxu0 %v2324
    %v2480 = vpop.f32.mrf.mxu0
    %v2481 = vadd.f32 %v180, %v2480
    %2482 = vmatmul.f32.gmra.mxu0 %v2326
    %v2483 = vpop.f32.mrf.mxu0
    %v2484 = vadd.f32 %v180, %v2483
    %2485 = vmatmul.f32.gmra.mxu0 %v2328
    %v2486 = vpop.f32.mrf.mxu0
    %v2487 = vadd.f32 %v180, %v2486
    %2488 = vmatmul.f32.gmra.mxu0 %v2330
    %v2489 = vpop.f32.mrf.mxu0
    %v2490 = vadd.f32 %v180, %v2489
    %2491 = vmatmul.f32.gmra.mxu0 %v2332
    %v2492 = vpop.f32.mrf.mxu0
    %v2493 = vadd.f32 %v180, %v2492
    %2494 = vmatmul.f32.gmra.mxu0 %v2334
    %v2495 = vpop.f32.mrf.mxu0
    %v2496 = vadd.f32 %v180, %v2495
    %2497 = vmatmul.f32.gmra.mxu0 %v2336
    %v2498 = vpop.f32.mrf.mxu0
    %v2499 = vadd.f32 %v180, %v2498
    %2500 = vmatmul.f32.gmra.mxu0 %v2338
    %v2501 = vpop.f32.mrf.mxu0
    %v2502 = vadd.f32 %v180, %v2501
    %2503 = vmatmul.f32.gmra.mxu0 %v2340
    %v2504 = vpop.f32.mrf.mxu0
    %v2505 = vadd.f32 %v180, %v2504
    %2506 = vmatmul.f32.gmra.mxu0 %v2342
    %v2507 = vpop.f32.mrf.mxu0
    %v2508 = vadd.f32 %v180, %v2507
    %2509 = vmatmul.f32.gmra.mxu0 %v2344
    %v2510 = vpop.f32.mrf.mxu0
    %v2511 = vadd.f32 %v180, %v2510
    %2512 = vmatmul.f32.gmra.mxu0 %v2346
    %v2513 = vpop.f32.mrf.mxu0
    %v2514 = vadd.f32 %v180, %v2513
    %2515 = vmatmul.f32.gmra.mxu0 %v2348
    %v2516 = vpop.f32.mrf.mxu0
    %v2517 = vadd.f32 %v180, %v2516
    %2518 = vmatmul.f32.gmra.mxu0 %v2350
    %v2519 = vpop.f32.mrf.mxu0
    %v2520 = vadd.f32 %v180, %v2519
    %2521 = vmatmul.f32.gmra.mxu0 %v2352
    %v2522 = vpop.f32.mrf.mxu0
    %v2523 = vadd.f32 %v180, %v2522
    %2524 = vmatmul.f32.gmra.mxu0 %v2354
    %v2525 = vpop.f32.mrf.mxu0
    %v2526 = vadd.f32 %v180, %v2525
    %2527 = vmatmul.f32.gmra.mxu0 %v2356
    %v2528 = vpop.f32.mrf.mxu0
    %v2529 = vadd.f32 %v180, %v2528
    %2530 = vmatmul.f32.gmra.mxu0 %v2358
    %v2531 = vpop.f32.mrf.mxu0
    %v2532 = vadd.f32 %v180, %v2531
    %2533 = vmatmul.f32.gmra.mxu0 %v2360
    %v2534 = vpop.f32.mrf.mxu0
    %v2535 = vadd.f32 %v180, %v2534
    %2536 = vmatmul.f32.gmra.mxu0 %v2362
    %v2537 = vpop.f32.mrf.mxu0
    %v2538 = vadd.f32 %v180, %v2537
    %2539 = vmatmul.f32.gmra.mxu0 %v2364
    %v2540 = vpop.f32.mrf.mxu0
    %v2541 = vadd.f32 %v180, %v2540
    %2542 = vmatmul.f32.gmra.mxu0 %v2366
    %v2543 = vpop.f32.mrf.mxu0
    %v2544 = vadd.f32 %v180, %v2543
    %2545 = vmatmul.f32.gmra.mxu0 %v2368
    %v2546 = vpop.f32.mrf.mxu0
    %v2547 = vadd.f32 %v180, %v2546
    %2548 = vmatmul.f32.gmra.mxu0 %v2370
    %v2549 = vpop.f32.mrf.mxu0
    %v2550 = vadd.f32 %v180, %v2549
    %2551 = vmatmul.f32.gmra.mxu0 %v2372
    %v2552 = vpop.f32.mrf.mxu0
    %v2553 = vadd.f32 %v180, %v2552
    %2554 = vmatmul.f32.gmra.mxu0 %v2374
    %v2555 = vpop.f32.mrf.mxu0
    %v2556 = vadd.f32 %v180, %v2555
    %2557 = vmatmul.f32.gmra.mxu0 %v2376
    %v2558 = vpop.f32.mrf.mxu0
    %v2559 = vadd.f32 %v180, %v2558
    %2560 = vmatmul.f32.gmra.mxu0 %v2378
    %v2561 = vpop.f32.mrf.mxu0
    %v2562 = vadd.f32 %v180, %v2561
    %2563 = vmatmul.f32.gmra.mxu0 %v2380
    %v2564 = vpop.f32.mrf.mxu0
    %v2565 = vadd.f32 %v180, %v2564
    %2566 = vmatmul.f32.gmra.mxu0 %v2382
    %v2567 = vpop.f32.mrf.mxu0
    %v2568 = vadd.f32 %v180, %v2567
    %2569 = vmatmul.f32.gmra.mxu0 %v2384
    %v2570 = vpop.f32.mrf.mxu0
    %v2571 = vadd.f32 %v180, %v2570
    %2572 = vmatmul.f32.gmra.mxu0 %v2386
    %v2573 = vpop.f32.mrf.mxu0
    %v2574 = vadd.f32 %v180, %v2573
    %2575 = vmatmul.f32.gmra.mxu0 %v2388
    %v2576 = vpop.f32.mrf.mxu0
    %v2577 = vadd.f32 %v180, %v2576
    %2578 = vmatmul.f32.gmra.mxu0 %v2390
    %v2579 = vpop.f32.mrf.mxu0
    %v2580 = vadd.f32 %v180, %v2579
    %2581 = vmatmul.f32.gmra.mxu0 %v2392
    %v2582 = vpop.f32.mrf.mxu0
    %v2583 = vadd.f32 %v180, %v2582
    %2584 = vmatmul.f32.gmra.mxu0 %v2394
    %v2585 = vpop.f32.mrf.mxu0
    %v2586 = vadd.f32 %v180, %v2585
    %2587 = vmatmul.f32.gmra.mxu0 %v2396
    %v2588 = vpop.f32.mrf.mxu0
    %v2589 = vadd.f32 %v180, %v2588
    %2590 = vmatmul.f32.gmra.mxu0 %v2398
    %v2591 = vpop.f32.mrf.mxu0
    %v2592 = vadd.f32 %v180, %v2591
    %2593 = vmatmul.f32.gmra.mxu0 %v2400
    %v2594 = vpop.f32.mrf.mxu0
    %v2595 = vadd.f32 %v180, %v2594
    %2596 = vmatmul.f32.gmra.mxu0 %v2402
    %v2597 = vpop.f32.mrf.mxu0
    %v2598 = vadd.f32 %v180, %v2597
    %2599 = vmatmul.f32.gmra.mxu0 %v2404
    %v2600 = vpop.f32.mrf.mxu0
    %v2601 = vadd.f32 %v180, %v2600
    %2602 = vmatmul.f32.gmra.mxu0 %v2406
    %v2603 = vpop.f32.mrf.mxu0
    %v2604 = vadd.f32 %v180, %v2603
    %2605 = vmatmul.f32.gmra.mxu0 %v2408
    %v2606 = vpop.f32.mrf.mxu0
    %v2607 = vadd.f32 %v180, %v2606
    %2608 = vmatmul.f32.gmra.mxu0 %v2410
    %v2609 = vpop.f32.mrf.mxu0
    %v2610 = vadd.f32 %v180, %v2609
    %2611 = vmatmul.f32.gmra.mxu0 %v2412
    %v2612 = vpop.f32.mrf.mxu0
    %v2613 = vadd.f32 %v180, %v2612
    %2614 = vmatmul.f32.gmra.mxu0 %v2414
    %v2615 = vpop.f32.mrf.mxu0
    %v2616 = vadd.f32 %v180, %v2615
    %2617 = vmatmul.f32.gmra.mxu0 %v2416
    %v2618 = vpop.f32.mrf.mxu0
    %v2619 = vadd.f32 %v180, %v2618
    %2620 = vmatmul.f32.gmra.mxu0 %v2418
    %v2621 = vpop.f32.mrf.mxu0
    %v2622 = vadd.f32 %v180, %v2621
    %2623 = vmatmul.f32.gmra.mxu0 %v2420
    %v2624 = vpop.f32.mrf.mxu0
    %v2625 = vadd.f32 %v180, %v2624
    %2626 = vmatmul.f32.gmra.mxu0 %v2422
    %v2627 = vpop.f32.mrf.mxu0
    %v2628 = vadd.f32 %v180, %v2627
    %2629 = vmatmul.f32.gmra.mxu0 %v2424
    %v2630 = vpop.f32.mrf.mxu0
    %v2631 = vadd.f32 %v180, %v2630
    %2632 = vmatmul.f32.gmra.mxu0 %v2426
    %v2633 = vpop.f32.mrf.mxu0
    %v2634 = vadd.f32 %v180, %v2633
    %2635 = vmatmul.f32.gmra.mxu0 %v2428
    %v2636 = vpop.f32.mrf.mxu0
    %v2637 = vadd.f32 %v180, %v2636
    %2638 = vdwg.mxu0
    %2639 = vmatpush.msra.mxu0 %v177
    %2640 = vmatpush.msra.mxu0 %v176
    %2641 = vmatpush.msra.mxu0 %v175
    %2642 = vmatpush.msra.mxu0 %v174
    %2643 = vmatpush.msra.mxu0 %v173
    %2644 = vmatpush.msra.mxu0 %v172
    %2645 = vmatpush.msra.mxu0 %v171
    %2646 = vmatpush.msra.mxu0 %v170
    %2647 = vmatpush.msra.mxu0 %v169
    %2648 = vmatpush.msra.mxu0 %v168
    %2649 = vmatpush.msra.mxu0 %v167
    %2650 = vmatpush.msra.mxu0 %v166
    %2651 = vmatpush.msra.mxu0 %v165
    %2652 = vmatpush.msra.mxu0 %v164
    %2653 = vmatpush.msra.mxu0 %v163
    %2654 = vmatpush.msra.mxu0 %v162
    %2655 = vmatmul.f32.gmra.mxu0 %v2303
    %v2656 = vpop.f32.mrf.mxu0
    %v2657 = vadd.f32 %v2448, %v2656
    %2658 = vmatmul.f32.gmra.mxu0 %v2305
    %v2659 = vpop.f32.mrf.mxu0
    %v2660 = vadd.f32 %v2451, %v2659
    %2661 = vmatmul.f32.gmra.mxu0 %v2307
    %v2662 = vpop.f32.mrf.mxu0
    %v2663 = vadd.f32 %v2454, %v2662
    %2664 = vmatmul.f32.gmra.mxu0 %v2309
    %v2665 = vpop.f32.mrf.mxu0
    %v2666 = vadd.f32 %v2457, %v2665
    %2667 = vmatmul.f32.gmra.mxu0 %v2311
    %v2668 = vpop.f32.mrf.mxu0
    %v2669 = vadd.f32 %v2460, %v2668
    %2670 = vmatmul.f32.gmra.mxu0 %v2313
    %v2671 = vpop.f32.mrf.mxu0
    %v2672 = vadd.f32 %v2463, %v2671
    %2673 = vmatmul.f32.gmra.mxu0 %v2315
    %v2674 = vpop.f32.mrf.mxu0
    %v2675 = vadd.f32 %v2466, %v2674
    %2676 = vmatmul.f32.gmra.mxu0 %v2317
    %v2677 = vpop.f32.mrf.mxu0
    %v2678 = vadd.f32 %v2469, %v2677
    %2679 = vmatmul.f32.gmra.mxu0 %v2319
    %v2680 = vpop.f32.mrf.mxu0
    %v2681 = vadd.f32 %v2472, %v2680
    %2682 = vmatmul.f32.gmra.mxu0 %v2321
    %v2683 = vpop.f32.mrf.mxu0
    %v2684 = vadd.f32 %v2475, %v2683
    %2685 = vmatmul.f32.gmra.mxu0 %v2323
    %v2686 = vpop.f32.mrf.mxu0
    %v2687 = vadd.f32 %v2478, %v2686
    %2688 = vmatmul.f32.gmra.mxu0 %v2325
    %v2689 = vpop.f32.mrf.mxu0
    %v2690 = vadd.f32 %v2481, %v2689
    %2691 = vmatmul.f32.gmra.mxu0 %v2327
    %v2692 = vpop.f32.mrf.mxu0
    %v2693 = vadd.f32 %v2484, %v2692
    %2694 = vmatmul.f32.gmra.mxu0 %v2329
    %v2695 = vpop.f32.mrf.mxu0
    %v2696 = vadd.f32 %v2487, %v2695
    %2697 = vmatmul.f32.gmra.mxu0 %v2331
    %v2698 = vpop.f32.mrf.mxu0
    %v2699 = vadd.f32 %v2490, %v2698
    %2700 = vmatmul.f32.gmra.mxu0 %v2333
    %v2701 = vpop.f32.mrf.mxu0
    %v2702 = vadd.f32 %v2493, %v2701
    %2703 = vmatmul.f32.gmra.mxu0 %v2335
    %v2704 = vpop.f32.mrf.mxu0
    %v2705 = vadd.f32 %v2496, %v2704
    %2706 = vmatmul.f32.gmra.mxu0 %v2337
    %v2707 = vpop.f32.mrf.mxu0
    %v2708 = vadd.f32 %v2499, %v2707
    %2709 = vmatmul.f32.gmra.mxu0 %v2339
    %v2710 = vpop.f32.mrf.mxu0
    %v2711 = vadd.f32 %v2502, %v2710
    %2712 = vmatmul.f32.gmra.mxu0 %v2341
    %v2713 = vpop.f32.mrf.mxu0
    %v2714 = vadd.f32 %v2505, %v2713
    %2715 = vmatmul.f32.gmra.mxu0 %v2343
    %v2716 = vpop.f32.mrf.mxu0
    %v2717 = vadd.f32 %v2508, %v2716
    %2718 = vmatmul.f32.gmra.mxu0 %v2345
    %v2719 = vpop.f32.mrf.mxu0
    %v2720 = vadd.f32 %v2511, %v2719
    %2721 = vmatmul.f32.gmra.mxu0 %v2347
    %v2722 = vpop.f32.mrf.mxu0
    %v2723 = vadd.f32 %v2514, %v2722
    %2724 = vmatmul.f32.gmra.mxu0 %v2349
    %v2725 = vpop.f32.mrf.mxu0
    %v2726 = vadd.f32 %v2517, %v2725
    %2727 = vmatmul.f32.gmra.mxu0 %v2351
    %v2728 = vpop.f32.mrf.mxu0
    %v2729 = vadd.f32 %v2520, %v2728
    %2730 = vmatmul.f32.gmra.mxu0 %v2353
    %v2731 = vpop.f32.mrf.mxu0
    %v2732 = vadd.f32 %v2523, %v2731
    %2733 = vmatmul.f32.gmra.mxu0 %v2355
    %v2734 = vpop.f32.mrf.mxu0
    %v2735 = vadd.f32 %v2526, %v2734
    %2736 = vmatmul.f32.gmra.mxu0 %v2357
    %v2737 = vpop.f32.mrf.mxu0
    %v2738 = vadd.f32 %v2529, %v2737
    %2739 = vmatmul.f32.gmra.mxu0 %v2359
    %v2740 = vpop.f32.mrf.mxu0
    %v2741 = vadd.f32 %v2532, %v2740
    %2742 = vmatmul.f32.gmra.mxu0 %v2361
    %v2743 = vpop.f32.mrf.mxu0
    %v2744 = vadd.f32 %v2535, %v2743
    %2745 = vmatmul.f32.gmra.mxu0 %v2363
    %v2746 = vpop.f32.mrf.mxu0
    %v2747 = vadd.f32 %v2538, %v2746
    %2748 = vmatmul.f32.gmra.mxu0 %v2365
    %v2749 = vpop.f32.mrf.mxu0
    %v2750 = vadd.f32 %v2541, %v2749
    %2751 = vmatmul.f32.gmra.mxu0 %v2367
    %v2752 = vpop.f32.mrf.mxu0
    %v2753 = vadd.f32 %v2544, %v2752
    %2754 = vmatmul.f32.gmra.mxu0 %v2369
    %v2755 = vpop.f32.mrf.mxu0
    %v2756 = vadd.f32 %v2547, %v2755
    %2757 = vmatmul.f32.gmra.mxu0 %v2371
    %v2758 = vpop.f32.mrf.mxu0
    %v2759 = vadd.f32 %v2550, %v2758
    %2760 = vmatmul.f32.gmra.mxu0 %v2373
    %v2761 = vpop.f32.mrf.mxu0
    %v2762 = vadd.f32 %v2553, %v2761
    %2763 = vmatmul.f32.gmra.mxu0 %v2375
    %v2764 = vpop.f32.mrf.mxu0
    %v2765 = vadd.f32 %v2556, %v2764
    %2766 = vmatmul.f32.gmra.mxu0 %v2377
    %v2767 = vpop.f32.mrf.mxu0
    %v2768 = vadd.f32 %v2559, %v2767
    %2769 = vmatmul.f32.gmra.mxu0 %v2379
    %v2770 = vpop.f32.mrf.mxu0
    %v2771 = vadd.f32 %v2562, %v2770
    %2772 = vmatmul.f32.gmra.mxu0 %v2381
    %v2773 = vpop.f32.mrf.mxu0
    %v2774 = vadd.f32 %v2565, %v2773
    %2775 = vmatmul.f32.gmra.mxu0 %v2383
    %v2776 = vpop.f32.mrf.mxu0
    %v2777 = vadd.f32 %v2568, %v2776
    %2778 = vmatmul.f32.gmra.mxu0 %v2385
    %v2779 = vpop.f32.mrf.mxu0
    %v2780 = vadd.f32 %v2571, %v2779
    %2781 = vmatmul.f32.gmra.mxu0 %v2387
    %v2782 = vpop.f32.mrf.mxu0
    %v2783 = vadd.f32 %v2574, %v2782
    %2784 = vmatmul.f32.gmra.mxu0 %v2389
    %v2785 = vpop.f32.mrf.mxu0
    %v2786 = vadd.f32 %v2577, %v2785
    %2787 = vmatmul.f32.gmra.mxu0 %v2391
    %v2788 = vpop.f32.mrf.mxu0
    %v2789 = vadd.f32 %v2580, %v2788
    %2790 = vmatmul.f32.gmra.mxu0 %v2393
    %v2791 = vpop.f32.mrf.mxu0
    %v2792 = vadd.f32 %v2583, %v2791
    %2793 = vmatmul.f32.gmra.mxu0 %v2395
    %v2794 = vpop.f32.mrf.mxu0
    %v2795 = vadd.f32 %v2586, %v2794
    %2796 = vmatmul.f32.gmra.mxu0 %v2397
    %v2797 = vpop.f32.mrf.mxu0
    %v2798 = vadd.f32 %v2589, %v2797
    %2799 = vmatmul.f32.gmra.mxu0 %v2399
    %v2800 = vpop.f32.mrf.mxu0
    %v2801 = vadd.f32 %v2592, %v2800
    %2802 = vmatmul.f32.gmra.mxu0 %v2401
    %v2803 = vpop.f32.mrf.mxu0
    %v2804 = vadd.f32 %v2595, %v2803
    %2805 = vmatmul.f32.gmra.mxu0 %v2403
    %v2806 = vpop.f32.mrf.mxu0
    %v2807 = vadd.f32 %v2598, %v2806
    %2808 = vmatmul.f32.gmra.mxu0 %v2405
    %v2809 = vpop.f32.mrf.mxu0
    %v2810 = vadd.f32 %v2601, %v2809
    %2811 = vmatmul.f32.gmra.mxu0 %v2407
    %v2812 = vpop.f32.mrf.mxu0
    %v2813 = vadd.f32 %v2604, %v2812
    %2814 = vmatmul.f32.gmra.mxu0 %v2409
    %v2815 = vpop.f32.mrf.mxu0
    %v2816 = vadd.f32 %v2607, %v2815
    %2817 = vmatmul.f32.gmra.mxu0 %v2411
    %v2818 = vpop.f32.mrf.mxu0
    %v2819 = vadd.f32 %v2610, %v2818
    %2820 = vmatmul.f32.gmra.mxu0 %v2413
    %v2821 = vpop.f32.mrf.mxu0
    %v2822 = vadd.f32 %v2613, %v2821
    %2823 = vmatmul.f32.gmra.mxu0 %v2415
    %v2824 = vpop.f32.mrf.mxu0
    %v2825 = vadd.f32 %v2616, %v2824
    %2826 = vmatmul.f32.gmra.mxu0 %v2417
    %v2827 = vpop.f32.mrf.mxu0
    %v2828 = vadd.f32 %v2619, %v2827
    %2829 = vmatmul.f32.gmra.mxu0 %v2419
    %v2830 = vpop.f32.mrf.mxu0
    %v2831 = vadd.f32 %v2622, %v2830
    %2832 = vmatmul.f32.gmra.mxu0 %v2421
    %v2833 = vpop.f32.mrf.mxu0
    %v2834 = vadd.f32 %v2625, %v2833
    %2835 = vmatmul.f32.gmra.mxu0 %v2423
    %v2836 = vpop.f32.mrf.mxu0
    %v2837 = vadd.f32 %v2628, %v2836
    %2838 = vmatmul.f32.gmra.mxu0 %v2425
    %v2839 = vpop.f32.mrf.mxu0
    %v2840 = vadd.f32 %v2631, %v2839
    %2841 = vmatmul.f32.gmra.mxu0 %v2427
    %v2842 = vpop.f32.mrf.mxu0
    %v2843 = vadd.f32 %v2634, %v2842
    %2844 = vmatmul.f32.gmra.mxu0 %v2429
    %v2845 = vpop.f32.mrf.mxu0
    %v2846 = vadd.f32 %v2637, %v2845
    %2847 = vdwg.mxu0
    %v2848 = vtanh.pop %v2657
    %v2849 = vtanh.pop %v2660
    %v2850 = vtanh.pop %v2663
    %v2851 = vtanh.pop %v2666
    %v2852 = vtanh.pop %v2669
    %v2853 = vtanh.pop %v2672
    %v2854 = vtanh.pop %v2675
    %v2855 = vtanh.pop %v2678
    %v2856 = vtanh.pop %v2681
    %v2857 = vtanh.pop %v2684
    %v2858 = vtanh.pop %v2687
    %v2859 = vtanh.pop %v2690
    %v2860 = vtanh.pop %v2693
    %v2861 = vtanh.pop %v2696
    %v2862 = vtanh.pop %v2699
    %v2863 = vtanh.pop %v2702
    %v2864 = vtanh.pop %v2705
    %v2865 = vtanh.pop %v2708
    %v2866 = vtanh.pop %v2711
    %v2867 = vtanh.pop %v2714
    %v2868 = vtanh.pop %v2717
    %v2869 = vtanh.pop %v2720
    %v2870 = vtanh.pop %v2723
    %v2871 = vtanh.pop %v2726
    %v2872 = vtanh.pop %v2729
    %v2873 = vtanh.pop %v2732
    %v2874 = vtanh.pop %v2735
    %v2875 = vtanh.pop %v2738
    %v2876 = vtanh.pop %v2741
    %v2877 = vtanh.pop %v2744
    %v2878 = vtanh.pop %v2747
    %v2879 = vtanh.pop %v2750
    %v2880 = vtanh.pop %v2753
    %v2881 = vtanh.pop %v2756
    %v2882 = vtanh.pop %v2759
    %v2883 = vtanh.pop %v2762
    %v2884 = vtanh.pop %v2765
    %v2885 = vtanh.pop %v2768
    %v2886 = vtanh.pop %v2771
    %v2887 = vtanh.pop %v2774
    %v2888 = vtanh.pop %v2777
    %v2889 = vtanh.pop %v2780
    %v2890 = vtanh.pop %v2783
    %v2891 = vtanh.pop %v2786
    %v2892 = vtanh.pop %v2789
    %v2893 = vtanh.pop %v2792
    %v2894 = vtanh.pop %v2795
    %v2895 = vtanh.pop %v2798
    %v2896 = vtanh.pop %v2801
    %v2897 = vtanh.pop %v2804
    %v2898 = vtanh.pop %v2807
    %v2899 = vtanh.pop %v2810
    %v2900 = vtanh.pop %v2813
    %v2901 = vtanh.pop %v2816
    %v2902 = vtanh.pop %v2819
    %v2903 = vtanh.pop %v2822
    %v2904 = vtanh.pop %v2825
    %v2905 = vtanh.pop %v2828
    %v2906 = vtanh.pop %v2831
    %v2907 = vtanh.pop %v2834
    %v2908 = vtanh.pop %v2837
    %v2909 = vtanh.pop %v2840
    %v2910 = vtanh.pop %v2843
    %v2911 = vtanh.pop %v2846
    %v2912 = vmul.f32 %v2848, %v666
    %v2913 = vmul.f32 %v2849, %v666
    %v2914 = vmul.f32 %v2850, %v666
    %v2915 = vmul.f32 %v2851, %v666
    %v2916 = vmul.f32 %v2852, %v666
    %v2917 = vmul.f32 %v2853, %v666
    %v2918 = vmul.f32 %v2854, %v666
    %v2919 = vmul.f32 %v2855, %v666
    %v2920 = vmul.f32 %v2856, %v666
    %v2921 = vmul.f32 %v2857, %v666
    %v2922 = vmul.f32 %v2858, %v666
    %v2923 = vmul.f32 %v2859, %v666
    %v2924 = vmul.f32 %v2860, %v666
    %v2925 = vmul.f32 %v2861, %v666
    %v2926 = vmul.f32 %v2862, %v666
    %v2927 = vmul.f32 %v2863, %v666
    %v2928 = vmul.f32 %v2864, %v666
    %v2929 = vmul.f32 %v2865, %v666
    %v2930 = vmul.f32 %v2866, %v666
    %v2931 = vmul.f32 %v2867, %v666
    %v2932 = vmul.f32 %v2868, %v666
    %v2933 = vmul.f32 %v2869, %v666
    %v2934 = vmul.f32 %v2870, %v666
    %v2935 = vmul.f32 %v2871, %v666
    %v2936 = vmul.f32 %v2872, %v666
    %v2937 = vmul.f32 %v2873, %v666
    %v2938 = vmul.f32 %v2874, %v666
    %v2939 = vmul.f32 %v2875, %v666
    %v2940 = vmul.f32 %v2876, %v666
    %v2941 = vmul.f32 %v2877, %v666
    %v2942 = vmul.f32 %v2878, %v666
    %v2943 = vmul.f32 %v2879, %v666
    %v2944 = vmul.f32 %v2880, %v666
    %v2945 = vmul.f32 %v2881, %v666
    %v2946 = vmul.f32 %v2882, %v666
    %v2947 = vmul.f32 %v2883, %v666
    %v2948 = vmul.f32 %v2884, %v666
    %v2949 = vmul.f32 %v2885, %v666
    %v2950 = vmul.f32 %v2886, %v666
    %v2951 = vmul.f32 %v2887, %v666
    %v2952 = vmul.f32 %v2888, %v666
    %v2953 = vmul.f32 %v2889, %v666
    %v2954 = vmul.f32 %v2890, %v666
    %v2955 = vmul.f32 %v2891, %v666
    %v2956 = vmul.f32 %v2892, %v666
    %v2957 = vmul.f32 %v2893, %v666
    %v2958 = vmul.f32 %v2894, %v666
    %v2959 = vmul.f32 %v2895, %v666
    %v2960 = vmul.f32 %v2896, %v666
    %v2961 = vmul.f32 %v2897, %v666
    %v2962 = vmul.f32 %v2898, %v666
    %v2963 = vmul.f32 %v2899, %v666
    %v2964 = vmul.f32 %v2900, %v666
    %v2965 = vmul.f32 %v2901, %v666
    %v2966 = vmul.f32 %v2902, %v666
    %v2967 = vmul.f32 %v2903, %v666
    %v2968 = vmul.f32 %v2904, %v666
    %v2969 = vmul.f32 %v2905, %v666
    %v2970 = vmul.f32 %v2906, %v666
    %v2971 = vmul.f32 %v2907, %v666
    %v2972 = vmul.f32 %v2908, %v666
    %v2973 = vmul.f32 %v2909, %v666
    %v2974 = vmul.f32 %v2910, %v666
    %v2975 = vmul.f32 %v2911, %v666
    %v2976 = vadd.f32 %v2912, %v2913
    %v2977 = vadd.f32 %v2976, %v2914
    %v2978 = vadd.f32 %v2977, %v2915
    %v2979 = vadd.f32 %v2978, %v2916
    %v2980 = vadd.f32 %v2979, %v2917
    %v2981 = vadd.f32 %v2980, %v2918
    %v2982 = vadd.f32 %v2981, %v2919
    %v2983 = vadd.f32 %v2982, %v2920
    %v2984 = vadd.f32 %v2983, %v2921
    %v2985 = vadd.f32 %v2984, %v2922
    %v2986 = vadd.f32 %v2985, %v2923
    %v2987 = vadd.f32 %v2986, %v2924
    %v2988 = vadd.f32 %v2987, %v2925
    %v2989 = vadd.f32 %v2988, %v2926
    %v2990 = vadd.f32 %v2989, %v2927
    %v2991 = vadd.f32 %v2990, %v2928
    %v2992 = vadd.f32 %v2991, %v2929
    %v2993 = vadd.f32 %v2992, %v2930
    %v2994 = vadd.f32 %v2993, %v2931
    %v2995 = vadd.f32 %v2994, %v2932
    %v2996 = vadd.f32 %v2995, %v2933
    %v2997 = vadd.f32 %v2996, %v2934
    %v2998 = vadd.f32 %v2997, %v2935
    %v2999 = vadd.f32 %v2998, %v2936
    %v3000 = vadd.f32 %v2999, %v2937
    %v3001 = vadd.f32 %v3000, %v2938
    %v3002 = vadd.f32 %v3001, %v2939
    %v3003 = vadd.f32 %v3002, %v2940
    %v3004 = vadd.f32 %v3003, %v2941
    %v3005 = vadd.f32 %v3004, %v2942
    %v3006 = vadd.f32 %v3005, %v2943
    %v3007 = vadd.f32 %v3006, %v2944
    %v3008 = vadd.f32 %v3007, %v2945
    %v3009 = vadd.f32 %v3008, %v2946
    %v3010 = vadd.f32 %v3009, %v2947
    %v3011 = vadd.f32 %v3010, %v2948
    %v3012 = vadd.f32 %v3011, %v2949
    %v3013 = vadd.f32 %v3012, %v2950
    %v3014 = vadd.f32 %v3013, %v2951
    %v3015 = vadd.f32 %v3014, %v2952
    %v3016 = vadd.f32 %v3015, %v2953
    %v3017 = vadd.f32 %v3016, %v2954
    %v3018 = vadd.f32 %v3017, %v2955
    %v3019 = vadd.f32 %v3018, %v2956
    %v3020 = vadd.f32 %v3019, %v2957
    %v3021 = vadd.f32 %v3020, %v2958
    %v3022 = vadd.f32 %v3021, %v2959
    %v3023 = vadd.f32 %v3022, %v2960
    %v3024 = vadd.f32 %v3023, %v2961
    %v3025 = vadd.f32 %v3024, %v2962
    %v3026 = vadd.f32 %v3025, %v2963
    %v3027 = vadd.f32 %v3026, %v2964
    %v3028 = vadd.f32 %v3027, %v2965
    %v3029 = vadd.f32 %v3028, %v2966
    %v3030 = vadd.f32 %v3029, %v2967
    %v3031 = vadd.f32 %v3030, %v2968
    %v3032 = vadd.f32 %v3031, %v2969
    %v3033 = vadd.f32 %v3032, %v2970
    %v3034 = vadd.f32 %v3033, %v2971
    %v3035 = vadd.f32 %v3034, %v2972
    %v3036 = vadd.f32 %v3035, %v2973
    %v3037 = vadd.f32 %v3036, %v2974
    %v3038 = vadd.f32 %v3037, %v2975
    %3039 = vadd.xlane.f32.xlu0 %v3038
    %v3040 = vpop.xlane.xlu0 %3039
    %v3041 = vrot.slane %v3040, 4
    %v3042 = vadd.f32 %v3040, %v3041
    %v3043 = vrot.slane %v3042, 2
    %v3044 = vadd.f32 %v3042, %v3043
    %v3045 = vrot.slane %v3044, 1
    %v3046 = vadd.f32 %v3044, %v3045
    %s3047 = vtos %v3046
    %v3048 = vstv %s3047
    %v3049 = vmul.f32 %v3048, 0.001953125
    %v3050 = vmax.f32 %v805, %v1553
    %v3051 = vmax.f32 %v3050, %v2301
    %v3052 = vmax.f32 %v3051, %v3049
    %v3053 = vsub.f32 %v805, %v3052
    %v3054 = vmul.f32 %v3053, 1.442695
    %v3055 = vpow.pop %v3054
    %v3056 = vsub.f32 %v1553, %v3052
    %v3057 = vmul.f32 %v3056, 1.442695
    %v3058 = vpow.pop %v3057
    %v3059 = vsub.f32 %v2301, %v3052
    %v3060 = vmul.f32 %v3059, 1.442695
    %v3061 = vpow.pop %v3060
    %v3062 = vsub.f32 %v3049, %v3052
    %v3063 = vmul.f32 %v3062, 1.442695
    %v3064 = vpow.pop %v3063
    %v3065 = vadd.f32 %v3055, %v3058
    %v3066 = vadd.f32 %v3065, %v3061
    %v3067 = vadd.f32 %v3066, %v3064
    %v3068 = vrcp.pop %v3067
    %v3069 = vmul.f32 %v3067, %v3068
    %v3070 = vsub.f32 1.0, %v3069
    %v3071 = vmul.f32 %v3068, %v3070
    %v3072 = vadd.f32 %v3068, %v3071
    %vm3073 = vweird.f32 %v3067
    %vm3074 = vweird.f32 %v3068
    %vm3075 = vmor %vm3073, %vm3074
    %v3076 = vsel %vm3075, %v3068, %v3072
    %v3077 = vand.u32 2147483647, %v3067
    %vm3078 = vcmp.eq.f32.partialorder %v3077, 8.507059e+37
    %v3079 = vand.u32 %v3067, 2147483648
    %v3080 = vor.u32 1.1754944e-38, %v3079
    %v3081 = vsel %vm3078, %v3080, %v3076
    %v3082 = vmul.f32 %v3055, %v3081
    %v3083 = vmul.f32 %v3058, %v3081
    %v3084 = vmul.f32 %v3061, %v3081
    %v3085 = vmul.f32 %v3064, %v3081
    %v3086 = vmul.f32 %v3082, %v18
    %v3087 = vmul.f32 %v3082, %v19
    %v3088 = vmul.f32 %v3082, %v20
    %v3089 = vmul.f32 %v3082, %v21
    %v3090 = vmul.f32 %v3082, %v22
    %v3091 = vmul.f32 %v3082, %v23
    %v3092 = vmul.f32 %v3082, %v24
    %v3093 = vmul.f32 %v3082, %v25
    %v3094 = vmul.f32 %v3082, %v26
    %v3095 = vmul.f32 %v3082, %v27
    %v3096 = vmul.f32 %v3082, %v28
    %v3097 = vmul.f32 %v3082, %v29
    %v3098 = vmul.f32 %v3082, %v30
    %v3099 = vmul.f32 %v3082, %v31
    %v3100 = vmul.f32 %v3082, %v32
    %v3101 = vmul.f32 %v3082, %v33
    %v3102 = vmul.f32 %v3082, %v34
    %v3103 = vmul.f32 %v3082, %v35
    %v3104 = vmul.f32 %v3082, %v36
    %v3105 = vmul.f32 %v3082, %v37
    %v3106 = vmul.f32 %v3082, %v38
    %v3107 = vmul.f32 %v3082, %v39
    %v3108 = vmul.f32 %v3082, %v40
    %v3109 = vmul.f32 %v3082, %v41
    %v3110 = vmul.f32 %v3082, %v42
    %v3111 = vmul.f32 %v3082, %v43
    %v3112 = vmul.f32 %v3082, %v44
    %v3113 = vmul.f32 %v3082, %v45
    %v3114 = vmul.f32 %v3082, %v46
    %v3115 = vmul.f32 %v3082, %v47
    %v3116 = vmul.f32 %v3082, %v48
    %v3117 = vmul.f32 %v3082, %v49
    %v3118 = vmul.f32 %v3082, %v50
    %v3119 = vmul.f32 %v3082, %v51
    %v3120 = vmul.f32 %v3082, %v52
    %v3121 = vmul.f32 %v3082, %v53
    %v3122 = vmul.f32 %v3082, %v54
    %v3123 = vmul.f32 %v3082, %v55
    %v3124 = vmul.f32 %v3082, %v56
    %v3125 = vmul.f32 %v3082, %v57
    %v3126 = vmul.f32 %v3082, %v58
    %v3127 = vmul.f32 %v3082, %v59
    %v3128 = vmul.f32 %v3082, %v60
    %v3129 = vmul.f32 %v3082, %v61
    %v3130 = vmul.f32 %v3082, %v62
    %v3131 = vmul.f32 %v3082, %v63
    %v3132 = vmul.f32 %v3082, %v64
    %v3133 = vmul.f32 %v3082, %v65
    %v3134 = vmul.f32 %v3082, %v66
    %v3135 = vmul.f32 %v3082, %v67
    %v3136 = vmul.f32 %v3082, %v68
    %v3137 = vmul.f32 %v3082, %v69
    %v3138 = vmul.f32 %v3082, %v70
    %v3139 = vmul.f32 %v3082, %v71
    %v3140 = vmul.f32 %v3082, %v72
    %v3141 = vmul.f32 %v3082, %v73
    %v3142 = vmul.f32 %v3082, %v74
    %v3143 = vmul.f32 %v3082, %v75
    %v3144 = vmul.f32 %v3082, %v76
    %v3145 = vmul.f32 %v3082, %v77
    %v3146 = vmul.f32 %v3082, %v78
    %v3147 = vmul.f32 %v3082, %v79
    %v3148 = vmul.f32 %v3082, %v80
    %v3149 = vmul.f32 %v3082, %v81
    %v3150 = vmul.f32 %v3082, %v82
    %v3151 = vmul.f32 %v3082, %v83
    %v3152 = vmul.f32 %v3082, %v84
    %v3153 = vmul.f32 %v3082, %v85
    %v3154 = vmul.f32 %v3082, %v86
    %v3155 = vmul.f32 %v3082, %v87
    %v3156 = vmul.f32 %v3082, %v88
    %v3157 = vmul.f32 %v3082, %v89
    %v3158 = vmul.f32 %v3082, %v90
    %v3159 = vmul.f32 %v3082, %v91
    %v3160 = vmul.f32 %v3082, %v92
    %v3161 = vmul.f32 %v3082, %v93
    %v3162 = vmul.f32 %v3082, %v94
    %v3163 = vmul.f32 %v3082, %v95
    %v3164 = vmul.f32 %v3082, %v96
    %v3165 = vmul.f32 %v3082, %v97
    %v3166 = vmul.f32 %v3082, %v98
    %v3167 = vmul.f32 %v3082, %v99
    %v3168 = vmul.f32 %v3082, %v100
    %v3169 = vmul.f32 %v3082, %v101
    %v3170 = vmul.f32 %v3082, %v102
    %v3171 = vmul.f32 %v3082, %v103
    %v3172 = vmul.f32 %v3082, %v104
    %v3173 = vmul.f32 %v3082, %v105
    %v3174 = vmul.f32 %v3082, %v106
    %v3175 = vmul.f32 %v3082, %v107
    %v3176 = vmul.f32 %v3082, %v108
    %v3177 = vmul.f32 %v3082, %v109
    %v3178 = vmul.f32 %v3082, %v110
    %v3179 = vmul.f32 %v3082, %v111
    %v3180 = vmul.f32 %v3082, %v112
    %v3181 = vmul.f32 %v3082, %v113
    %v3182 = vmul.f32 %v3082, %v114
    %v3183 = vmul.f32 %v3082, %v115
    %v3184 = vmul.f32 %v3082, %v116
    %v3185 = vmul.f32 %v3082, %v117
    %v3186 = vmul.f32 %v3082, %v118
    %v3187 = vmul.f32 %v3082, %v119
    %v3188 = vmul.f32 %v3082, %v120
    %v3189 = vmul.f32 %v3082, %v121
    %v3190 = vmul.f32 %v3082, %v122
    %v3191 = vmul.f32 %v3082, %v123
    %v3192 = vmul.f32 %v3082, %v124
    %v3193 = vmul.f32 %v3082, %v125
    %v3194 = vmul.f32 %v3082, %v126
    %v3195 = vmul.f32 %v3082, %v127
    %v3196 = vmul.f32 %v3082, %v128
    %v3197 = vmul.f32 %v3082, %v129
    %v3198 = vmul.f32 %v3082, %v130
    %v3199 = vmul.f32 %v3082, %v131
    %v3200 = vmul.f32 %v3082, %v132
    %v3201 = vmul.f32 %v3082, %v133
    %v3202 = vmul.f32 %v3082, %v134
    %v3203 = vmul.f32 %v3082, %v135
    %v3204 = vmul.f32 %v3082, %v136
    %v3205 = vmul.f32 %v3082, %v137
    %v3206 = vmul.f32 %v3082, %v138
    %v3207 = vmul.f32 %v3082, %v139
    %v3208 = vmul.f32 %v3082, %v140
    %v3209 = vmul.f32 %v3082, %v141
    %v3210 = vmul.f32 %v3082, %v142
    %v3211 = vmul.f32 %v3082, %v143
    %v3212 = vmul.f32 %v3082, %v144
    %v3213 = vmul.f32 %v3082, %v145
    %v3214 = vmul.f32 %v3083, %v806
    %v3215 = vmul.f32 %v3083, %v807
    %v3216 = vmul.f32 %v3083, %v808
    %v3217 = vmul.f32 %v3083, %v809
    %v3218 = vmul.f32 %v3083, %v810
    %v3219 = vmul.f32 %v3083, %v811
    %v3220 = vmul.f32 %v3083, %v812
    %v3221 = vmul.f32 %v3083, %v813
    %v3222 = vmul.f32 %v3083, %v814
    %v3223 = vmul.f32 %v3083, %v815
    %v3224 = vmul.f32 %v3083, %v816
    %v3225 = vmul.f32 %v3083, %v817
    %v3226 = vmul.f32 %v3083, %v818
    %v3227 = vmul.f32 %v3083, %v819
    %v3228 = vmul.f32 %v3083, %v820
    %v3229 = vmul.f32 %v3083, %v821
    %v3230 = vmul.f32 %v3083, %v822
    %v3231 = vmul.f32 %v3083, %v823
    %v3232 = vmul.f32 %v3083, %v824
    %v3233 = vmul.f32 %v3083, %v825
    %v3234 = vmul.f32 %v3083, %v826
    %v3235 = vmul.f32 %v3083, %v827
    %v3236 = vmul.f32 %v3083, %v828
    %v3237 = vmul.f32 %v3083, %v829
    %v3238 = vmul.f32 %v3083, %v830
    %v3239 = vmul.f32 %v3083, %v831
    %v3240 = vmul.f32 %v3083, %v832
    %v3241 = vmul.f32 %v3083, %v833
    %v3242 = vmul.f32 %v3083, %v834
    %v3243 = vmul.f32 %v3083, %v835
    %v3244 = vmul.f32 %v3083, %v836
    %v3245 = vmul.f32 %v3083, %v837
    %v3246 = vmul.f32 %v3083, %v838
    %v3247 = vmul.f32 %v3083, %v839
    %v3248 = vmul.f32 %v3083, %v840
    %v3249 = vmul.f32 %v3083, %v841
    %v3250 = vmul.f32 %v3083, %v842
    %v3251 = vmul.f32 %v3083, %v843
    %v3252 = vmul.f32 %v3083, %v844
    %v3253 = vmul.f32 %v3083, %v845
    %v3254 = vmul.f32 %v3083, %v846
    %v3255 = vmul.f32 %v3083, %v847
    %v3256 = vmul.f32 %v3083, %v848
    %v3257 = vmul.f32 %v3083, %v849
    %v3258 = vmul.f32 %v3083, %v850
    %v3259 = vmul.f32 %v3083, %v851
    %v3260 = vmul.f32 %v3083, %v852
    %v3261 = vmul.f32 %v3083, %v853
    %v3262 = vmul.f32 %v3083, %v854
    %v3263 = vmul.f32 %v3083, %v855
    %v3264 = vmul.f32 %v3083, %v856
    %v3265 = vmul.f32 %v3083, %v857
    %v3266 = vmul.f32 %v3083, %v858
    %v3267 = vmul.f32 %v3083, %v859
    %v3268 = vmul.f32 %v3083, %v860
    %v3269 = vmul.f32 %v3083, %v861
    %v3270 = vmul.f32 %v3083, %v862
    %v3271 = vmul.f32 %v3083, %v863
    %v3272 = vmul.f32 %v3083, %v864
    %v3273 = vmul.f32 %v3083, %v865
    %v3274 = vmul.f32 %v3083, %v866
    %v3275 = vmul.f32 %v3083, %v867
    %v3276 = vmul.f32 %v3083, %v868
    %v3277 = vmul.f32 %v3083, %v869
    %v3278 = vmul.f32 %v3083, %v870
    %v3279 = vmul.f32 %v3083, %v871
    %v3280 = vmul.f32 %v3083, %v872
    %v3281 = vmul.f32 %v3083, %v873
    %v3282 = vmul.f32 %v3083, %v874
    %v3283 = vmul.f32 %v3083, %v875
    %v3284 = vmul.f32 %v3083, %v876
    %v3285 = vmul.f32 %v3083, %v877
    %v3286 = vmul.f32 %v3083, %v878
    %v3287 = vmul.f32 %v3083, %v879
    %v3288 = vmul.f32 %v3083, %v880
    %v3289 = vmul.f32 %v3083, %v881
    %v3290 = vmul.f32 %v3083, %v882
    %v3291 = vmul.f32 %v3083, %v883
    %v3292 = vmul.f32 %v3083, %v884
    %v3293 = vmul.f32 %v3083, %v885
    %v3294 = vmul.f32 %v3083, %v886
    %v3295 = vmul.f32 %v3083, %v887
    %v3296 = vmul.f32 %v3083, %v888
    %v3297 = vmul.f32 %v3083, %v889
    %v3298 = vmul.f32 %v3083, %v890
    %v3299 = vmul.f32 %v3083, %v891
    %v3300 = vmul.f32 %v3083, %v892
    %v3301 = vmul.f32 %v3083, %v893
    %v3302 = vmul.f32 %v3083, %v894
    %v3303 = vmul.f32 %v3083, %v895
    %v3304 = vmul.f32 %v3083, %v896
    %v3305 = vmul.f32 %v3083, %v897
    %v3306 = vmul.f32 %v3083, %v898
    %v3307 = vmul.f32 %v3083, %v899
    %v3308 = vmul.f32 %v3083, %v900
    %v3309 = vmul.f32 %v3083, %v901
    %v3310 = vmul.f32 %v3083, %v902
    %v3311 = vmul.f32 %v3083, %v903
    %v3312 = vmul.f32 %v3083, %v904
    %v3313 = vmul.f32 %v3083, %v905
    %v3314 = vmul.f32 %v3083, %v906
    %v3315 = vmul.f32 %v3083, %v907
    %v3316 = vmul.f32 %v3083, %v908
    %v3317 = vmul.f32 %v3083, %v909
    %v3318 = vmul.f32 %v3083, %v910
    %v3319 = vmul.f32 %v3083, %v911
    %v3320 = vmul.f32 %v3083, %v912
    %v3321 = vmul.f32 %v3083, %v913
    %v3322 = vmul.f32 %v3083, %v914
    %v3323 = vmul.f32 %v3083, %v915
    %v3324 = vmul.f32 %v3083, %v916
    %v3325 = vmul.f32 %v3083, %v917
    %v3326 = vmul.f32 %v3083, %v918
    %v3327 = vmul.f32 %v3083, %v919
    %v3328 = vmul.f32 %v3083, %v920
    %v3329 = vmul.f32 %v3083, %v921
    %v3330 = vmul.f32 %v3083, %v922
    %v3331 = vmul.f32 %v3083, %v923
    %v3332 = vmul.f32 %v3083, %v924
    %v3333 = vmul.f32 %v3083, %v925
    %v3334 = vmul.f32 %v3083, %v926
    %v3335 = vmul.f32 %v3083, %v927
    %v3336 = vmul.f32 %v3083, %v928
    %v3337 = vmul.f32 %v3083, %v929
    %v3338 = vmul.f32 %v3083, %v930
    %v3339 = vmul.f32 %v3083, %v931
    %v3340 = vmul.f32 %v3083, %v932
    %v3341 = vmul.f32 %v3083, %v933
    %v3342 = vadd.f32 %v3086, %v3214
    %v3343 = vadd.f32 %v3087, %v3215
    %v3344 = vadd.f32 %v3088, %v3216
    %v3345 = vadd.f32 %v3089, %v3217
    %v3346 = vadd.f32 %v3090, %v3218
    %v3347 = vadd.f32 %v3091, %v3219
    %v3348 = vadd.f32 %v3092, %v3220
    %v3349 = vadd.f32 %v3093, %v3221
    %v3350 = vadd.f32 %v3094, %v3222
    %v3351 = vadd.f32 %v3095, %v3223
    %v3352 = vadd.f32 %v3096, %v3224
    %v3353 = vadd.f32 %v3097, %v3225
    %v3354 = vadd.f32 %v3098, %v3226
    %v3355 = vadd.f32 %v3099, %v3227
    %v3356 = vadd.f32 %v3100, %v3228
    %v3357 = vadd.f32 %v3101, %v3229
    %v3358 = vadd.f32 %v3102, %v3230
    %v3359 = vadd.f32 %v3103, %v3231
    %v3360 = vadd.f32 %v3104, %v3232
    %v3361 = vadd.f32 %v3105, %v3233
    %v3362 = vadd.f32 %v3106, %v3234
    %v3363 = vadd.f32 %v3107, %v3235
    %v3364 = vadd.f32 %v3108, %v3236
    %v3365 = vadd.f32 %v3109, %v3237
    %v3366 = vadd.f32 %v3110, %v3238
    %v3367 = vadd.f32 %v3111, %v3239
    %v3368 = vadd.f32 %v3112, %v3240
    %v3369 = vadd.f32 %v3113, %v3241
    %v3370 = vadd.f32 %v3114, %v3242
    %v3371 = vadd.f32 %v3115, %v3243
    %v3372 = vadd.f32 %v3116, %v3244
    %v3373 = vadd.f32 %v3117, %v3245
    %v3374 = vadd.f32 %v3118, %v3246
    %v3375 = vadd.f32 %v3119, %v3247
    %v3376 = vadd.f32 %v3120, %v3248
    %v3377 = vadd.f32 %v3121, %v3249
    %v3378 = vadd.f32 %v3122, %v3250
    %v3379 = vadd.f32 %v3123, %v3251
    %v3380 = vadd.f32 %v3124, %v3252
    %v3381 = vadd.f32 %v3125, %v3253
    %v3382 = vadd.f32 %v3126, %v3254
    %v3383 = vadd.f32 %v3127, %v3255
    %v3384 = vadd.f32 %v3128, %v3256
    %v3385 = vadd.f32 %v3129, %v3257
    %v3386 = vadd.f32 %v3130, %v3258
    %v3387 = vadd.f32 %v3131, %v3259
    %v3388 = vadd.f32 %v3132, %v3260
    %v3389 = vadd.f32 %v3133, %v3261
    %v3390 = vadd.f32 %v3134, %v3262
    %v3391 = vadd.f32 %v3135, %v3263
    %v3392 = vadd.f32 %v3136, %v3264
    %v3393 = vadd.f32 %v3137, %v3265
    %v3394 = vadd.f32 %v3138, %v3266
    %v3395 = vadd.f32 %v3139, %v3267
    %v3396 = vadd.f32 %v3140, %v3268
    %v3397 = vadd.f32 %v3141, %v3269
    %v3398 = vadd.f32 %v3142, %v3270
    %v3399 = vadd.f32 %v3143, %v3271
    %v3400 = vadd.f32 %v3144, %v3272
    %v3401 = vadd.f32 %v3145, %v3273
    %v3402 = vadd.f32 %v3146, %v3274
    %v3403 = vadd.f32 %v3147, %v3275
    %v3404 = vadd.f32 %v3148, %v3276
    %v3405 = vadd.f32 %v3149, %v3277
    %v3406 = vadd.f32 %v3150, %v3278
    %v3407 = vadd.f32 %v3151, %v3279
    %v3408 = vadd.f32 %v3152, %v3280
    %v3409 = vadd.f32 %v3153, %v3281
    %v3410 = vadd.f32 %v3154, %v3282
    %v3411 = vadd.f32 %v3155, %v3283
    %v3412 = vadd.f32 %v3156, %v3284
    %v3413 = vadd.f32 %v3157, %v3285
    %v3414 = vadd.f32 %v3158, %v3286
    %v3415 = vadd.f32 %v3159, %v3287
    %v3416 = vadd.f32 %v3160, %v3288
    %v3417 = vadd.f32 %v3161, %v3289
    %v3418 = vadd.f32 %v3162, %v3290
    %v3419 = vadd.f32 %v3163, %v3291
    %v3420 = vadd.f32 %v3164, %v3292
    %v3421 = vadd.f32 %v3165, %v3293
    %v3422 = vadd.f32 %v3166, %v3294
    %v3423 = vadd.f32 %v3167, %v3295
    %v3424 = vadd.f32 %v3168, %v3296
    %v3425 = vadd.f32 %v3169, %v3297
    %v3426 = vadd.f32 %v3170, %v3298
    %v3427 = vadd.f32 %v3171, %v3299
    %v3428 = vadd.f32 %v3172, %v3300
    %v3429 = vadd.f32 %v3173, %v3301
    %v3430 = vadd.f32 %v3174, %v3302
    %v3431 = vadd.f32 %v3175, %v3303
    %v3432 = vadd.f32 %v3176, %v3304
    %v3433 = vadd.f32 %v3177, %v3305
    %v3434 = vadd.f32 %v3178, %v3306
    %v3435 = vadd.f32 %v3179, %v3307
    %v3436 = vadd.f32 %v3180, %v3308
    %v3437 = vadd.f32 %v3181, %v3309
    %v3438 = vadd.f32 %v3182, %v3310
    %v3439 = vadd.f32 %v3183, %v3311
    %v3440 = vadd.f32 %v3184, %v3312
    %v3441 = vadd.f32 %v3185, %v3313
    %v3442 = vadd.f32 %v3186, %v3314
    %v3443 = vadd.f32 %v3187, %v3315
    %v3444 = vadd.f32 %v3188, %v3316
    %v3445 = vadd.f32 %v3189, %v3317
    %v3446 = vadd.f32 %v3190, %v3318
    %v3447 = vadd.f32 %v3191, %v3319
    %v3448 = vadd.f32 %v3192, %v3320
    %v3449 = vadd.f32 %v3193, %v3321
    %v3450 = vadd.f32 %v3194, %v3322
    %v3451 = vadd.f32 %v3195, %v3323
    %v3452 = vadd.f32 %v3196, %v3324
    %v3453 = vadd.f32 %v3197, %v3325
    %v3454 = vadd.f32 %v3198, %v3326
    %v3455 = vadd.f32 %v3199, %v3327
    %v3456 = vadd.f32 %v3200, %v3328
    %v3457 = vadd.f32 %v3201, %v3329
    %v3458 = vadd.f32 %v3202, %v3330
    %v3459 = vadd.f32 %v3203, %v3331
    %v3460 = vadd.f32 %v3204, %v3332
    %v3461 = vadd.f32 %v3205, %v3333
    %v3462 = vadd.f32 %v3206, %v3334
    %v3463 = vadd.f32 %v3207, %v3335
    %v3464 = vadd.f32 %v3208, %v3336
    %v3465 = vadd.f32 %v3209, %v3337
    %v3466 = vadd.f32 %v3210, %v3338
    %v3467 = vadd.f32 %v3211, %v3339
    %v3468 = vadd.f32 %v3212, %v3340
    %v3469 = vadd.f32 %v3213, %v3341
    %v3470 = vmul.f32 %v3084, %v1554
    %v3471 = vmul.f32 %v3084, %v1555
    %v3472 = vmul.f32 %v3084, %v1556
    %v3473 = vmul.f32 %v3084, %v1557
    %v3474 = vmul.f32 %v3084, %v1558
    %v3475 = vmul.f32 %v3084, %v1559
    %v3476 = vmul.f32 %v3084, %v1560
    %v3477 = vmul.f32 %v3084, %v1561
    %v3478 = vmul.f32 %v3084, %v1562
    %v3479 = vmul.f32 %v3084, %v1563
    %v3480 = vmul.f32 %v3084, %v1564
    %v3481 = vmul.f32 %v3084, %v1565
    %v3482 = vmul.f32 %v3084, %v1566
    %v3483 = vmul.f32 %v3084, %v1567
    %v3484 = vmul.f32 %v3084, %v1568
    %v3485 = vmul.f32 %v3084, %v1569
    %v3486 = vmul.f32 %v3084, %v1570
    %v3487 = vmul.f32 %v3084, %v1571
    %v3488 = vmul.f32 %v3084, %v1572
    %v3489 = vmul.f32 %v3084, %v1573
    %v3490 = vmul.f32 %v3084, %v1574
    %v3491 = vmul.f32 %v3084, %v1575
    %v3492 = vmul.f32 %v3084, %v1576
    %v3493 = vmul.f32 %v3084, %v1577
    %v3494 = vmul.f32 %v3084, %v1578
    %v3495 = vmul.f32 %v3084, %v1579
    %v3496 = vmul.f32 %v3084, %v1580
    %v3497 = vmul.f32 %v3084, %v1581
    %v3498 = vmul.f32 %v3084, %v1582
    %v3499 = vmul.f32 %v3084, %v1583
    %v3500 = vmul.f32 %v3084, %v1584
    %v3501 = vmul.f32 %v3084, %v1585
    %v3502 = vmul.f32 %v3084, %v1586
    %v3503 = vmul.f32 %v3084, %v1587
    %v3504 = vmul.f32 %v3084, %v1588
    %v3505 = vmul.f32 %v3084, %v1589
    %v3506 = vmul.f32 %v3084, %v1590
    %v3507 = vmul.f32 %v3084, %v1591
    %v3508 = vmul.f32 %v3084, %v1592
    %v3509 = vmul.f32 %v3084, %v1593
    %v3510 = vmul.f32 %v3084, %v1594
    %v3511 = vmul.f32 %v3084, %v1595
    %v3512 = vmul.f32 %v3084, %v1596
    %v3513 = vmul.f32 %v3084, %v1597
    %v3514 = vmul.f32 %v3084, %v1598
    %v3515 = vmul.f32 %v3084, %v1599
    %v3516 = vmul.f32 %v3084, %v1600
    %v3517 = vmul.f32 %v3084, %v1601
    %v3518 = vmul.f32 %v3084, %v1602
    %v3519 = vmul.f32 %v3084, %v1603
    %v3520 = vmul.f32 %v3084, %v1604
    %v3521 = vmul.f32 %v3084, %v1605
    %v3522 = vmul.f32 %v3084, %v1606
    %v3523 = vmul.f32 %v3084, %v1607
    %v3524 = vmul.f32 %v3084, %v1608
    %v3525 = vmul.f32 %v3084, %v1609
    %v3526 = vmul.f32 %v3084, %v1610
    %v3527 = vmul.f32 %v3084, %v1611
    %v3528 = vmul.f32 %v3084, %v1612
    %v3529 = vmul.f32 %v3084, %v1613
    %v3530 = vmul.f32 %v3084, %v1614
    %v3531 = vmul.f32 %v3084, %v1615
    %v3532 = vmul.f32 %v3084, %v1616
    %v3533 = vmul.f32 %v3084, %v1617
    %v3534 = vmul.f32 %v3084, %v1618
    %v3535 = vmul.f32 %v3084, %v1619
    %v3536 = vmul.f32 %v3084, %v1620
    %v3537 = vmul.f32 %v3084, %v1621
    %v3538 = vmul.f32 %v3084, %v1622
    %v3539 = vmul.f32 %v3084, %v1623
    %v3540 = vmul.f32 %v3084, %v1624
    %v3541 = vmul.f32 %v3084, %v1625
    %v3542 = vmul.f32 %v3084, %v1626
    %v3543 = vmul.f32 %v3084, %v1627
    %v3544 = vmul.f32 %v3084, %v1628
    %v3545 = vmul.f32 %v3084, %v1629
    %v3546 = vmul.f32 %v3084, %v1630
    %v3547 = vmul.f32 %v3084, %v1631
    %v3548 = vmul.f32 %v3084, %v1632
    %v3549 = vmul.f32 %v3084, %v1633
    %v3550 = vmul.f32 %v3084, %v1634
    %v3551 = vmul.f32 %v3084, %v1635
    %v3552 = vmul.f32 %v3084, %v1636
    %v3553 = vmul.f32 %v3084, %v1637
    %v3554 = vmul.f32 %v3084, %v1638
    %v3555 = vmul.f32 %v3084, %v1639
    %v3556 = vmul.f32 %v3084, %v1640
    %v3557 = vmul.f32 %v3084, %v1641
    %v3558 = vmul.f32 %v3084, %v1642
    %v3559 = vmul.f32 %v3084, %v1643
    %v3560 = vmul.f32 %v3084, %v1644
    %v3561 = vmul.f32 %v3084, %v1645
    %v3562 = vmul.f32 %v3084, %v1646
    %v3563 = vmul.f32 %v3084, %v1647
    %v3564 = vmul.f32 %v3084, %v1648
    %v3565 = vmul.f32 %v3084, %v1649
    %v3566 = vmul.f32 %v3084, %v1650
    %v3567 = vmul.f32 %v3084, %v1651
    %v3568 = vmul.f32 %v3084, %v1652
    %v3569 = vmul.f32 %v3084, %v1653
    %v3570 = vmul.f32 %v3084, %v1654
    %v3571 = vmul.f32 %v3084, %v1655
    %v3572 = vmul.f32 %v3084, %v1656
    %v3573 = vmul.f32 %v3084, %v1657
    %v3574 = vmul.f32 %v3084, %v1658
    %v3575 = vmul.f32 %v3084, %v1659
    %v3576 = vmul.f32 %v3084, %v1660
    %v3577 = vmul.f32 %v3084, %v1661
    %v3578 = vmul.f32 %v3084, %v1662
    %v3579 = vmul.f32 %v3084, %v1663
    %v3580 = vmul.f32 %v3084, %v1664
    %v3581 = vmul.f32 %v3084, %v1665
    %v3582 = vmul.f32 %v3084, %v1666
    %v3583 = vmul.f32 %v3084, %v1667
    %v3584 = vmul.f32 %v3084, %v1668
    %v3585 = vmul.f32 %v3084, %v1669
    %v3586 = vmul.f32 %v3084, %v1670
    %v3587 = vmul.f32 %v3084, %v1671
    %v3588 = vmul.f32 %v3084, %v1672
    %v3589 = vmul.f32 %v3084, %v1673
    %v3590 = vmul.f32 %v3084, %v1674
    %v3591 = vmul.f32 %v3084, %v1675
    %v3592 = vmul.f32 %v3084, %v1676
    %v3593 = vmul.f32 %v3084, %v1677
    %v3594 = vmul.f32 %v3084, %v1678
    %v3595 = vmul.f32 %v3084, %v1679
    %v3596 = vmul.f32 %v3084, %v1680
    %v3597 = vmul.f32 %v3084, %v1681
    %v3598 = vadd.f32 %v3342, %v3470
    %v3599 = vadd.f32 %v3343, %v3471
    %v3600 = vadd.f32 %v3344, %v3472
    %v3601 = vadd.f32 %v3345, %v3473
    %v3602 = vadd.f32 %v3346, %v3474
    %v3603 = vadd.f32 %v3347, %v3475
    %v3604 = vadd.f32 %v3348, %v3476
    %v3605 = vadd.f32 %v3349, %v3477
    %v3606 = vadd.f32 %v3350, %v3478
    %v3607 = vadd.f32 %v3351, %v3479
    %v3608 = vadd.f32 %v3352, %v3480
    %v3609 = vadd.f32 %v3353, %v3481
    %v3610 = vadd.f32 %v3354, %v3482
    %v3611 = vadd.f32 %v3355, %v3483
    %v3612 = vadd.f32 %v3356, %v3484
    %v3613 = vadd.f32 %v3357, %v3485
    %v3614 = vadd.f32 %v3358, %v3486
    %v3615 = vadd.f32 %v3359, %v3487
    %v3616 = vadd.f32 %v3360, %v3488
    %v3617 = vadd.f32 %v3361, %v3489
    %v3618 = vadd.f32 %v3362, %v3490
    %v3619 = vadd.f32 %v3363, %v3491
    %v3620 = vadd.f32 %v3364, %v3492
    %v3621 = vadd.f32 %v3365, %v3493
    %v3622 = vadd.f32 %v3366, %v3494
    %v3623 = vadd.f32 %v3367, %v3495
    %v3624 = vadd.f32 %v3368, %v3496
    %v3625 = vadd.f32 %v3369, %v3497
    %v3626 = vadd.f32 %v3370, %v3498
    %v3627 = vadd.f32 %v3371, %v3499
    %v3628 = vadd.f32 %v3372, %v3500
    %v3629 = vadd.f32 %v3373, %v3501
    %v3630 = vadd.f32 %v3374, %v3502
    %v3631 = vadd.f32 %v3375, %v3503
    %v3632 = vadd.f32 %v3376, %v3504
    %v3633 = vadd.f32 %v3377, %v3505
    %v3634 = vadd.f32 %v3378, %v3506
    %v3635 = vadd.f32 %v3379, %v3507
    %v3636 = vadd.f32 %v3380, %v3508
    %v3637 = vadd.f32 %v3381, %v3509
    %v3638 = vadd.f32 %v3382, %v3510
    %v3639 = vadd.f32 %v3383, %v3511
    %v3640 = vadd.f32 %v3384, %v3512
    %v3641 = vadd.f32 %v3385, %v3513
    %v3642 = vadd.f32 %v3386, %v3514
    %v3643 = vadd.f32 %v3387, %v3515
    %v3644 = vadd.f32 %v3388, %v3516
    %v3645 = vadd.f32 %v3389, %v3517
    %v3646 = vadd.f32 %v3390, %v3518
    %v3647 = vadd.f32 %v3391, %v3519
    %v3648 = vadd.f32 %v3392, %v3520
    %v3649 = vadd.f32 %v3393, %v3521
    %v3650 = vadd.f32 %v3394, %v3522
    %v3651 = vadd.f32 %v3395, %v3523
    %v3652 = vadd.f32 %v3396, %v3524
    %v3653 = vadd.f32 %v3397, %v3525
    %v3654 = vadd.f32 %v3398, %v3526
    %v3655 = vadd.f32 %v3399, %v3527
    %v3656 = vadd.f32 %v3400, %v3528
    %v3657 = vadd.f32 %v3401, %v3529
    %v3658 = vadd.f32 %v3402, %v3530
    %v3659 = vadd.f32 %v3403, %v3531
    %v3660 = vadd.f32 %v3404, %v3532
    %v3661 = vadd.f32 %v3405, %v3533
    %v3662 = vadd.f32 %v3406, %v3534
    %v3663 = vadd.f32 %v3407, %v3535
    %v3664 = vadd.f32 %v3408, %v3536
    %v3665 = vadd.f32 %v3409, %v3537
    %v3666 = vadd.f32 %v3410, %v3538
    %v3667 = vadd.f32 %v3411, %v3539
    %v3668 = vadd.f32 %v3412, %v3540
    %v3669 = vadd.f32 %v3413, %v3541
    %v3670 = vadd.f32 %v3414, %v3542
    %v3671 = vadd.f32 %v3415, %v3543
    %v3672 = vadd.f32 %v3416, %v3544
    %v3673 = vadd.f32 %v3417, %v3545
    %v3674 = vadd.f32 %v3418, %v3546
    %v3675 = vadd.f32 %v3419, %v3547
    %v3676 = vadd.f32 %v3420, %v3548
    %v3677 = vadd.f32 %v3421, %v3549
    %v3678 = vadd.f32 %v3422, %v3550
    %v3679 = vadd.f32 %v3423, %v3551
    %v3680 = vadd.f32 %v3424, %v3552
    %v3681 = vadd.f32 %v3425, %v3553
    %v3682 = vadd.f32 %v3426, %v3554
    %v3683 = vadd.f32 %v3427, %v3555
    %v3684 = vadd.f32 %v3428, %v3556
    %v3685 = vadd.f32 %v3429, %v3557
    %v3686 = vadd.f32 %v3430, %v3558
    %v3687 = vadd.f32 %v3431, %v3559
    %v3688 = vadd.f32 %v3432, %v3560
    %v3689 = vadd.f32 %v3433, %v3561
    %v3690 = vadd.f32 %v3434, %v3562
    %v3691 = vadd.f32 %v3435, %v3563
    %v3692 = vadd.f32 %v3436, %v3564
    %v3693 = vadd.f32 %v3437, %v3565
    %v3694 = vadd.f32 %v3438, %v3566
    %v3695 = vadd.f32 %v3439, %v3567
    %v3696 = vadd.f32 %v3440, %v3568
    %v3697 = vadd.f32 %v3441, %v3569
    %v3698 = vadd.f32 %v3442, %v3570
    %v3699 = vadd.f32 %v3443, %v3571
    %v3700 = vadd.f32 %v3444, %v3572
    %v3701 = vadd.f32 %v3445, %v3573
    %v3702 = vadd.f32 %v3446, %v3574
    %v3703 = vadd.f32 %v3447, %v3575
    %v3704 = vadd.f32 %v3448, %v3576
    %v3705 = vadd.f32 %v3449, %v3577
    %v3706 = vadd.f32 %v3450, %v3578
    %v3707 = vadd.f32 %v3451, %v3579
    %v3708 = vadd.f32 %v3452, %v3580
    %v3709 = vadd.f32 %v3453, %v3581
    %v3710 = vadd.f32 %v3454, %v3582
    %v3711 = vadd.f32 %v3455, %v3583
    %v3712 = vadd.f32 %v3456, %v3584
    %v3713 = vadd.f32 %v3457, %v3585
    %v3714 = vadd.f32 %v3458, %v3586
    %v3715 = vadd.f32 %v3459, %v3587
    %v3716 = vadd.f32 %v3460, %v3588
    %v3717 = vadd.f32 %v3461, %v3589
    %v3718 = vadd.f32 %v3462, %v3590
    %v3719 = vadd.f32 %v3463, %v3591
    %v3720 = vadd.f32 %v3464, %v3592
    %v3721 = vadd.f32 %v3465, %v3593
    %v3722 = vadd.f32 %v3466, %v3594
    %v3723 = vadd.f32 %v3467, %v3595
    %v3724 = vadd.f32 %v3468, %v3596
    %v3725 = vadd.f32 %v3469, %v3597
    %v3726 = vmul.f32 %v3085, %v2302
    %v3727 = vmul.f32 %v3085, %v2303
    %v3728 = vmul.f32 %v3085, %v2304
    %v3729 = vmul.f32 %v3085, %v2305
    %v3730 = vmul.f32 %v3085, %v2306
    %v3731 = vmul.f32 %v3085, %v2307
    %v3732 = vmul.f32 %v3085, %v2308
    %v3733 = vmul.f32 %v3085, %v2309
    %v3734 = vmul.f32 %v3085, %v2310
    %v3735 = vmul.f32 %v3085, %v2311
    %v3736 = vmul.f32 %v3085, %v2312
    %v3737 = vmul.f32 %v3085, %v2313
    %v3738 = vmul.f32 %v3085, %v2314
    %v3739 = vmul.f32 %v3085, %v2315
    %v3740 = vmul.f32 %v3085, %v2316
    %v3741 = vmul.f32 %v3085, %v2317
    %v3742 = vmul.f32 %v3085, %v2318
    %v3743 = vmul.f32 %v3085, %v2319
    %v3744 = vmul.f32 %v3085, %v2320
    %v3745 = vmul.f32 %v3085, %v2321
    %v3746 = vmul.f32 %v3085, %v2322
    %v3747 = vmul.f32 %v3085, %v2323
    %v3748 = vmul.f32 %v3085, %v2324
    %v3749 = vmul.f32 %v3085, %v2325
    %v3750 = vmul.f32 %v3085, %v2326
    %v3751 = vmul.f32 %v3085, %v2327
    %v3752 = vmul.f32 %v3085, %v2328
    %v3753 = vmul.f32 %v3085, %v2329
    %v3754 = vmul.f32 %v3085, %v2330
    %v3755 = vmul.f32 %v3085, %v2331
    %v3756 = vmul.f32 %v3085, %v2332
    %v3757 = vmul.f32 %v3085, %v2333
    %v3758 = vmul.f32 %v3085, %v2334
    %v3759 = vmul.f32 %v3085, %v2335
    %v3760 = vmul.f32 %v3085, %v2336
    %v3761 = vmul.f32 %v3085, %v2337
    %v3762 = vmul.f32 %v3085, %v2338
    %v3763 = vmul.f32 %v3085, %v2339
    %v3764 = vmul.f32 %v3085, %v2340
    %v3765 = vmul.f32 %v3085, %v2341
    %v3766 = vmul.f32 %v3085, %v2342
    %v3767 = vmul.f32 %v3085, %v2343
    %v3768 = vmul.f32 %v3085, %v2344
    %v3769 = vmul.f32 %v3085, %v2345
    %v3770 = vmul.f32 %v3085, %v2346
    %v3771 = vmul.f32 %v3085, %v2347
    %v3772 = vmul.f32 %v3085, %v2348
    %v3773 = vmul.f32 %v3085, %v2349
    %v3774 = vmul.f32 %v3085, %v2350
    %v3775 = vmul.f32 %v3085, %v2351
    %v3776 = vmul.f32 %v3085, %v2352
    %v3777 = vmul.f32 %v3085, %v2353
    %v3778 = vmul.f32 %v3085, %v2354
    %v3779 = vmul.f32 %v3085, %v2355
    %v3780 = vmul.f32 %v3085, %v2356
    %v3781 = vmul.f32 %v3085, %v2357
    %v3782 = vmul.f32 %v3085, %v2358
    %v3783 = vmul.f32 %v3085, %v2359
    %v3784 = vmul.f32 %v3085, %v2360
    %v3785 = vmul.f32 %v3085, %v2361
    %v3786 = vmul.f32 %v3085, %v2362
    %v3787 = vmul.f32 %v3085, %v2363
    %v3788 = vmul.f32 %v3085, %v2364
    %v3789 = vmul.f32 %v3085, %v2365
    %v3790 = vmul.f32 %v3085, %v2366
    %v3791 = vmul.f32 %v3085, %v2367
    %v3792 = vmul.f32 %v3085, %v2368
    %v3793 = vmul.f32 %v3085, %v2369
    %v3794 = vmul.f32 %v3085, %v2370
    %v3795 = vmul.f32 %v3085, %v2371
    %v3796 = vmul.f32 %v3085, %v2372
    %v3797 = vmul.f32 %v3085, %v2373
    %v3798 = vmul.f32 %v3085, %v2374
    %v3799 = vmul.f32 %v3085, %v2375
    %v3800 = vmul.f32 %v3085, %v2376
    %v3801 = vmul.f32 %v3085, %v2377
    %v3802 = vmul.f32 %v3085, %v2378
    %v3803 = vmul.f32 %v3085, %v2379
    %v3804 = vmul.f32 %v3085, %v2380
    %v3805 = vmul.f32 %v3085, %v2381
    %v3806 = vmul.f32 %v3085, %v2382
    %v3807 = vmul.f32 %v3085, %v2383
    %v3808 = vmul.f32 %v3085, %v2384
    %v3809 = vmul.f32 %v3085, %v2385
    %v3810 = vmul.f32 %v3085, %v2386
    %v3811 = vmul.f32 %v3085, %v2387
    %v3812 = vmul.f32 %v3085, %v2388
    %v3813 = vmul.f32 %v3085, %v2389
    %v3814 = vmul.f32 %v3085, %v2390
    %v3815 = vmul.f32 %v3085, %v2391
    %v3816 = vmul.f32 %v3085, %v2392
    %v3817 = vmul.f32 %v3085, %v2393
    %v3818 = vmul.f32 %v3085, %v2394
    %v3819 = vmul.f32 %v3085, %v2395
    %v3820 = vmul.f32 %v3085, %v2396
    %v3821 = vmul.f32 %v3085, %v2397
    %v3822 = vmul.f32 %v3085, %v2398
    %v3823 = vmul.f32 %v3085, %v2399
    %v3824 = vmul.f32 %v3085, %v2400
    %v3825 = vmul.f32 %v3085, %v2401
    %v3826 = vmul.f32 %v3085, %v2402
    %v3827 = vmul.f32 %v3085, %v2403
    %v3828 = vmul.f32 %v3085, %v2404
    %v3829 = vmul.f32 %v3085, %v2405
    %v3830 = vmul.f32 %v3085, %v2406
    %v3831 = vmul.f32 %v3085, %v2407
    %v3832 = vmul.f32 %v3085, %v2408
    %v3833 = vmul.f32 %v3085, %v2409
    %v3834 = vmul.f32 %v3085, %v2410
    %v3835 = vmul.f32 %v3085, %v2411
    %v3836 = vmul.f32 %v3085, %v2412
    %v3837 = vmul.f32 %v3085, %v2413
    %v3838 = vmul.f32 %v3085, %v2414
    %v3839 = vmul.f32 %v3085, %v2415
    %v3840 = vmul.f32 %v3085, %v2416
    %v3841 = vmul.f32 %v3085, %v2417
    %v3842 = vmul.f32 %v3085, %v2418
    %v3843 = vmul.f32 %v3085, %v2419
    %v3844 = vmul.f32 %v3085, %v2420
    %v3845 = vmul.f32 %v3085, %v2421
    %v3846 = vmul.f32 %v3085, %v2422
    %v3847 = vmul.f32 %v3085, %v2423
    %v3848 = vmul.f32 %v3085, %v2424
    %v3849 = vmul.f32 %v3085, %v2425
    %v3850 = vmul.f32 %v3085, %v2426
    %v3851 = vmul.f32 %v3085, %v2427
    %v3852 = vmul.f32 %v3085, %v2428
    %v3853 = vmul.f32 %v3085, %v2429
    %v3854 = vadd.f32 %v3598, %v3726
    %v3855 = vadd.f32 %v3599, %v3727
    %v3856 = vadd.f32 %v3600, %v3728
    %v3857 = vadd.f32 %v3601, %v3729
    %v3858 = vadd.f32 %v3602, %v3730
    %v3859 = vadd.f32 %v3603, %v3731
    %v3860 = vadd.f32 %v3604, %v3732
    %v3861 = vadd.f32 %v3605, %v3733
    %v3862 = vadd.f32 %v3606, %v3734
    %v3863 = vadd.f32 %v3607, %v3735
    %v3864 = vadd.f32 %v3608, %v3736
    %v3865 = vadd.f32 %v3609, %v3737
    %v3866 = vadd.f32 %v3610, %v3738
    %v3867 = vadd.f32 %v3611, %v3739
    %v3868 = vadd.f32 %v3612, %v3740
    %v3869 = vadd.f32 %v3613, %v3741
    %v3870 = vadd.f32 %v3614, %v3742
    %v3871 = vadd.f32 %v3615, %v3743
    %v3872 = vadd.f32 %v3616, %v3744
    %v3873 = vadd.f32 %v3617, %v3745
    %v3874 = vadd.f32 %v3618, %v3746
    %v3875 = vadd.f32 %v3619, %v3747
    %v3876 = vadd.f32 %v3620, %v3748
    %v3877 = vadd.f32 %v3621, %v3749
    %v3878 = vadd.f32 %v3622, %v3750
    %v3879 = vadd.f32 %v3623, %v3751
    %v3880 = vadd.f32 %v3624, %v3752
    %v3881 = vadd.f32 %v3625, %v3753
    %v3882 = vadd.f32 %v3626, %v3754
    %v3883 = vadd.f32 %v3627, %v3755
    %v3884 = vadd.f32 %v3628, %v3756
    %v3885 = vadd.f32 %v3629, %v3757
    %v3886 = vadd.f32 %v3630, %v3758
    %v3887 = vadd.f32 %v3631, %v3759
    %v3888 = vadd.f32 %v3632, %v3760
    %v3889 = vadd.f32 %v3633, %v3761
    %v3890 = vadd.f32 %v3634, %v3762
    %v3891 = vadd.f32 %v3635, %v3763
    %v3892 = vadd.f32 %v3636, %v3764
    %v3893 = vadd.f32 %v3637, %v3765
    %v3894 = vadd.f32 %v3638, %v3766
    %v3895 = vadd.f32 %v3639, %v3767
    %v3896 = vadd.f32 %v3640, %v3768
    %v3897 = vadd.f32 %v3641, %v3769
    %v3898 = vadd.f32 %v3642, %v3770
    %v3899 = vadd.f32 %v3643, %v3771
    %v3900 = vadd.f32 %v3644, %v3772
    %v3901 = vadd.f32 %v3645, %v3773
    %v3902 = vadd.f32 %v3646, %v3774
    %v3903 = vadd.f32 %v3647, %v3775
    %v3904 = vadd.f32 %v3648, %v3776
    %v3905 = vadd.f32 %v3649, %v3777
    %v3906 = vadd.f32 %v3650, %v3778
    %v3907 = vadd.f32 %v3651, %v3779
    %v3908 = vadd.f32 %v3652, %v3780
    %v3909 = vadd.f32 %v3653, %v3781
    %v3910 = vadd.f32 %v3654, %v3782
    %v3911 = vadd.f32 %v3655, %v3783
    %v3912 = vadd.f32 %v3656, %v3784
    %v3913 = vadd.f32 %v3657, %v3785
    %v3914 = vadd.f32 %v3658, %v3786
    %v3915 = vadd.f32 %v3659, %v3787
    %v3916 = vadd.f32 %v3660, %v3788
    %v3917 = vadd.f32 %v3661, %v3789
    %v3918 = vadd.f32 %v3662, %v3790
    %v3919 = vadd.f32 %v3663, %v3791
    %v3920 = vadd.f32 %v3664, %v3792
    %v3921 = vadd.f32 %v3665, %v3793
    %v3922 = vadd.f32 %v3666, %v3794
    %v3923 = vadd.f32 %v3667, %v3795
    %v3924 = vadd.f32 %v3668, %v3796
    %v3925 = vadd.f32 %v3669, %v3797
    %v3926 = vadd.f32 %v3670, %v3798
    %v3927 = vadd.f32 %v3671, %v3799
    %v3928 = vadd.f32 %v3672, %v3800
    %v3929 = vadd.f32 %v3673, %v3801
    %v3930 = vadd.f32 %v3674, %v3802
    %v3931 = vadd.f32 %v3675, %v3803
    %v3932 = vadd.f32 %v3676, %v3804
    %v3933 = vadd.f32 %v3677, %v3805
    %v3934 = vadd.f32 %v3678, %v3806
    %v3935 = vadd.f32 %v3679, %v3807
    %v3936 = vadd.f32 %v3680, %v3808
    %v3937 = vadd.f32 %v3681, %v3809
    %v3938 = vadd.f32 %v3682, %v3810
    %v3939 = vadd.f32 %v3683, %v3811
    %v3940 = vadd.f32 %v3684, %v3812
    %v3941 = vadd.f32 %v3685, %v3813
    %v3942 = vadd.f32 %v3686, %v3814
    %v3943 = vadd.f32 %v3687, %v3815
    %v3944 = vadd.f32 %v3688, %v3816
    %v3945 = vadd.f32 %v3689, %v3817
    %v3946 = vadd.f32 %v3690, %v3818
    %v3947 = vadd.f32 %v3691, %v3819
    %v3948 = vadd.f32 %v3692, %v3820
    %v3949 = vadd.f32 %v3693, %v3821
    %v3950 = vadd.f32 %v3694, %v3822
    %v3951 = vadd.f32 %v3695, %v3823
    %v3952 = vadd.f32 %v3696, %v3824
    %v3953 = vadd.f32 %v3697, %v3825
    %v3954 = vadd.f32 %v3698, %v3826
    %v3955 = vadd.f32 %v3699, %v3827
    %v3956 = vadd.f32 %v3700, %v3828
    %v3957 = vadd.f32 %v3701, %v3829
    %v3958 = vadd.f32 %v3702, %v3830
    %v3959 = vadd.f32 %v3703, %v3831
    %v3960 = vadd.f32 %v3704, %v3832
    %v3961 = vadd.f32 %v3705, %v3833
    %v3962 = vadd.f32 %v3706, %v3834
    %v3963 = vadd.f32 %v3707, %v3835
    %v3964 = vadd.f32 %v3708, %v3836
    %v3965 = vadd.f32 %v3709, %v3837
    %v3966 = vadd.f32 %v3710, %v3838
    %v3967 = vadd.f32 %v3711, %v3839
    %v3968 = vadd.f32 %v3712, %v3840
    %v3969 = vadd.f32 %v3713, %v3841
    %v3970 = vadd.f32 %v3714, %v3842
    %v3971 = vadd.f32 %v3715, %v3843
    %v3972 = vadd.f32 %v3716, %v3844
    %v3973 = vadd.f32 %v3717, %v3845
    %v3974 = vadd.f32 %v3718, %v3846
    %v3975 = vadd.f32 %v3719, %v3847
    %v3976 = vadd.f32 %v3720, %v3848
    %v3977 = vadd.f32 %v3721, %v3849
    %v3978 = vadd.f32 %v3722, %v3850
    %v3979 = vadd.f32 %v3723, %v3851
    %v3980 = vadd.f32 %v3724, %v3852
    %v3981 = vadd.f32 %v3725, %v3853
    %3982 = vst [vmem:[#allocation2] sm:$0xff] %v3854
    %3983 = vst [vmem:[#allocation2 + $0x8] sm:$0xff] %v3855
    %3984 = vst [vmem:[#allocation2 + $0x10] sm:$0xff] %v3856
    %3985 = vst [vmem:[#allocation2 + $0x18] sm:$0xff] %v3857
    %3986 = vst [vmem:[#allocation2 + $0x20] sm:$0xff] %v3858
    %3987 = vst [vmem:[#allocation2 + $0x28] sm:$0xff] %v3859
    %3988 = vst [vmem:[#allocation2 + $0x30] sm:$0xff] %v3860
    %3989 = vst [vmem:[#allocation2 + $0x38] sm:$0xff] %v3861
    %3990 = vst [vmem:[#allocation2 + $0x40] sm:$0xff] %v3862
    %3991 = vst [vmem:[#allocation2 + $0x48] sm:$0xff] %v3863
    %3992 = vst [vmem:[#allocation2 + $0x50] sm:$0xff] %v3864
    %3993 = vst [vmem:[#allocation2 + $0x58] sm:$0xff] %v3865
    %3994 = vst [vmem:[#allocation2 + $0x60] sm:$0xff] %v3866
    %3995 = vst [vmem:[#allocation2 + $0x68] sm:$0xff] %v3867
    %3996 = vst [vmem:[#allocation2 + $0x70] sm:$0xff] %v3868
    %3997 = vst [vmem:[#allocation2 + $0x78] sm:$0xff] %v3869
    %3998 = vst [vmem:[#allocation2 + $0x80] sm:$0xff] %v3870
    %3999 = vst [vmem:[#allocation2 + $0x88] sm:$0xff] %v3871
    %4000 = vst [vmem:[#allocation2 + $0x90] sm:$0xff] %v3872
    %4001 = vst [vmem:[#allocation2 + $0x98] sm:$0xff] %v3873
    %4002 = vst [vmem:[#allocation2 + $0xa0] sm:$0xff] %v3874
    %4003 = vst [vmem:[#allocation2 + $0xa8] sm:$0xff] %v3875
    %4004 = vst [vmem:[#allocation2 + $0xb0] sm:$0xff] %v3876
    %4005 = vst [vmem:[#allocation2 + $0xb8] sm:$0xff] %v3877
    %4006 = vst [vmem:[#allocation2 + $0xc0] sm:$0xff] %v3878
    %4007 = vst [vmem:[#allocation2 + $0xc8] sm:$0xff] %v3879
    %4008 = vst [vmem:[#allocation2 + $0xd0] sm:$0xff] %v3880
    %4009 = vst [vmem:[#allocation2 + $0xd8] sm:$0xff] %v3881
    %4010 = vst [vmem:[#allocation2 + $0xe0] sm:$0xff] %v3882
    %4011 = vst [vmem:[#allocation2 + $0xe8] sm:$0xff] %v3883
    %4012 = vst [vmem:[#allocation2 + $0xf0] sm:$0xff] %v3884
    %4013 = vst [vmem:[#allocation2 + $0xf8] sm:$0xff] %v3885
    %4014 = vst [vmem:[#allocation2 + $0x100] sm:$0xff] %v3886
    %4015 = vst [vmem:[#allocation2 + $0x108] sm:$0xff] %v3887
    %4016 = vst [vmem:[#allocation2 + $0x110] sm:$0xff] %v3888
    %4017 = vst [vmem:[#allocation2 + $0x118] sm:$0xff] %v3889
    %4018 = vst [vmem:[#allocation2 + $0x120] sm:$0xff] %v3890
    %4019 = vst [vmem:[#allocation2 + $0x128] sm:$0xff] %v3891
    %4020 = vst [vmem:[#allocation2 + $0x130] sm:$0xff] %v3892
    %4021 = vst [vmem:[#allocation2 + $0x138] sm:$0xff] %v3893
    %4022 = vst [vmem:[#allocation2 + $0x140] sm:$0xff] %v3894
    %4023 = vst [vmem:[#allocation2 + $0x148] sm:$0xff] %v3895
    %4024 = vst [vmem:[#allocation2 + $0x150] sm:$0xff] %v3896
    %4025 = vst [vmem:[#allocation2 + $0x158] sm:$0xff] %v3897
    %4026 = vst [vmem:[#allocation2 + $0x160] sm:$0xff] %v3898
    %4027 = vst [vmem:[#allocation2 + $0x168] sm:$0xff] %v3899
    %4028 = vst [vmem:[#allocation2 + $0x170] sm:$0xff] %v3900
    %4029 = vst [vmem:[#allocation2 + $0x178] sm:$0xff] %v3901
    %4030 = vst [vmem:[#allocation2 + $0x180] sm:$0xff] %v3902
    %4031 = vst [vmem:[#allocation2 + $0x188] sm:$0xff] %v3903
    %4032 = vst [vmem:[#allocation2 + $0x190] sm:$0xff] %v3904
    %4033 = vst [vmem:[#allocation2 + $0x198] sm:$0xff] %v3905
    %4034 = vst [vmem:[#allocation2 + $0x1a0] sm:$0xff] %v3906
    %4035 = vst [vmem:[#allocation2 + $0x1a8] sm:$0xff] %v3907
    %4036 = vst [vmem:[#allocation2 + $0x1b0] sm:$0xff] %v3908
    %4037 = vst [vmem:[#allocation2 + $0x1b8] sm:$0xff] %v3909
    %4038 = vst [vmem:[#allocation2 + $0x1c0] sm:$0xff] %v3910
    %4039 = vst [vmem:[#allocation2 + $0x1c8] sm:$0xff] %v3911
    %4040 = vst [vmem:[#allocation2 + $0x1d0] sm:$0xff] %v3912
    %4041 = vst [vmem:[#allocation2 + $0x1d8] sm:$0xff] %v3913
    %4042 = vst [vmem:[#allocation2 + $0x1e0] sm:$0xff] %v3914
    %4043 = vst [vmem:[#allocation2 + $0x1e8] sm:$0xff] %v3915
    %4044 = vst [vmem:[#allocation2 + $0x1f0] sm:$0xff] %v3916
    %4045 = vst [vmem:[#allocation2 + $0x1f8] sm:$0xff] %v3917
    %4046 = vst [vmem:[#allocation2 + $0x200] sm:$0xff] %v3918
    %4047 = vst [vmem:[#allocation2 + $0x208] sm:$0xff] %v3919
    %4048 = vst [vmem:[#allocation2 + $0x210] sm:$0xff] %v3920
    %4049 = vst [vmem:[#allocation2 + $0x218] sm:$0xff] %v3921
    %4050 = vst [vmem:[#allocation2 + $0x220] sm:$0xff] %v3922
    %4051 = vst [vmem:[#allocation2 + $0x228] sm:$0xff] %v3923
    %4052 = vst [vmem:[#allocation2 + $0x230] sm:$0xff] %v3924
    %4053 = vst [vmem:[#allocation2 + $0x238] sm:$0xff] %v3925
    %4054 = vst [vmem:[#allocation2 + $0x240] sm:$0xff] %v3926
    %4055 = vst [vmem:[#allocation2 + $0x248] sm:$0xff] %v3927
    %4056 = vst [vmem:[#allocation2 + $0x250] sm:$0xff] %v3928
    %4057 = vst [vmem:[#allocation2 + $0x258] sm:$0xff] %v3929
    %4058 = vst [vmem:[#allocation2 + $0x260] sm:$0xff] %v3930
    %4059 = vst [vmem:[#allocation2 + $0x268] sm:$0xff] %v3931
    %4060 = vst [vmem:[#allocation2 + $0x270] sm:$0xff] %v3932
    %4061 = vst [vmem:[#allocation2 + $0x278] sm:$0xff] %v3933
    %4062 = vst [vmem:[#allocation2 + $0x280] sm:$0xff] %v3934
    %4063 = vst [vmem:[#allocation2 + $0x288] sm:$0xff] %v3935
    %4064 = vst [vmem:[#allocation2 + $0x290] sm:$0xff] %v3936
    %4065 = vst [vmem:[#allocation2 + $0x298] sm:$0xff] %v3937
    %4066 = vst [vmem:[#allocation2 + $0x2a0] sm:$0xff] %v3938
    %4067 = vst [vmem:[#allocation2 + $0x2a8] sm:$0xff] %v3939
    %4068 = vst [vmem:[#allocation2 + $0x2b0] sm:$0xff] %v3940
    %4069 = vst [vmem:[#allocation2 + $0x2b8] sm:$0xff] %v3941
    %4070 = vst [vmem:[#allocation2 + $0x2c0] sm:$0xff] %v3942
    %4071 = vst [vmem:[#allocation2 + $0x2c8] sm:$0xff] %v3943
    %4072 = vst [vmem:[#allocation2 + $0x2d0] sm:$0xff] %v3944
    %4073 = vst [vmem:[#allocation2 + $0x2d8] sm:$0xff] %v3945
    %4074 = vst [vmem:[#allocation2 + $0x2e0] sm:$0xff] %v3946
    %4075 = vst [vmem:[#allocation2 + $0x2e8] sm:$0xff] %v3947
    %4076 = vst [vmem:[#allocation2 + $0x2f0] sm:$0xff] %v3948
    %4077 = vst [vmem:[#allocation2 + $0x2f8] sm:$0xff] %v3949
    %4078 = vst [vmem:[#allocation2 + $0x300] sm:$0xff] %v3950
    %4079 = vst [vmem:[#allocation2 + $0x308] sm:$0xff] %v3951
    %4080 = vst [vmem:[#allocation2 + $0x310] sm:$0xff] %v3952
    %4081 = vst [vmem:[#allocation2 + $0x318] sm:$0xff] %v3953
    %4082 = vst [vmem:[#allocation2 + $0x320] sm:$0xff] %v3954
    %4083 = vst [vmem:[#allocation2 + $0x328] sm:$0xff] %v3955
    %4084 = vst [vmem:[#allocation2 + $0x330] sm:$0xff] %v3956
    %4085 = vst [vmem:[#allocation2 + $0x338] sm:$0xff] %v3957
    %4086 = vst [vmem:[#allocation2 + $0x340] sm:$0xff] %v3958
    %4087 = vst [vmem:[#allocation2 + $0x348] sm:$0xff] %v3959
    %4088 = vst [vmem:[#allocation2 + $0x350] sm:$0xff] %v3960
    %4089 = vst [vmem:[#allocation2 + $0x358] sm:$0xff] %v3961
    %4090 = vst [vmem:[#allocation2 + $0x360] sm:$0xff] %v3962
    %4091 = vst [vmem:[#allocation2 + $0x368] sm:$0xff] %v3963
    %4092 = vst [vmem:[#allocation2 + $0x370] sm:$0xff] %v3964
    %4093 = vst [vmem:[#allocation2 + $0x378] sm:$0xff] %v3965
    %4094 = vst [vmem:[#allocation2 + $0x380] sm:$0xff] %v3966
    %4095 = vst [vmem:[#allocation2 + $0x388] sm:$0xff] %v3967
    %4096 = vst [vmem:[#allocation2 + $0x390] sm:$0xff] %v3968
    %4097 = vst [vmem:[#allocation2 + $0x398] sm:$0xff] %v3969
    %4098 = vst [vmem:[#allocation2 + $0x3a0] sm:$0xff] %v3970
    %4099 = vst [vmem:[#allocation2 + $0x3a8] sm:$0xff] %v3971
    %4100 = vst [vmem:[#allocation2 + $0x3b0] sm:$0xff] %v3972
    %4101 = vst [vmem:[#allocation2 + $0x3b8] sm:$0xff] %v3973
    %4102 = vst [vmem:[#allocation2 + $0x3c0] sm:$0xff] %v3974
    %4103 = vst [vmem:[#allocation2 + $0x3c8] sm:$0xff] %v3975
    %4104 = vst [vmem:[#allocation2 + $0x3d0] sm:$0xff] %v3976
    %4105 = vst [vmem:[#allocation2 + $0x3d8] sm:$0xff] %v3977
    %4106 = vst [vmem:[#allocation2 + $0x3e0] sm:$0xff] %v3978
    %4107 = vst [vmem:[#allocation2 + $0x3e8] sm:$0xff] %v3979
    %4108 = vst [vmem:[#allocation2 + $0x3f0] sm:$0xff] %v3980
    %4109 = vst [vmem:[#allocation2 + $0x3f8] sm:$0xff] %v3981
    // Predicated region
    $region18: #{semantic_attention.1} parent=1 // pred_check
      _
    $region19: #{semantic_attention.1} parent=1 // pred_check_branch
      %4111 = sbr.rel (0) target = $region21
    $region20: #{semantic_attention.1} parent=1 // pred_region
      %4113 = vsyncadd [#allocation3], 0
      %s4114 = sshll.u32 [#allocation2], 4
      %s4115 = int_to_ptr.vmem [resolvable:$true] %s4114
      %s4116 = sshll.u32 %s4, 4
      %s4117 = int_to_ptr.hbm [resolvable:$true] %s4116
      %4122 = dma.vmem_to_hbm [thread:$0]  %s4115, 16384, %s4117, [#allocation3], 256, 256, 16
    $region21: #{semantic_attention.1} parent=1 // pred_fallthru
      _
    // Predicated region
    $region22: #{semantic_attention.1} parent=1 // pred_check
      _
    $region23: #{semantic_attention.1} parent=1 // pred_check_branch
      %4124 = sbr.rel (0) target = $region25
    $region24: #{semantic_attention.1} parent=1 // pred_region
      %4126 = dma.done [#allocation3], 16384
    $region25: #{semantic_attention.1} parent=1 // pred_fallthru
      _
    %4127 = vsyncpa [#allocation3], 1

</llo_original>
